<compile_context>
chip_gen: v7x
topology: tpu7x:2x2x1
jax: 0.10.0
libtpu: 0.0.40
codegen_flags: <defaults>
</compile_context>

<pallas_src>
import jax
import jax.numpy as jnp
from jax.experimental import pallas as pl
from jax.experimental.pallas import tpu as pltpu

N_NODES = 64
N_EDGES = 256
F_IN = 30          # GATConv(30, 128, heads=4, concat=False)
F_HID = 128
F_OUT = 1          # GATConv(128, 1, heads=4, concat=False)
HEADS = 4
LEAKY_SLOPE = 0.2  # PyG GATConv default negative_slope
NEG_BIAS = -1e9    # additive mask value for non-edges
# TODO(synk): the original module declares in_channels=128*4 for conv2/conv3,
# which is inconsistent with concat=False (conv1 emits 128 features); we keep
# the declared concat=False head-averaging semantics, so hidden width is 128.


def _masked_softmax(e, mask_bias):
    """LeakyReLU(0.2) + edge-masked row softmax (f32, approx reciprocal)."""
    e = jnp.where(e >= 0.0, e, LEAKY_SLOPE * e)          # LeakyReLU
    e = e + mask_bias                                    # NEG_BIAS off-graph
    e = e - jnp.max(e, axis=-1, keepdims=True)
    p = jnp.exp(e)
    return p * pl.reciprocal(jnp.sum(p, axis=-1, keepdims=True), approx=True)


def _gat_hidden_layer(x, mask_bias, w_ref, a_src_ref, a_dst_ref, b_ref,
                      alpha_buf, z_buf):
    """GATConv(F_in -> F_HID, heads=HEADS, concat=False)."""
    n = x.shape[0]
    # Fused per-head projection: single bf16 MXU pass, f32 accumulation.
    z_all = jnp.dot(x.astype(jnp.bfloat16), w_ref[...],
                    preferred_element_type=jnp.float32)              # [N, H*C]
    for h in range(HEADS):                                           # static unroll
        z_h = z_all[:, h * F_HID:(h + 1) * F_HID]                    # [N, C]
        # attention logits on VPU/XLU: e[i,j] = d_i + s_j (row=dst, col=src)
        d_col = jnp.sum(z_h * a_dst_ref[h:h + 1, :], axis=-1, keepdims=True)
        s_col = jnp.sum(z_h * a_src_ref[h:h + 1, :], axis=-1, keepdims=True)
        s_row = jnp.broadcast_to(s_col, (n, n)).T                    # s_row[i,j]=s_j
        alpha = _masked_softmax(d_col + s_row, mask_bias)            # [N, N] f32
        # stage per-head alpha / z so the head-mean needs only ONE matmul
        alpha_buf[:, h * n:(h + 1) * n] = alpha.astype(jnp.bfloat16)
        z_buf[h * n:(h + 1) * n, :] = z_h.astype(jnp.bfloat16)
    # mean_h(alpha_h @ z_h) == (1/H) * [a_0|..|a_3] @ [z_0;..;z_3]
    out = jnp.dot(alpha_buf[...], z_buf[...], preferred_element_type=jnp.float32)
    return out * (1.0 / HEADS) + b_ref[...]


def _gat_output_layer(x, mask_bias, w3_ref, a3_ref, b3_ref):
    """GATConv(F_HID -> 1, heads=HEADS, concat=False); width-1 head outputs are
    computed on the VPU/XLU (no narrow MXU matmuls)."""
    n = x.shape[0]
    acc = jnp.zeros((n, 1), jnp.float32)
    for h in range(HEADS):                                           # static unroll
        z_col = jnp.sum(x * w3_ref[h:h + 1, :], axis=-1, keepdims=True)  # [N,1]
        z_row = jnp.broadcast_to(z_col, (n, n)).T                    # z_row[i,j]=z_j
        e = a3_ref[1, h] * z_col + a3_ref[0, h] * z_row              # dst + src
        alpha = _masked_softmax(e, mask_bias)                        # [N, N]
        acc = acc + jnp.sum(alpha * z_row, axis=-1, keepdims=True)   # alpha_h @ z_h
    return acc * (1.0 / HEADS) + b3_ref[0, 0]


def _gat_kernel(mask_ref, x_ref,
                w1_ref, a1s_ref, a1d_ref, b1_ref,
                w2_ref, a2s_ref, a2d_ref, b2_ref,
                w3_ref, a3_ref, b3_ref,
                o_ref, alpha_buf, z_buf):
    mask_bias = mask_ref[...]

    # layer 1: GATConv(30 -> 128) + relu
    hid = _gat_hidden_layer(x_ref[...], mask_bias, w1_ref, a1s_ref, a1d_ref,
                            b1_ref, alpha_buf, z_buf)
    hid = jnp.maximum(hid, 0.0)
    # dropout(p=0.3) on features / attention coeffs is identity in eval mode.
    # TODO(synk): training-mode dropout would use pltpu.prng_random_bits.

    # layer 2: GATConv(128 -> 128) + relu
    hid = _gat_hidden_layer(hid, mask_bias, w2_ref, a2s_ref, a2d_ref,
                            b2_ref, alpha_buf, z_buf)
    hid = jnp.maximum(hid, 0.0)

    # layer 3: GATConv(128 -> 1)
    out = _gat_output_layer(hid, mask_bias, w3_ref, a3_ref, b3_ref)
    o_ref[...] = out.astype(o_ref.dtype)


def build_attention_mask(edge_index, num_nodes):
    """Dense additive attention mask: 0 where edge j->i (or self-loop) exists,
    NEG_BIAS elsewhere.  Built once per graph and reused across forward calls
    (hoisted out of the hot path).  Duplicate edges collapse (softmax over the
    unique neighbour set)."""
    src, dst = edge_index[0], edge_index[1]
    adj = jnp.zeros((num_nodes, num_nodes), jnp.float32).at[dst, src].add(1.0)
    adj = adj + jnp.eye(num_nodes, dtype=jnp.float32)  # add_self_loops=True
    return jnp.where(adj > 0.0, 0.0, NEG_BIAS).astype(jnp.float32)


def stock_gat(x, mask_bias, params):
    """Fused 3-layer GAT forward.  x: [N, F_IN] f32, mask_bias: [N, N] f32."""
    n = x.shape[0]
    vmem = pl.BlockSpec(memory_space=pltpu.MemorySpace.VMEM)
    smem = pl.BlockSpec(memory_space=pltpu.MemorySpace.SMEM)

    return pl.pallas_call(
        _gat_kernel,
        out_shape=jax.ShapeDtypeStruct((n, F_OUT), jnp.float32),
        in_specs=[vmem, vmem,                        # mask_bias, x
                  vmem, vmem, vmem, vmem,            # w1, a1_src, a1_dst, b1
                  vmem, vmem, vmem, vmem,            # w2, a2_src, a2_dst, b2
                  vmem, smem, smem],                 # w3, a3 (scalars), b3
        out_specs=vmem,
        scratch_shapes=[
            pltpu.VMEM((n, HEADS * n), jnp.bfloat16),      # staged per-head alpha
            pltpu.VMEM((HEADS * n, F_HID), jnp.bfloat16),  # staged per-head z
        ],
    )(mask_bias, x,
      params["w1"], params["a1_src"], params["a1_dst"], params["b1"],
      params["w2"], params["a2_src"], params["a2_dst"], params["b2"],
      params["w3"], params["a3"], params["b3"])


def init_params(key):
    ks = jax.random.split(key, 9)

    def glorot(k, shape):
        lim = jnp.sqrt(6.0 / (shape[0] + shape[-1]))
        return jax.random.uniform(k, shape, jnp.float32, -lim, lim)

    return {
        # layer 1: per-head weights stacked along output axis -> one MXU matmul
        "w1": glorot(ks[0], (F_IN, HEADS * F_HID)).astype(jnp.bfloat16),
        "a1_src": glorot(ks[1], (HEADS, F_HID)),
        "a1_dst": glorot(ks[2], (HEADS, F_HID)),
        "b1": jnp.zeros((1, F_HID), jnp.float32),
        # layer 2
        "w2": glorot(ks[3], (F_HID, HEADS * F_HID)).astype(jnp.bfloat16),
        "a2_src": glorot(ks[4], (HEADS, F_HID)),
        "a2_dst": glorot(ks[5], (HEADS, F_HID)),
        "b2": jnp.zeros((1, F_HID), jnp.float32),
        # layer 3: per-head [128 -> 1] projection rows (VPU path, kept f32)
        "w3": glorot(ks[6], (HEADS, F_HID)),
        # row 0 = att_src scalars, row 1 = att_dst scalars (live in SMEM)
        "a3": jnp.concatenate(
            [glorot(ks[7], (1, HEADS)), glorot(ks[8], (1, HEADS))], axis=0),
        "b3": jnp.zeros((1, 1), jnp.float32),
    }


if __name__ == "__main__":
    key = jax.random.PRNGKey(0)
    kx, ke, kp = jax.random.split(key, 3)

    x = jax.random.normal(kx, (N_NODES, F_IN), jnp.float32)
    edge_index = jax.random.randint(ke, (2, N_EDGES), 0, N_NODES, jnp.int32)
    params = init_params(kp)

    mask_bias = build_attention_mask(edge_index, N_NODES)  # static graph: build once
    out = stock_gat(x, mask_bias, params)
    jax.block_until_ready(out)
    assert out.shape == (N_NODES, F_OUT)
    print("KERNEL_OK")
</pallas_src>

<mosaic_0001>
module attributes {stable_mosaic.version = 11 : i64} {
  func.func @_gat_kernel(%arg0: memref<64x64xf32, #tpu.memory_space<vmem>>, %arg1: memref<64x30xf32, #tpu.memory_space<vmem>>, %arg2: memref<30x512xbf16, #tpu.memory_space<vmem>>, %arg3: memref<4x128xf32, #tpu.memory_space<vmem>>, %arg4: memref<4x128xf32, #tpu.memory_space<vmem>>, %arg5: memref<1x128xf32, #tpu.memory_space<vmem>>, %arg6: memref<128x512xbf16, #tpu.memory_space<vmem>>, %arg7: memref<4x128xf32, #tpu.memory_space<vmem>>, %arg8: memref<4x128xf32, #tpu.memory_space<vmem>>, %arg9: memref<1x128xf32, #tpu.memory_space<vmem>>, %arg10: memref<4x128xf32, #tpu.memory_space<vmem>>, %arg11: memref<2x4xf32, #tpu.memory_space<smem>>, %arg12: memref<1x1xf32, #tpu.memory_space<smem>>, %arg13: memref<64x1xf32, #tpu.memory_space<vmem>>, %arg14: memref<64x256xbf16, #tpu.memory_space<vmem>>, %arg15: memref<256x128xbf16, #tpu.memory_space<vmem>>) attributes {dimension_semantics = [], scalar_prefetch = 0 : i64, scratch_operands = 2 : i64, tpu.core_type = #tpu.core_type<tc>} {
    %c0 = arith.constant 0 : index
    %c0_0 = arith.constant 0 : index
    %0 = vector.load %arg0[%c0, %c0_0] : memref<64x64xf32, #tpu.memory_space<vmem>>, vector<64x64xf32>
    %c0_1 = arith.constant 0 : index
    %c0_2 = arith.constant 0 : index
    %1 = vector.load %arg1[%c0_1, %c0_2] : memref<64x30xf32, #tpu.memory_space<vmem>>, vector<64x30xf32>
    %2 = arith.truncf %1 : vector<64x30xf32> to vector<64x30xbf16>
    %c0_3 = arith.constant 0 : index
    %c0_4 = arith.constant 0 : index
    %3 = vector.load %arg2[%c0_3, %c0_4] : memref<30x512xbf16, #tpu.memory_space<vmem>>, vector<30x512xbf16>
    %cst = arith.constant dense<0.000000e+00> : vector<64x512xf32>
    %4 = tpu.matmul %2, %3, %cst {dimension_numbers = #tpu.dot_dimension_numbers<[1], [0], [0], [1], [0, 0, 1, 1], [], []>} : vector<64x30xbf16>, vector<30x512xbf16>, vector<64x512xf32> -> vector<64x512xf32>
    %5 = vector.extract_strided_slice %4 {offsets = [0, 0], sizes = [64, 128], strides = [1, 1]} : vector<64x512xf32> to vector<64x128xf32>
    %c0_5 = arith.constant 0 : index
    %c0_6 = arith.constant 0 : index
    %6 = vector.load %arg4[%c0_5, %c0_6] : memref<4x128xf32, #tpu.memory_space<vmem>>, vector<1x128xf32>
    %7 = vector.broadcast %6 : vector<1x128xf32> to vector<64x128xf32>
    %8 = arith.mulf %5, %7 : vector<64x128xf32>
    %cst_7 = arith.constant dense<0.000000e+00> : vector<64xf32>
    %9 = vector.multi_reduction <add>, %8, %cst_7 [1] : vector<64x128xf32> to vector<64xf32>
    %10 = vector.shape_cast %9 : vector<64xf32> to vector<64x1xf32>
    %c0_8 = arith.constant 0 : index
    %c0_9 = arith.constant 0 : index
    %11 = vector.load %arg3[%c0_8, %c0_9] : memref<4x128xf32, #tpu.memory_space<vmem>>, vector<1x128xf32>
    %12 = vector.broadcast %11 : vector<1x128xf32> to vector<64x128xf32>
    %13 = arith.mulf %5, %12 : vector<64x128xf32>
    %cst_10 = arith.constant dense<0.000000e+00> : vector<64xf32>
    %14 = vector.multi_reduction <add>, %13, %cst_10 [1] : vector<64x128xf32> to vector<64xf32>
    %15 = vector.shape_cast %14 : vector<64xf32> to vector<64x1xf32>
    %16 = vector.shape_cast %15 : vector<64x1xf32> to vector<64x1xf32>
    %17 = vector.broadcast %16 : vector<64x1xf32> to vector<64x64xf32>
    %18 = tpu.transpose %17, [1, 0] : vector<64x64xf32> -> vector<64x64xf32>
    %19 = vector.broadcast %10 : vector<64x1xf32> to vector<64x64xf32>
    %20 = arith.addf %19, %18 : vector<64x64xf32>
    %cst_11 = arith.constant 0.000000e+00 : f32
    %21 = vector.broadcast %cst_11 : f32 to vector<64x64xf32>
    %22 = arith.cmpf oge, %20, %21 : vector<64x64xf32>
    %cst_12 = arith.constant 2.000000e-01 : f32
    %23 = vector.broadcast %cst_12 : f32 to vector<64x64xf32>
    %24 = arith.mulf %23, %20 : vector<64x64xf32>
    %25 = arith.select %22, %20, %24 : vector<64x64xi1>, vector<64x64xf32>
    %26 = arith.addf %25, %0 : vector<64x64xf32>
    %cst_13 = arith.constant dense<0xFF800000> : vector<64xf32>
    %27 = vector.multi_reduction <maximumf>, %26, %cst_13 [1] : vector<64x64xf32> to vector<64xf32>
    %28 = vector.shape_cast %27 : vector<64xf32> to vector<64x1xf32>
    %29 = vector.broadcast %28 : vector<64x1xf32> to vector<64x64xf32>
    %30 = arith.subf %26, %29 : vector<64x64xf32>
    %31 = math.exp %30 : vector<64x64xf32>
    %cst_14 = arith.constant dense<0.000000e+00> : vector<64xf32>
    %32 = vector.multi_reduction <add>, %31, %cst_14 [1] : vector<64x64xf32> to vector<64xf32>
    %33 = vector.shape_cast %32 : vector<64xf32> to vector<64x1xf32>
    %34 = tpu.reciprocal %33 {approx = true} : vector<64x1xf32> -> vector<64x1xf32>
    %35 = vector.broadcast %34 : vector<64x1xf32> to vector<64x64xf32>
    %36 = arith.mulf %31, %35 : vector<64x64xf32>
    %37 = arith.truncf %36 : vector<64x64xf32> to vector<64x64xbf16>
    %c0_15 = arith.constant 0 : index
    %c0_16 = arith.constant 0 : index
    %38 = vector.load %arg14[%c0_15, %c0_16] : memref<64x256xbf16, #tpu.memory_space<vmem>>, vector<64x64xbf16>
    tpu.vector_store %arg14[%c0_15, %c0_16], %37 {strides = array<i32>} : memref<64x256xbf16, #tpu.memory_space<vmem>>, vector<64x64xbf16>,
    %39 = arith.truncf %5 : vector<64x128xf32> to vector<64x128xbf16>
    %c0_17 = arith.constant 0 : index
    %c0_18 = arith.constant 0 : index
    %40 = vector.load %arg15[%c0_17, %c0_18] : memref<256x128xbf16, #tpu.memory_space<vmem>>, vector<64x128xbf16>
    tpu.vector_store %arg15[%c0_17, %c0_18], %39 {strides = array<i32>} : memref<256x128xbf16, #tpu.memory_space<vmem>>, vector<64x128xbf16>,
    %41 = vector.extract_strided_slice %4 {offsets = [0, 128], sizes = [64, 128], strides = [1, 1]} : vector<64x512xf32> to vector<64x128xf32>
    %c1 = arith.constant 1 : index
    %c0_19 = arith.constant 0 : index
    %42 = vector.load %arg4[%c1, %c0_19] : memref<4x128xf32, #tpu.memory_space<vmem>>, vector<1x128xf32>
    %43 = vector.broadcast %42 : vector<1x128xf32> to vector<64x128xf32>
    %44 = arith.mulf %41, %43 : vector<64x128xf32>
    %cst_20 = arith.constant dense<0.000000e+00> : vector<64xf32>
    %45 = vector.multi_reduction <add>, %44, %cst_20 [1] : vector<64x128xf32> to vector<64xf32>
    %46 = vector.shape_cast %45 : vector<64xf32> to vector<64x1xf32>
    %c1_21 = arith.constant 1 : index
    %c0_22 = arith.constant 0 : index
    %47 = vector.load %arg3[%c1_21, %c0_22] : memref<4x128xf32, #tpu.memory_space<vmem>>, vector<1x128xf32>
    %48 = vector.broadcast %47 : vector<1x128xf32> to vector<64x128xf32>
    %49 = arith.mulf %41, %48 : vector<64x128xf32>
    %cst_23 = arith.constant dense<0.000000e+00> : vector<64xf32>
    %50 = vector.multi_reduction <add>, %49, %cst_23 [1] : vector<64x128xf32> to vector<64xf32>
    %51 = vector.shape_cast %50 : vector<64xf32> to vector<64x1xf32>
    %52 = vector.shape_cast %51 : vector<64x1xf32> to vector<64x1xf32>
    %53 = vector.broadcast %52 : vector<64x1xf32> to vector<64x64xf32>
    %54 = tpu.transpose %53, [1, 0] : vector<64x64xf32> -> vector<64x64xf32>
    %55 = vector.broadcast %46 : vector<64x1xf32> to vector<64x64xf32>
    %56 = arith.addf %55, %54 : vector<64x64xf32>
    %cst_24 = arith.constant 0.000000e+00 : f32
    %57 = vector.broadcast %cst_24 : f32 to vector<64x64xf32>
    %58 = arith.cmpf oge, %56, %57 : vector<64x64xf32>
    %cst_25 = arith.constant 2.000000e-01 : f32
    %59 = vector.broadcast %cst_25 : f32 to vector<64x64xf32>
    %60 = arith.mulf %59, %56 : vector<64x64xf32>
    %61 = arith.select %58, %56, %60 : vector<64x64xi1>, vector<64x64xf32>
    %62 = arith.addf %61, %0 : vector<64x64xf32>
    %cst_26 = arith.constant dense<0xFF800000> : vector<64xf32>
    %63 = vector.multi_reduction <maximumf>, %62, %cst_26 [1] : vector<64x64xf32> to vector<64xf32>
    %64 = vector.shape_cast %63 : vector<64xf32> to vector<64x1xf32>
    %65 = vector.broadcast %64 : vector<64x1xf32> to vector<64x64xf32>
    %66 = arith.subf %62, %65 : vector<64x64xf32>
    %67 = math.exp %66 : vector<64x64xf32>
    %cst_27 = arith.constant dense<0.000000e+00> : vector<64xf32>
    %68 = vector.multi_reduction <add>, %67, %cst_27 [1] : vector<64x64xf32> to vector<64xf32>
    %69 = vector.shape_cast %68 : vector<64xf32> to vector<64x1xf32>
    %70 = tpu.reciprocal %69 {approx = true} : vector<64x1xf32> -> vector<64x1xf32>
    %71 = vector.broadcast %70 : vector<64x1xf32> to vector<64x64xf32>
    %72 = arith.mulf %67, %71 : vector<64x64xf32>
    %73 = arith.truncf %72 : vector<64x64xf32> to vector<64x64xbf16>
    %c0_28 = arith.constant 0 : index
    %c64 = arith.constant 64 : index
    %74 = vector.load %arg14[%c0_28, %c64] : memref<64x256xbf16, #tpu.memory_space<vmem>>, vector<64x64xbf16>
    tpu.vector_store %arg14[%c0_28, %c64], %73 {strides = array<i32>} : memref<64x256xbf16, #tpu.memory_space<vmem>>, vector<64x64xbf16>,
    %75 = arith.truncf %41 : vector<64x128xf32> to vector<64x128xbf16>
    %c64_29 = arith.constant 64 : index
    %c0_30 = arith.constant 0 : index
    %76 = vector.load %arg15[%c64_29, %c0_30] : memref<256x128xbf16, #tpu.memory_space<vmem>>, vector<64x128xbf16>
    tpu.vector_store %arg15[%c64_29, %c0_30], %75 {strides = array<i32>} : memref<256x128xbf16, #tpu.memory_space<vmem>>, vector<64x128xbf16>,
    %77 = vector.extract_strided_slice %4 {offsets = [0, 256], sizes = [64, 128], strides = [1, 1]} : vector<64x512xf32> to vector<64x128xf32>
    %c2 = arith.constant 2 : index
    %c0_31 = arith.constant 0 : index
    %78 = vector.load %arg4[%c2, %c0_31] : memref<4x128xf32, #tpu.memory_space<vmem>>, vector<1x128xf32>
    %79 = vector.broadcast %78 : vector<1x128xf32> to vector<64x128xf32>
    %80 = arith.mulf %77, %79 : vector<64x128xf32>
    %cst_32 = arith.constant dense<0.000000e+00> : vector<64xf32>
    %81 = vector.multi_reduction <add>, %80, %cst_32 [1] : vector<64x128xf32> to vector<64xf32>
    %82 = vector.shape_cast %81 : vector<64xf32> to vector<64x1xf32>
    %c2_33 = arith.constant 2 : index
    %c0_34 = arith.constant 0 : index
    %83 = vector.load %arg3[%c2_33, %c0_34] : memref<4x128xf32, #tpu.memory_space<vmem>>, vector<1x128xf32>
    %84 = vector.broadcast %83 : vector<1x128xf32> to vector<64x128xf32>
    %85 = arith.mulf %77, %84 : vector<64x128xf32>
    %cst_35 = arith.constant dense<0.000000e+00> : vector<64xf32>
    %86 = vector.multi_reduction <add>, %85, %cst_35 [1] : vector<64x128xf32> to vector<64xf32>
    %87 = vector.shape_cast %86 : vector<64xf32> to vector<64x1xf32>
    %88 = vector.shape_cast %87 : vector<64x1xf32> to vector<64x1xf32>
    %89 = vector.broadcast %88 : vector<64x1xf32> to vector<64x64xf32>
    %90 = tpu.transpose %89, [1, 0] : vector<64x64xf32> -> vector<64x64xf32>
    %91 = vector.broadcast %82 : vector<64x1xf32> to vector<64x64xf32>
    %92 = arith.addf %91, %90 : vector<64x64xf32>
    %cst_36 = arith.constant 0.000000e+00 : f32
    %93 = vector.broadcast %cst_36 : f32 to vector<64x64xf32>
    %94 = arith.cmpf oge, %92, %93 : vector<64x64xf32>
    %cst_37 = arith.constant 2.000000e-01 : f32
    %95 = vector.broadcast %cst_37 : f32 to vector<64x64xf32>
    %96 = arith.mulf %95, %92 : vector<64x64xf32>
    %97 = arith.select %94, %92, %96 : vector<64x64xi1>, vector<64x64xf32>
    %98 = arith.addf %97, %0 : vector<64x64xf32>
    %cst_38 = arith.constant dense<0xFF800000> : vector<64xf32>
    %99 = vector.multi_reduction <maximumf>, %98, %cst_38 [1] : vector<64x64xf32> to vector<64xf32>
    %100 = vector.shape_cast %99 : vector<64xf32> to vector<64x1xf32>
    %101 = vector.broadcast %100 : vector<64x1xf32> to vector<64x64xf32>
    %102 = arith.subf %98, %101 : vector<64x64xf32>
    %103 = math.exp %102 : vector<64x64xf32>
    %cst_39 = arith.constant dense<0.000000e+00> : vector<64xf32>
    %104 = vector.multi_reduction <add>, %103, %cst_39 [1] : vector<64x64xf32> to vector<64xf32>
    %105 = vector.shape_cast %104 : vector<64xf32> to vector<64x1xf32>
    %106 = tpu.reciprocal %105 {approx = true} : vector<64x1xf32> -> vector<64x1xf32>
    %107 = vector.broadcast %106 : vector<64x1xf32> to vector<64x64xf32>
    %108 = arith.mulf %103, %107 : vector<64x64xf32>
    %109 = arith.truncf %108 : vector<64x64xf32> to vector<64x64xbf16>
    %c0_40 = arith.constant 0 : index
    %c128 = arith.constant 128 : index
    %110 = vector.load %arg14[%c0_40, %c128] : memref<64x256xbf16, #tpu.memory_space<vmem>>, vector<64x64xbf16>
    tpu.vector_store %arg14[%c0_40, %c128], %109 {strides = array<i32>} : memref<64x256xbf16, #tpu.memory_space<vmem>>, vector<64x64xbf16>,
    %111 = arith.truncf %77 : vector<64x128xf32> to vector<64x128xbf16>
    %c128_41 = arith.constant 128 : index
    %c0_42 = arith.constant 0 : index
    %112 = vector.load %arg15[%c128_41, %c0_42] : memref<256x128xbf16, #tpu.memory_space<vmem>>, vector<64x128xbf16>
    tpu.vector_store %arg15[%c128_41, %c0_42], %111 {strides = array<i32>} : memref<256x128xbf16, #tpu.memory_space<vmem>>, vector<64x128xbf16>,
    %113 = vector.extract_strided_slice %4 {offsets = [0, 384], sizes = [64, 128], strides = [1, 1]} : vector<64x512xf32> to vector<64x128xf32>
    %c3 = arith.constant 3 : index
    %c0_43 = arith.constant 0 : index
    %114 = vector.load %arg4[%c3, %c0_43] : memref<4x128xf32, #tpu.memory_space<vmem>>, vector<1x128xf32>
    %115 = vector.broadcast %114 : vector<1x128xf32> to vector<64x128xf32>
    %116 = arith.mulf %113, %115 : vector<64x128xf32>
    %cst_44 = arith.constant dense<0.000000e+00> : vector<64xf32>
    %117 = vector.multi_reduction <add>, %116, %cst_44 [1] : vector<64x128xf32> to vector<64xf32>
    %118 = vector.shape_cast %117 : vector<64xf32> to vector<64x1xf32>
    %c3_45 = arith.constant 3 : index
    %c0_46 = arith.constant 0 : index
    %119 = vector.load %arg3[%c3_45, %c0_46] : memref<4x128xf32, #tpu.memory_space<vmem>>, vector<1x128xf32>
    %120 = vector.broadcast %119 : vector<1x128xf32> to vector<64x128xf32>
    %121 = arith.mulf %113, %120 : vector<64x128xf32>
    %cst_47 = arith.constant dense<0.000000e+00> : vector<64xf32>
    %122 = vector.multi_reduction <add>, %121, %cst_47 [1] : vector<64x128xf32> to vector<64xf32>
    %123 = vector.shape_cast %122 : vector<64xf32> to vector<64x1xf32>
    %124 = vector.shape_cast %123 : vector<64x1xf32> to vector<64x1xf32>
    %125 = vector.broadcast %124 : vector<64x1xf32> to vector<64x64xf32>
    %126 = tpu.transpose %125, [1, 0] : vector<64x64xf32> -> vector<64x64xf32>
    %127 = vector.broadcast %118 : vector<64x1xf32> to vector<64x64xf32>
    %128 = arith.addf %127, %126 : vector<64x64xf32>
    %cst_48 = arith.constant 0.000000e+00 : f32
    %129 = vector.broadcast %cst_48 : f32 to vector<64x64xf32>
    %130 = arith.cmpf oge, %128, %129 : vector<64x64xf32>
    %cst_49 = arith.constant 2.000000e-01 : f32
    %131 = vector.broadcast %cst_49 : f32 to vector<64x64xf32>
    %132 = arith.mulf %131, %128 : vector<64x64xf32>
    %133 = arith.select %130, %128, %132 : vector<64x64xi1>, vector<64x64xf32>
    %134 = arith.addf %133, %0 : vector<64x64xf32>
    %cst_50 = arith.constant dense<0xFF800000> : vector<64xf32>
    %135 = vector.multi_reduction <maximumf>, %134, %cst_50 [1] : vector<64x64xf32> to vector<64xf32>
    %136 = vector.shape_cast %135 : vector<64xf32> to vector<64x1xf32>
    %137 = vector.broadcast %136 : vector<64x1xf32> to vector<64x64xf32>
    %138 = arith.subf %134, %137 : vector<64x64xf32>
    %139 = math.exp %138 : vector<64x64xf32>
    %cst_51 = arith.constant dense<0.000000e+00> : vector<64xf32>
    %140 = vector.multi_reduction <add>, %139, %cst_51 [1] : vector<64x64xf32> to vector<64xf32>
    %141 = vector.shape_cast %140 : vector<64xf32> to vector<64x1xf32>
    %142 = tpu.reciprocal %141 {approx = true} : vector<64x1xf32> -> vector<64x1xf32>
    %143 = vector.broadcast %142 : vector<64x1xf32> to vector<64x64xf32>
    %144 = arith.mulf %139, %143 : vector<64x64xf32>
    %145 = arith.truncf %144 : vector<64x64xf32> to vector<64x64xbf16>
    %c0_52 = arith.constant 0 : index
    %c192 = arith.constant 192 : index
    %146 = vector.load %arg14[%c0_52, %c192] : memref<64x256xbf16, #tpu.memory_space<vmem>>, vector<64x64xbf16>
    tpu.vector_store %arg14[%c0_52, %c192], %145 {strides = array<i32>} : memref<64x256xbf16, #tpu.memory_space<vmem>>, vector<64x64xbf16>,
    %147 = arith.truncf %113 : vector<64x128xf32> to vector<64x128xbf16>
    %c192_53 = arith.constant 192 : index
    %c0_54 = arith.constant 0 : index
    %148 = vector.load %arg15[%c192_53, %c0_54] : memref<256x128xbf16, #tpu.memory_space<vmem>>, vector<64x128xbf16>
    tpu.vector_store %arg15[%c192_53, %c0_54], %147 {strides = array<i32>} : memref<256x128xbf16, #tpu.memory_space<vmem>>, vector<64x128xbf16>,
    %c0_55 = arith.constant 0 : index
    %c0_56 = arith.constant 0 : index
    %149 = vector.load %arg14[%c0_55, %c0_56] : memref<64x256xbf16, #tpu.memory_space<vmem>>, vector<64x256xbf16>
    %c0_57 = arith.constant 0 : index
    %c0_58 = arith.constant 0 : index
    %150 = vector.load %arg15[%c0_57, %c0_58] : memref<256x128xbf16, #tpu.memory_space<vmem>>, vector<256x128xbf16>
    %cst_59 = arith.constant dense<0.000000e+00> : vector<64x128xf32>
    %151 = tpu.matmul %149, %150, %cst_59 {dimension_numbers = #tpu.dot_dimension_numbers<[1], [0], [0], [1], [0, 0, 1, 1], [], []>} : vector<64x256xbf16>, vector<256x128xbf16>, vector<64x128xf32> -> vector<64x128xf32>
    %cst_60 = arith.constant 2.500000e-01 : f32
    %152 = vector.broadcast %cst_60 : f32 to vector<64x128xf32>
    %153 = arith.mulf %151, %152 : vector<64x128xf32>
    %c0_61 = arith.constant 0 : index
    %c0_62 = arith.constant 0 : index
    %154 = vector.load %arg5[%c0_61, %c0_62] : memref<1x128xf32, #tpu.memory_space<vmem>>, vector<1x128xf32>
    %155 = vector.broadcast %154 : vector<1x128xf32> to vector<64x128xf32>
    %156 = arith.addf %153, %155 : vector<64x128xf32>
    %cst_63 = arith.constant 0.000000e+00 : f32
    %157 = vector.broadcast %cst_63 : f32 to vector<64x128xf32>
    %158 = arith.maximumf %156, %157 : vector<64x128xf32>
    %159 = arith.truncf %158 : vector<64x128xf32> to vector<64x128xbf16>
    %c0_64 = arith.constant 0 : index
    %c0_65 = arith.constant 0 : index
    %160 = vector.load %arg6[%c0_64, %c0_65] : memref<128x512xbf16, #tpu.memory_space<vmem>>, vector<128x512xbf16>
    %cst_66 = arith.constant dense<0.000000e+00> : vector<64x512xf32>
    %161 = tpu.matmul %159, %160, %cst_66 {dimension_numbers = #tpu.dot_dimension_numbers<[1], [0], [0], [1], [0, 0, 1, 1], [], []>} : vector<64x128xbf16>, vector<128x512xbf16>, vector<64x512xf32> -> vector<64x512xf32>
    %162 = vector.extract_strided_slice %161 {offsets = [0, 0], sizes = [64, 128], strides = [1, 1]} : vector<64x512xf32> to vector<64x128xf32>
    %c0_67 = arith.constant 0 : index
    %c0_68 = arith.constant 0 : index
    %163 = vector.load %arg8[%c0_67, %c0_68] : memref<4x128xf32, #tpu.memory_space<vmem>>, vector<1x128xf32>
    %164 = vector.broadcast %163 : vector<1x128xf32> to vector<64x128xf32>
    %165 = arith.mulf %162, %164 : vector<64x128xf32>
    %cst_69 = arith.constant dense<0.000000e+00> : vector<64xf32>
    %166 = vector.multi_reduction <add>, %165, %cst_69 [1] : vector<64x128xf32> to vector<64xf32>
    %167 = vector.shape_cast %166 : vector<64xf32> to vector<64x1xf32>
    %c0_70 = arith.constant 0 : index
    %c0_71 = arith.constant 0 : index
    %168 = vector.load %arg7[%c0_70, %c0_71] : memref<4x128xf32, #tpu.memory_space<vmem>>, vector<1x128xf32>
    %169 = vector.broadcast %168 : vector<1x128xf32> to vector<64x128xf32>
    %170 = arith.mulf %162, %169 : vector<64x128xf32>
    %cst_72 = arith.constant dense<0.000000e+00> : vector<64xf32>
    %171 = vector.multi_reduction <add>, %170, %cst_72 [1] : vector<64x128xf32> to vector<64xf32>
    %172 = vector.shape_cast %171 : vector<64xf32> to vector<64x1xf32>
    %173 = vector.shape_cast %172 : vector<64x1xf32> to vector<64x1xf32>
    %174 = vector.broadcast %173 : vector<64x1xf32> to vector<64x64xf32>
    %175 = tpu.transpose %174, [1, 0] : vector<64x64xf32> -> vector<64x64xf32>
    %176 = vector.broadcast %167 : vector<64x1xf32> to vector<64x64xf32>
    %177 = arith.addf %176, %175 : vector<64x64xf32>
    %cst_73 = arith.constant 0.000000e+00 : f32
    %178 = vector.broadcast %cst_73 : f32 to vector<64x64xf32>
    %179 = arith.cmpf oge, %177, %178 : vector<64x64xf32>
    %cst_74 = arith.constant 2.000000e-01 : f32
    %180 = vector.broadcast %cst_74 : f32 to vector<64x64xf32>
    %181 = arith.mulf %180, %177 : vector<64x64xf32>
    %182 = arith.select %179, %177, %181 : vector<64x64xi1>, vector<64x64xf32>
    %183 = arith.addf %182, %0 : vector<64x64xf32>
    %cst_75 = arith.constant dense<0xFF800000> : vector<64xf32>
    %184 = vector.multi_reduction <maximumf>, %183, %cst_75 [1] : vector<64x64xf32> to vector<64xf32>
    %185 = vector.shape_cast %184 : vector<64xf32> to vector<64x1xf32>
    %186 = vector.broadcast %185 : vector<64x1xf32> to vector<64x64xf32>
    %187 = arith.subf %183, %186 : vector<64x64xf32>
    %188 = math.exp %187 : vector<64x64xf32>
    %cst_76 = arith.constant dense<0.000000e+00> : vector<64xf32>
    %189 = vector.multi_reduction <add>, %188, %cst_76 [1] : vector<64x64xf32> to vector<64xf32>
    %190 = vector.shape_cast %189 : vector<64xf32> to vector<64x1xf32>
    %191 = tpu.reciprocal %190 {approx = true} : vector<64x1xf32> -> vector<64x1xf32>
    %192 = vector.broadcast %191 : vector<64x1xf32> to vector<64x64xf32>
    %193 = arith.mulf %188, %192 : vector<64x64xf32>
    %194 = arith.truncf %193 : vector<64x64xf32> to vector<64x64xbf16>
    %c0_77 = arith.constant 0 : index
    %c0_78 = arith.constant 0 : index
    %195 = vector.load %arg14[%c0_77, %c0_78] : memref<64x256xbf16, #tpu.memory_space<vmem>>, vector<64x64xbf16>
    tpu.vector_store %arg14[%c0_77, %c0_78], %194 {strides = array<i32>} : memref<64x256xbf16, #tpu.memory_space<vmem>>, vector<64x64xbf16>,
    %196 = arith.truncf %162 : vector<64x128xf32> to vector<64x128xbf16>
    %c0_79 = arith.constant 0 : index
    %c0_80 = arith.constant 0 : index
    %197 = vector.load %arg15[%c0_79, %c0_80] : memref<256x128xbf16, #tpu.memory_space<vmem>>, vector<64x128xbf16>
    tpu.vector_store %arg15[%c0_79, %c0_80], %196 {strides = array<i32>} : memref<256x128xbf16, #tpu.memory_space<vmem>>, vector<64x128xbf16>,
    %198 = vector.extract_strided_slice %161 {offsets = [0, 128], sizes = [64, 128], strides = [1, 1]} : vector<64x512xf32> to vector<64x128xf32>
    %c1_81 = arith.constant 1 : index
    %c0_82 = arith.constant 0 : index
    %199 = vector.load %arg8[%c1_81, %c0_82] : memref<4x128xf32, #tpu.memory_space<vmem>>, vector<1x128xf32>
    %200 = vector.broadcast %199 : vector<1x128xf32> to vector<64x128xf32>
    %201 = arith.mulf %198, %200 : vector<64x128xf32>
    %cst_83 = arith.constant dense<0.000000e+00> : vector<64xf32>
    %202 = vector.multi_reduction <add>, %201, %cst_83 [1] : vector<64x128xf32> to vector<64xf32>
    %203 = vector.shape_cast %202 : vector<64xf32> to vector<64x1xf32>
    %c1_84 = arith.constant 1 : index
    %c0_85 = arith.constant 0 : index
    %204 = vector.load %arg7[%c1_84, %c0_85] : memref<4x128xf32, #tpu.memory_space<vmem>>, vector<1x128xf32>
    %205 = vector.broadcast %204 : vector<1x128xf32> to vector<64x128xf32>
    %206 = arith.mulf %198, %205 : vector<64x128xf32>
    %cst_86 = arith.constant dense<0.000000e+00> : vector<64xf32>
    %207 = vector.multi_reduction <add>, %206, %cst_86 [1] : vector<64x128xf32> to vector<64xf32>
    %208 = vector.shape_cast %207 : vector<64xf32> to vector<64x1xf32>
    %209 = vector.shape_cast %208 : vector<64x1xf32> to vector<64x1xf32>
    %210 = vector.broadcast %209 : vector<64x1xf32> to vector<64x64xf32>
    %211 = tpu.transpose %210, [1, 0] : vector<64x64xf32> -> vector<64x64xf32>
    %212 = vector.broadcast %203 : vector<64x1xf32> to vector<64x64xf32>
    %213 = arith.addf %212, %211 : vector<64x64xf32>
    %cst_87 = arith.constant 0.000000e+00 : f32
    %214 = vector.broadcast %cst_87 : f32 to vector<64x64xf32>
    %215 = arith.cmpf oge, %213, %214 : vector<64x64xf32>
    %cst_88 = arith.constant 2.000000e-01 : f32
    %216 = vector.broadcast %cst_88 : f32 to vector<64x64xf32>
    %217 = arith.mulf %216, %213 : vector<64x64xf32>
    %218 = arith.select %215, %213, %217 : vector<64x64xi1>, vector<64x64xf32>
    %219 = arith.addf %218, %0 : vector<64x64xf32>
    %cst_89 = arith.constant dense<0xFF800000> : vector<64xf32>
    %220 = vector.multi_reduction <maximumf>, %219, %cst_89 [1] : vector<64x64xf32> to vector<64xf32>
    %221 = vector.shape_cast %220 : vector<64xf32> to vector<64x1xf32>
    %222 = vector.broadcast %221 : vector<64x1xf32> to vector<64x64xf32>
    %223 = arith.subf %219, %222 : vector<64x64xf32>
    %224 = math.exp %223 : vector<64x64xf32>
    %cst_90 = arith.constant dense<0.000000e+00> : vector<64xf32>
    %225 = vector.multi_reduction <add>, %224, %cst_90 [1] : vector<64x64xf32> to vector<64xf32>
    %226 = vector.shape_cast %225 : vector<64xf32> to vector<64x1xf32>
    %227 = tpu.reciprocal %226 {approx = true} : vector<64x1xf32> -> vector<64x1xf32>
    %228 = vector.broadcast %227 : vector<64x1xf32> to vector<64x64xf32>
    %229 = arith.mulf %224, %228 : vector<64x64xf32>
    %230 = arith.truncf %229 : vector<64x64xf32> to vector<64x64xbf16>
    %c0_91 = arith.constant 0 : index
    %c64_92 = arith.constant 64 : index
    %231 = vector.load %arg14[%c0_91, %c64_92] : memref<64x256xbf16, #tpu.memory_space<vmem>>, vector<64x64xbf16>
    tpu.vector_store %arg14[%c0_91, %c64_92], %230 {strides = array<i32>} : memref<64x256xbf16, #tpu.memory_space<vmem>>, vector<64x64xbf16>,
    %232 = arith.truncf %198 : vector<64x128xf32> to vector<64x128xbf16>
    %c64_93 = arith.constant 64 : index
    %c0_94 = arith.constant 0 : index
    %233 = vector.load %arg15[%c64_93, %c0_94] : memref<256x128xbf16, #tpu.memory_space<vmem>>, vector<64x128xbf16>
    tpu.vector_store %arg15[%c64_93, %c0_94], %232 {strides = array<i32>} : memref<256x128xbf16, #tpu.memory_space<vmem>>, vector<64x128xbf16>,
    %234 = vector.extract_strided_slice %161 {offsets = [0, 256], sizes = [64, 128], strides = [1, 1]} : vector<64x512xf32> to vector<64x128xf32>
    %c2_95 = arith.constant 2 : index
    %c0_96 = arith.constant 0 : index
    %235 = vector.load %arg8[%c2_95, %c0_96] : memref<4x128xf32, #tpu.memory_space<vmem>>, vector<1x128xf32>
    %236 = vector.broadcast %235 : vector<1x128xf32> to vector<64x128xf32>
    %237 = arith.mulf %234, %236 : vector<64x128xf32>
    %cst_97 = arith.constant dense<0.000000e+00> : vector<64xf32>
    %238 = vector.multi_reduction <add>, %237, %cst_97 [1] : vector<64x128xf32> to vector<64xf32>
    %239 = vector.shape_cast %238 : vector<64xf32> to vector<64x1xf32>
    %c2_98 = arith.constant 2 : index
    %c0_99 = arith.constant 0 : index
    %240 = vector.load %arg7[%c2_98, %c0_99] : memref<4x128xf32, #tpu.memory_space<vmem>>, vector<1x128xf32>
    %241 = vector.broadcast %240 : vector<1x128xf32> to vector<64x128xf32>
    %242 = arith.mulf %234, %241 : vector<64x128xf32>
    %cst_100 = arith.constant dense<0.000000e+00> : vector<64xf32>
    %243 = vector.multi_reduction <add>, %242, %cst_100 [1] : vector<64x128xf32> to vector<64xf32>
    %244 = vector.shape_cast %243 : vector<64xf32> to vector<64x1xf32>
    %245 = vector.shape_cast %244 : vector<64x1xf32> to vector<64x1xf32>
    %246 = vector.broadcast %245 : vector<64x1xf32> to vector<64x64xf32>
    %247 = tpu.transpose %246, [1, 0] : vector<64x64xf32> -> vector<64x64xf32>
    %248 = vector.broadcast %239 : vector<64x1xf32> to vector<64x64xf32>
    %249 = arith.addf %248, %247 : vector<64x64xf32>
    %cst_101 = arith.constant 0.000000e+00 : f32
    %250 = vector.broadcast %cst_101 : f32 to vector<64x64xf32>
    %251 = arith.cmpf oge, %249, %250 : vector<64x64xf32>
    %cst_102 = arith.constant 2.000000e-01 : f32
    %252 = vector.broadcast %cst_102 : f32 to vector<64x64xf32>
    %253 = arith.mulf %252, %249 : vector<64x64xf32>
    %254 = arith.select %251, %249, %253 : vector<64x64xi1>, vector<64x64xf32>
    %255 = arith.addf %254, %0 : vector<64x64xf32>
    %cst_103 = arith.constant dense<0xFF800000> : vector<64xf32>
    %256 = vector.multi_reduction <maximumf>, %255, %cst_103 [1] : vector<64x64xf32> to vector<64xf32>
    %257 = vector.shape_cast %256 : vector<64xf32> to vector<64x1xf32>
    %258 = vector.broadcast %257 : vector<64x1xf32> to vector<64x64xf32>
    %259 = arith.subf %255, %258 : vector<64x64xf32>
    %260 = math.exp %259 : vector<64x64xf32>
    %cst_104 = arith.constant dense<0.000000e+00> : vector<64xf32>
    %261 = vector.multi_reduction <add>, %260, %cst_104 [1] : vector<64x64xf32> to vector<64xf32>
    %262 = vector.shape_cast %261 : vector<64xf32> to vector<64x1xf32>
    %263 = tpu.reciprocal %262 {approx = true} : vector<64x1xf32> -> vector<64x1xf32>
    %264 = vector.broadcast %263 : vector<64x1xf32> to vector<64x64xf32>
    %265 = arith.mulf %260, %264 : vector<64x64xf32>
    %266 = arith.truncf %265 : vector<64x64xf32> to vector<64x64xbf16>
    %c0_105 = arith.constant 0 : index
    %c128_106 = arith.constant 128 : index
    %267 = vector.load %arg14[%c0_105, %c128_106] : memref<64x256xbf16, #tpu.memory_space<vmem>>, vector<64x64xbf16>
    tpu.vector_store %arg14[%c0_105, %c128_106], %266 {strides = array<i32>} : memref<64x256xbf16, #tpu.memory_space<vmem>>, vector<64x64xbf16>,
    %268 = arith.truncf %234 : vector<64x128xf32> to vector<64x128xbf16>
    %c128_107 = arith.constant 128 : index
    %c0_108 = arith.constant 0 : index
    %269 = vector.load %arg15[%c128_107, %c0_108] : memref<256x128xbf16, #tpu.memory_space<vmem>>, vector<64x128xbf16>
    tpu.vector_store %arg15[%c128_107, %c0_108], %268 {strides = array<i32>} : memref<256x128xbf16, #tpu.memory_space<vmem>>, vector<64x128xbf16>,
    %270 = vector.extract_strided_slice %161 {offsets = [0, 384], sizes = [64, 128], strides = [1, 1]} : vector<64x512xf32> to vector<64x128xf32>
    %c3_109 = arith.constant 3 : index
    %c0_110 = arith.constant 0 : index
    %271 = vector.load %arg8[%c3_109, %c0_110] : memref<4x128xf32, #tpu.memory_space<vmem>>, vector<1x128xf32>
    %272 = vector.broadcast %271 : vector<1x128xf32> to vector<64x128xf32>
    %273 = arith.mulf %270, %272 : vector<64x128xf32>
    %cst_111 = arith.constant dense<0.000000e+00> : vector<64xf32>
    %274 = vector.multi_reduction <add>, %273, %cst_111 [1] : vector<64x128xf32> to vector<64xf32>
    %275 = vector.shape_cast %274 : vector<64xf32> to vector<64x1xf32>
    %c3_112 = arith.constant 3 : index
    %c0_113 = arith.constant 0 : index
    %276 = vector.load %arg7[%c3_112, %c0_113] : memref<4x128xf32, #tpu.memory_space<vmem>>, vector<1x128xf32>
    %277 = vector.broadcast %276 : vector<1x128xf32> to vector<64x128xf32>
    %278 = arith.mulf %270, %277 : vector<64x128xf32>
    %cst_114 = arith.constant dense<0.000000e+00> : vector<64xf32>
    %279 = vector.multi_reduction <add>, %278, %cst_114 [1] : vector<64x128xf32> to vector<64xf32>
    %280 = vector.shape_cast %279 : vector<64xf32> to vector<64x1xf32>
    %281 = vector.shape_cast %280 : vector<64x1xf32> to vector<64x1xf32>
    %282 = vector.broadcast %281 : vector<64x1xf32> to vector<64x64xf32>
    %283 = tpu.transpose %282, [1, 0] : vector<64x64xf32> -> vector<64x64xf32>
    %284 = vector.broadcast %275 : vector<64x1xf32> to vector<64x64xf32>
    %285 = arith.addf %284, %283 : vector<64x64xf32>
    %cst_115 = arith.constant 0.000000e+00 : f32
    %286 = vector.broadcast %cst_115 : f32 to vector<64x64xf32>
    %287 = arith.cmpf oge, %285, %286 : vector<64x64xf32>
    %cst_116 = arith.constant 2.000000e-01 : f32
    %288 = vector.broadcast %cst_116 : f32 to vector<64x64xf32>
    %289 = arith.mulf %288, %285 : vector<64x64xf32>
    %290 = arith.select %287, %285, %289 : vector<64x64xi1>, vector<64x64xf32>
    %291 = arith.addf %290, %0 : vector<64x64xf32>
    %cst_117 = arith.constant dense<0xFF800000> : vector<64xf32>
    %292 = vector.multi_reduction <maximumf>, %291, %cst_117 [1] : vector<64x64xf32> to vector<64xf32>
    %293 = vector.shape_cast %292 : vector<64xf32> to vector<64x1xf32>
    %294 = vector.broadcast %293 : vector<64x1xf32> to vector<64x64xf32>
    %295 = arith.subf %291, %294 : vector<64x64xf32>
    %296 = math.exp %295 : vector<64x64xf32>
    %cst_118 = arith.constant dense<0.000000e+00> : vector<64xf32>
    %297 = vector.multi_reduction <add>, %296, %cst_118 [1] : vector<64x64xf32> to vector<64xf32>
    %298 = vector.shape_cast %297 : vector<64xf32> to vector<64x1xf32>
    %299 = tpu.reciprocal %298 {approx = true} : vector<64x1xf32> -> vector<64x1xf32>
    %300 = vector.broadcast %299 : vector<64x1xf32> to vector<64x64xf32>
    %301 = arith.mulf %296, %300 : vector<64x64xf32>
    %302 = arith.truncf %301 : vector<64x64xf32> to vector<64x64xbf16>
    %c0_119 = arith.constant 0 : index
    %c192_120 = arith.constant 192 : index
    %303 = vector.load %arg14[%c0_119, %c192_120] : memref<64x256xbf16, #tpu.memory_space<vmem>>, vector<64x64xbf16>
    tpu.vector_store %arg14[%c0_119, %c192_120], %302 {strides = array<i32>} : memref<64x256xbf16, #tpu.memory_space<vmem>>, vector<64x64xbf16>,
    %304 = arith.truncf %270 : vector<64x128xf32> to vector<64x128xbf16>
    %c192_121 = arith.constant 192 : index
    %c0_122 = arith.constant 0 : index
    %305 = vector.load %arg15[%c192_121, %c0_122] : memref<256x128xbf16, #tpu.memory_space<vmem>>, vector<64x128xbf16>
    tpu.vector_store %arg15[%c192_121, %c0_122], %304 {strides = array<i32>} : memref<256x128xbf16, #tpu.memory_space<vmem>>, vector<64x128xbf16>,
    %c0_123 = arith.constant 0 : index
    %c0_124 = arith.constant 0 : index
    %306 = vector.load %arg14[%c0_123, %c0_124] : memref<64x256xbf16, #tpu.memory_space<vmem>>, vector<64x256xbf16>
    %c0_125 = arith.constant 0 : index
    %c0_126 = arith.constant 0 : index
    %307 = vector.load %arg15[%c0_125, %c0_126] : memref<256x128xbf16, #tpu.memory_space<vmem>>, vector<256x128xbf16>
    %cst_127 = arith.constant dense<0.000000e+00> : vector<64x128xf32>
    %308 = tpu.matmul %306, %307, %cst_127 {dimension_numbers = #tpu.dot_dimension_numbers<[1], [0], [0], [1], [0, 0, 1, 1], [], []>} : vector<64x256xbf16>, vector<256x128xbf16>, vector<64x128xf32> -> vector<64x128xf32>
    %cst_128 = arith.constant 2.500000e-01 : f32
    %309 = vector.broadcast %cst_128 : f32 to vector<64x128xf32>
    %310 = arith.mulf %308, %309 : vector<64x128xf32>
    %c0_129 = arith.constant 0 : index
    %c0_130 = arith.constant 0 : index
    %311 = vector.load %arg9[%c0_129, %c0_130] : memref<1x128xf32, #tpu.memory_space<vmem>>, vector<1x128xf32>
    %312 = vector.broadcast %311 : vector<1x128xf32> to vector<64x128xf32>
    %313 = arith.addf %310, %312 : vector<64x128xf32>
    %cst_131 = arith.constant 0.000000e+00 : f32
    %314 = vector.broadcast %cst_131 : f32 to vector<64x128xf32>
    %315 = arith.maximumf %313, %314 : vector<64x128xf32>
    %cst_132 = arith.constant 0.000000e+00 : f32
    %316 = vector.broadcast %cst_132 : f32 to vector<64x1xf32>
    %c0_133 = arith.constant 0 : index
    %c0_134 = arith.constant 0 : index
    %317 = vector.load %arg10[%c0_133, %c0_134] : memref<4x128xf32, #tpu.memory_space<vmem>>, vector<1x128xf32>
    %318 = vector.broadcast %317 : vector<1x128xf32> to vector<64x128xf32>
    %319 = arith.mulf %315, %318 : vector<64x128xf32>
    %cst_135 = arith.constant dense<0.000000e+00> : vector<64xf32>
    %320 = vector.multi_reduction <add>, %319, %cst_135 [1] : vector<64x128xf32> to vector<64xf32>
    %321 = vector.shape_cast %320 : vector<64xf32> to vector<64x1xf32>
    %322 = vector.shape_cast %321 : vector<64x1xf32> to vector<64x1xf32>
    %323 = vector.broadcast %322 : vector<64x1xf32> to vector<64x64xf32>
    %324 = tpu.transpose %323, [1, 0] : vector<64x64xf32> -> vector<64x64xf32>
    %c1_136 = arith.constant 1 : index
    %c0_137 = arith.constant 0 : index
    %325 = memref.load %arg11[%c1_136, %c0_137] : memref<2x4xf32, #tpu.memory_space<smem>>
    %326 = vector.broadcast %325 : f32 to vector<64x1xf32>
    %327 = arith.mulf %326, %321 : vector<64x1xf32>
    %c0_138 = arith.constant 0 : index
    %c0_139 = arith.constant 0 : index
    %328 = memref.load %arg11[%c0_138, %c0_139] : memref<2x4xf32, #tpu.memory_space<smem>>
    %329 = vector.broadcast %328 : f32 to vector<64x64xf32>
    %330 = arith.mulf %329, %324 : vector<64x64xf32>
    %331 = vector.broadcast %327 : vector<64x1xf32> to vector<64x64xf32>
    %332 = arith.addf %331, %330 : vector<64x64xf32>
    %cst_140 = arith.constant 0.000000e+00 : f32
    %333 = vector.broadcast %cst_140 : f32 to vector<64x64xf32>
    %334 = arith.cmpf oge, %332, %333 : vector<64x64xf32>
    %cst_141 = arith.constant 2.000000e-01 : f32
    %335 = vector.broadcast %cst_141 : f32 to vector<64x64xf32>
    %336 = arith.mulf %335, %332 : vector<64x64xf32>
    %337 = arith.select %334, %332, %336 : vector<64x64xi1>, vector<64x64xf32>
    %338 = arith.addf %337, %0 : vector<64x64xf32>
    %cst_142 = arith.constant dense<0xFF800000> : vector<64xf32>
    %339 = vector.multi_reduction <maximumf>, %338, %cst_142 [1] : vector<64x64xf32> to vector<64xf32>
    %340 = vector.shape_cast %339 : vector<64xf32> to vector<64x1xf32>
    %341 = vector.broadcast %340 : vector<64x1xf32> to vector<64x64xf32>
    %342 = arith.subf %338, %341 : vector<64x64xf32>
    %343 = math.exp %342 : vector<64x64xf32>
    %cst_143 = arith.constant dense<0.000000e+00> : vector<64xf32>
    %344 = vector.multi_reduction <add>, %343, %cst_143 [1] : vector<64x64xf32> to vector<64xf32>
    %345 = vector.shape_cast %344 : vector<64xf32> to vector<64x1xf32>
    %346 = tpu.reciprocal %345 {approx = true} : vector<64x1xf32> -> vector<64x1xf32>
    %347 = vector.broadcast %346 : vector<64x1xf32> to vector<64x64xf32>
    %348 = arith.mulf %343, %347 : vector<64x64xf32>
    %349 = arith.mulf %348, %324 : vector<64x64xf32>
    %cst_144 = arith.constant dense<0.000000e+00> : vector<64xf32>
    %350 = vector.multi_reduction <add>, %349, %cst_144 [1] : vector<64x64xf32> to vector<64xf32>
    %351 = vector.shape_cast %350 : vector<64xf32> to vector<64x1xf32>
    %352 = arith.addf %316, %351 : vector<64x1xf32>
    %c1_145 = arith.constant 1 : index
    %c0_146 = arith.constant 0 : index
    %353 = vector.load %arg10[%c1_145, %c0_146] : memref<4x128xf32, #tpu.memory_space<vmem>>, vector<1x128xf32>
    %354 = vector.broadcast %353 : vector<1x128xf32> to vector<64x128xf32>
    %355 = arith.mulf %315, %354 : vector<64x128xf32>
    %cst_147 = arith.constant dense<0.000000e+00> : vector<64xf32>
    %356 = vector.multi_reduction <add>, %355, %cst_147 [1] : vector<64x128xf32> to vector<64xf32>
    %357 = vector.shape_cast %356 : vector<64xf32> to vector<64x1xf32>
    %358 = vector.shape_cast %357 : vector<64x1xf32> to vector<64x1xf32>
    %359 = vector.broadcast %358 : vector<64x1xf32> to vector<64x64xf32>
    %360 = tpu.transpose %359, [1, 0] : vector<64x64xf32> -> vector<64x64xf32>
    %c1_148 = arith.constant 1 : index
    %c1_149 = arith.constant 1 : index
    %361 = memref.load %arg11[%c1_148, %c1_149] : memref<2x4xf32, #tpu.memory_space<smem>>
    %362 = vector.broadcast %361 : f32 to vector<64x1xf32>
    %363 = arith.mulf %362, %357 : vector<64x1xf32>
    %c0_150 = arith.constant 0 : index
    %c1_151 = arith.constant 1 : index
    %364 = memref.load %arg11[%c0_150, %c1_151] : memref<2x4xf32, #tpu.memory_space<smem>>
    %365 = vector.broadcast %364 : f32 to vector<64x64xf32>
    %366 = arith.mulf %365, %360 : vector<64x64xf32>
    %367 = vector.broadcast %363 : vector<64x1xf32> to vector<64x64xf32>
    %368 = arith.addf %367, %366 : vector<64x64xf32>
    %cst_152 = arith.constant 0.000000e+00 : f32
    %369 = vector.broadcast %cst_152 : f32 to vector<64x64xf32>
    %370 = arith.cmpf oge, %368, %369 : vector<64x64xf32>
    %cst_153 = arith.constant 2.000000e-01 : f32
    %371 = vector.broadcast %cst_153 : f32 to vector<64x64xf32>
    %372 = arith.mulf %371, %368 : vector<64x64xf32>
    %373 = arith.select %370, %368, %372 : vector<64x64xi1>, vector<64x64xf32>
    %374 = arith.addf %373, %0 : vector<64x64xf32>
    %cst_154 = arith.constant dense<0xFF800000> : vector<64xf32>
    %375 = vector.multi_reduction <maximumf>, %374, %cst_154 [1] : vector<64x64xf32> to vector<64xf32>
    %376 = vector.shape_cast %375 : vector<64xf32> to vector<64x1xf32>
    %377 = vector.broadcast %376 : vector<64x1xf32> to vector<64x64xf32>
    %378 = arith.subf %374, %377 : vector<64x64xf32>
    %379 = math.exp %378 : vector<64x64xf32>
    %cst_155 = arith.constant dense<0.000000e+00> : vector<64xf32>
    %380 = vector.multi_reduction <add>, %379, %cst_155 [1] : vector<64x64xf32> to vector<64xf32>
    %381 = vector.shape_cast %380 : vector<64xf32> to vector<64x1xf32>
    %382 = tpu.reciprocal %381 {approx = true} : vector<64x1xf32> -> vector<64x1xf32>
    %383 = vector.broadcast %382 : vector<64x1xf32> to vector<64x64xf32>
    %384 = arith.mulf %379, %383 : vector<64x64xf32>
    %385 = arith.mulf %384, %360 : vector<64x64xf32>
    %cst_156 = arith.constant dense<0.000000e+00> : vector<64xf32>
    %386 = vector.multi_reduction <add>, %385, %cst_156 [1] : vector<64x64xf32> to vector<64xf32>
    %387 = vector.shape_cast %386 : vector<64xf32> to vector<64x1xf32>
    %388 = arith.addf %352, %387 : vector<64x1xf32>
    %c2_157 = arith.constant 2 : index
    %c0_158 = arith.constant 0 : index
    %389 = vector.load %arg10[%c2_157, %c0_158] : memref<4x128xf32, #tpu.memory_space<vmem>>, vector<1x128xf32>
    %390 = vector.broadcast %389 : vector<1x128xf32> to vector<64x128xf32>
    %391 = arith.mulf %315, %390 : vector<64x128xf32>
    %cst_159 = arith.constant dense<0.000000e+00> : vector<64xf32>
    %392 = vector.multi_reduction <add>, %391, %cst_159 [1] : vector<64x128xf32> to vector<64xf32>
    %393 = vector.shape_cast %392 : vector<64xf32> to vector<64x1xf32>
    %394 = vector.shape_cast %393 : vector<64x1xf32> to vector<64x1xf32>
    %395 = vector.broadcast %394 : vector<64x1xf32> to vector<64x64xf32>
    %396 = tpu.transpose %395, [1, 0] : vector<64x64xf32> -> vector<64x64xf32>
    %c1_160 = arith.constant 1 : index
    %c2_161 = arith.constant 2 : index
    %397 = memref.load %arg11[%c1_160, %c2_161] : memref<2x4xf32, #tpu.memory_space<smem>>
    %398 = vector.broadcast %397 : f32 to vector<64x1xf32>
    %399 = arith.mulf %398, %393 : vector<64x1xf32>
    %c0_162 = arith.constant 0 : index
    %c2_163 = arith.constant 2 : index
    %400 = memref.load %arg11[%c0_162, %c2_163] : memref<2x4xf32, #tpu.memory_space<smem>>
    %401 = vector.broadcast %400 : f32 to vector<64x64xf32>
    %402 = arith.mulf %401, %396 : vector<64x64xf32>
    %403 = vector.broadcast %399 : vector<64x1xf32> to vector<64x64xf32>
    %404 = arith.addf %403, %402 : vector<64x64xf32>
    %cst_164 = arith.constant 0.000000e+00 : f32
    %405 = vector.broadcast %cst_164 : f32 to vector<64x64xf32>
    %406 = arith.cmpf oge, %404, %405 : vector<64x64xf32>
    %cst_165 = arith.constant 2.000000e-01 : f32
    %407 = vector.broadcast %cst_165 : f32 to vector<64x64xf32>
    %408 = arith.mulf %407, %404 : vector<64x64xf32>
    %409 = arith.select %406, %404, %408 : vector<64x64xi1>, vector<64x64xf32>
    %410 = arith.addf %409, %0 : vector<64x64xf32>
    %cst_166 = arith.constant dense<0xFF800000> : vector<64xf32>
    %411 = vector.multi_reduction <maximumf>, %410, %cst_166 [1] : vector<64x64xf32> to vector<64xf32>
    %412 = vector.shape_cast %411 : vector<64xf32> to vector<64x1xf32>
    %413 = vector.broadcast %412 : vector<64x1xf32> to vector<64x64xf32>
    %414 = arith.subf %410, %413 : vector<64x64xf32>
    %415 = math.exp %414 : vector<64x64xf32>
    %cst_167 = arith.constant dense<0.000000e+00> : vector<64xf32>
    %416 = vector.multi_reduction <add>, %415, %cst_167 [1] : vector<64x64xf32> to vector<64xf32>
    %417 = vector.shape_cast %416 : vector<64xf32> to vector<64x1xf32>
    %418 = tpu.reciprocal %417 {approx = true} : vector<64x1xf32> -> vector<64x1xf32>
    %419 = vector.broadcast %418 : vector<64x1xf32> to vector<64x64xf32>
    %420 = arith.mulf %415, %419 : vector<64x64xf32>
    %421 = arith.mulf %420, %396 : vector<64x64xf32>
    %cst_168 = arith.constant dense<0.000000e+00> : vector<64xf32>
    %422 = vector.multi_reduction <add>, %421, %cst_168 [1] : vector<64x64xf32> to vector<64xf32>
    %423 = vector.shape_cast %422 : vector<64xf32> to vector<64x1xf32>
    %424 = arith.addf %388, %423 : vector<64x1xf32>
    %c3_169 = arith.constant 3 : index
    %c0_170 = arith.constant 0 : index
    %425 = vector.load %arg10[%c3_169, %c0_170] : memref<4x128xf32, #tpu.memory_space<vmem>>, vector<1x128xf32>
    %426 = vector.broadcast %425 : vector<1x128xf32> to vector<64x128xf32>
    %427 = arith.mulf %315, %426 : vector<64x128xf32>
    %cst_171 = arith.constant dense<0.000000e+00> : vector<64xf32>
    %428 = vector.multi_reduction <add>, %427, %cst_171 [1] : vector<64x128xf32> to vector<64xf32>
    %429 = vector.shape_cast %428 : vector<64xf32> to vector<64x1xf32>
    %430 = vector.shape_cast %429 : vector<64x1xf32> to vector<64x1xf32>
    %431 = vector.broadcast %430 : vector<64x1xf32> to vector<64x64xf32>
    %432 = tpu.transpose %431, [1, 0] : vector<64x64xf32> -> vector<64x64xf32>
    %c1_172 = arith.constant 1 : index
    %c3_173 = arith.constant 3 : index
    %433 = memref.load %arg11[%c1_172, %c3_173] : memref<2x4xf32, #tpu.memory_space<smem>>
    %434 = vector.broadcast %433 : f32 to vector<64x1xf32>
    %435 = arith.mulf %434, %429 : vector<64x1xf32>
    %c0_174 = arith.constant 0 : index
    %c3_175 = arith.constant 3 : index
    %436 = memref.load %arg11[%c0_174, %c3_175] : memref<2x4xf32, #tpu.memory_space<smem>>
    %437 = vector.broadcast %436 : f32 to vector<64x64xf32>
    %438 = arith.mulf %437, %432 : vector<64x64xf32>
    %439 = vector.broadcast %435 : vector<64x1xf32> to vector<64x64xf32>
    %440 = arith.addf %439, %438 : vector<64x64xf32>
    %cst_176 = arith.constant 0.000000e+00 : f32
    %441 = vector.broadcast %cst_176 : f32 to vector<64x64xf32>
    %442 = arith.cmpf oge, %440, %441 : vector<64x64xf32>
    %cst_177 = arith.constant 2.000000e-01 : f32
    %443 = vector.broadcast %cst_177 : f32 to vector<64x64xf32>
    %444 = arith.mulf %443, %440 : vector<64x64xf32>
    %445 = arith.select %442, %440, %444 : vector<64x64xi1>, vector<64x64xf32>
    %446 = arith.addf %445, %0 : vector<64x64xf32>
    %cst_178 = arith.constant dense<0xFF800000> : vector<64xf32>
    %447 = vector.multi_reduction <maximumf>, %446, %cst_178 [1] : vector<64x64xf32> to vector<64xf32>
    %448 = vector.shape_cast %447 : vector<64xf32> to vector<64x1xf32>
    %449 = vector.broadcast %448 : vector<64x1xf32> to vector<64x64xf32>
    %450 = arith.subf %446, %449 : vector<64x64xf32>
    %451 = math.exp %450 : vector<64x64xf32>
    %cst_179 = arith.constant dense<0.000000e+00> : vector<64xf32>
    %452 = vector.multi_reduction <add>, %451, %cst_179 [1] : vector<64x64xf32> to vector<64xf32>
    %453 = vector.shape_cast %452 : vector<64xf32> to vector<64x1xf32>
    %454 = tpu.reciprocal %453 {approx = true} : vector<64x1xf32> -> vector<64x1xf32>
    %455 = vector.broadcast %454 : vector<64x1xf32> to vector<64x64xf32>
    %456 = arith.mulf %451, %455 : vector<64x64xf32>
    %457 = arith.mulf %456, %432 : vector<64x64xf32>
    %cst_180 = arith.constant dense<0.000000e+00> : vector<64xf32>
    %458 = vector.multi_reduction <add>, %457, %cst_180 [1] : vector<64x64xf32> to vector<64xf32>
    %459 = vector.shape_cast %458 : vector<64xf32> to vector<64x1xf32>
    %460 = arith.addf %424, %459 : vector<64x1xf32>
    %cst_181 = arith.constant 2.500000e-01 : f32
    %461 = vector.broadcast %cst_181 : f32 to vector<64x1xf32>
    %462 = arith.mulf %460, %461 : vector<64x1xf32>
    %c0_182 = arith.constant 0 : index
    %c0_183 = arith.constant 0 : index
    %463 = memref.load %arg12[%c0_182, %c0_183] : memref<1x1xf32, #tpu.memory_space<smem>>
    %464 = vector.broadcast %463 : f32 to vector<64x1xf32>
    %465 = arith.addf %462, %464 : vector<64x1xf32>
    %c0_184 = arith.constant 0 : index
    %c0_185 = arith.constant 0 : index
    %466 = vector.load %arg13[%c0_184, %c0_185] : memref<64x1xf32, #tpu.memory_space<vmem>>, vector<64x1xf32>
    tpu.vector_store %arg13[%c0_184, %c0_185], %465 {strides = array<i32>} : memref<64x1xf32, #tpu.memory_space<vmem>>, vector<64x1xf32>,
    return
  }
}

</mosaic_0001>

<llo_original>
// kernel: tpu_custom_call.1
$region0: #{tpu_custom_call.1}
  #allocation0 [shape = 'u32[]', space=smem, size = 0x4, offset = 0x4, fixed_abs, tag = 'smem constant byte address 0x4 - core index']
  #allocation1 [shape = 'u32[144,128]{1,0:T(1,128)}', space=vmem, size = 0x12000, scoped, tag = 'internal scratch']
  #allocation2 [shape = 'bf16[64,256]{1,0:T(16,128)(2,1)}', space=vmem, size = 0x8000, scoped, tag = 'scratch operand']
  #allocation3 [shape = 'bf16[256,128]{1,0:T(16,128)(2,1)}', space=vmem, size = 0x10000, scoped, tag = 'scratch operand']
  #allocation4 [shape = 'f32[1,1]{1,0:T(1,128)S(6)}', space=smem, size = 0x200, scoped, tag = 'scoped memory for tpu_custom_call.1']
  %s0 = inlined_call_operand.vmem [shape: f32[64,64], index: 0, kind: input, shape index: {}]
  %s1 = inlined_call_operand.vmem [shape: f32[64,30], index: 1, kind: input, shape index: {}]
  %s2 = inlined_call_operand.hbm [shape: bf16[30,512], index: 2, kind: input, shape index: {}]
  %s3 = inlined_call_operand.vmem [shape: f32[4,128], index: 3, kind: input, shape index: {}]
  %s4 = inlined_call_operand.vmem [shape: f32[4,128], index: 4, kind: input, shape index: {}]
  %s5 = inlined_call_operand.vmem [shape: f32[1,128], index: 5, kind: input, shape index: {}]
  %s6 = inlined_call_operand.hbm [shape: bf16[128,512], index: 6, kind: input, shape index: {}]
  %s7 = inlined_call_operand.vmem [shape: f32[4,128], index: 7, kind: input, shape index: {}]
  %s8 = inlined_call_operand.vmem [shape: f32[4,128], index: 8, kind: input, shape index: {}]
  %s9 = inlined_call_operand.vmem [shape: f32[1,128], index: 9, kind: input, shape index: {}]
  %s10 = inlined_call_operand.vmem [shape: f32[4,128], index: 10, kind: input, shape index: {}]
  %s11 = inlined_call_operand.vmem [shape: f32[2,4], index: 11, kind: input, shape index: {}]
  %s12 = inlined_call_operand.<no memory space> [shape: f32[1,1], index: 12, kind: input, shape index: {}]
  %s13 = inlined_call_operand.vmem [shape: f32[64,1], index: 13, kind: output, shape index: {}]
  %s14 = sld [smem:[#allocation0]]
  $region74: #{tpu_custom_call.1} parent=0
    _
  %s16 = ssub.s32 1, %s14
  %s17 = scalar_select 0, %s16, %s14
  %18 = sst [smem:[#allocation4]] %s12
  $region1: #{tpu_custom_call.1} parent=0
    #allocation5 [shape = 'u8[32768]{0}', space=vmem, size = 0x8000, scoped, tag = 'input window, operand 2, single buffered']
    #allocation6 [shape = 's32[1]{0}', space=sflag, size = 0x4, scoped, tag = 'scoped memory for tpu_custom_call.1']
    #allocation7 [shape = 's32[1]{0}', space=sflag, size = 0x4, scoped, tag = 'scoped memory for tpu_custom_call.1']
    #allocation8 [shape = 'u8[131072]{0}', space=vmem, size = 0x20000, scoped, tag = 'input window, operand 6, single buffered']
    #allocation9 [shape = 's32[1]{0}', space=sflag, size = 0x4, scoped, tag = 'scoped memory for tpu_custom_call.1']
    #allocation10 [shape = 'u8[1024]{0}', space=smem, size = 0x400, scoped, tag = 'input window, operand 11, single buffered']
    %19 = vsyncpa [#allocation6], 0
    %20 = vsyncpa [#allocation9], 0
    %21 = vsyncpa [#allocation7], 0
    // Predicated region
    $region2: #{tpu_custom_call.1} parent=1 // pred_check
      _
    $region3: #{tpu_custom_call.1} parent=1 // pred_check_branch
      %23 = sbr.rel (0) target = $region5
    $region4: #{tpu_custom_call.1} parent=1 // pred_region
      _
    $region5: #{tpu_custom_call.1} parent=1 // pred_fallthru
      _
    // Predicated region
    $region6: #{tpu_custom_call.1} parent=1 // pred_check
      _
    $region7: #{tpu_custom_call.1} parent=1 // pred_check_branch
      %25 = sbr.rel (0) target = $region9
    $region8: #{tpu_custom_call.1} parent=1 // pred_region
      _
    $region9: #{tpu_custom_call.1} parent=1 // pred_fallthru
      _
    // Predicated region
    $region10: #{tpu_custom_call.1} parent=1 // pred_check
      _
    $region11: #{tpu_custom_call.1} parent=1 // pred_check_branch
      %27 = sbr.rel (0) target = $region13
    $region12: #{tpu_custom_call.1} parent=1 // pred_region
      %s29 = ssub.s32 1024, 1024
      %30 = vsyncadd [#allocation6], %s29
      %s31 = sshll.u32 [#allocation5], 4
      %s32 = int_to_ptr.vmem [resolvable:$true] %s31
      %37 = dma.hbm_to_vmem [thread:$0]  %s2, 1024, %s32, [#allocation6], 256, 256, 16
    $region13: #{tpu_custom_call.1} parent=1 // pred_fallthru
      _
    // Predicated region
    $region14: #{tpu_custom_call.1} parent=1 // pred_check
      _
    $region15: #{tpu_custom_call.1} parent=1 // pred_check_branch
      %39 = sbr.rel (0) target = $region17
    $region16: #{tpu_custom_call.1} parent=1 // pred_region
      _
    $region17: #{tpu_custom_call.1} parent=1 // pred_fallthru
      _
    // Predicated region
    $region18: #{tpu_custom_call.1} parent=1 // pred_check
      _
    $region19: #{tpu_custom_call.1} parent=1 // pred_check_branch
      %41 = sbr.rel (0) target = $region21
    $region20: #{tpu_custom_call.1} parent=1 // pred_region
      _
    $region21: #{tpu_custom_call.1} parent=1 // pred_fallthru
      _
    // Predicated region
    $region22: #{tpu_custom_call.1} parent=1 // pred_check
      _
    $region23: #{tpu_custom_call.1} parent=1 // pred_check_branch
      %43 = sbr.rel (0) target = $region25
    $region24: #{tpu_custom_call.1} parent=1 // pred_region
      _
    $region25: #{tpu_custom_call.1} parent=1 // pred_fallthru
      _
    // Predicated region
    $region26: #{tpu_custom_call.1} parent=1 // pred_check
      _
    $region27: #{tpu_custom_call.1} parent=1 // pred_check_branch
      %45 = sbr.rel (0) target = $region29
    $region28: #{tpu_custom_call.1} parent=1 // pred_region
      %s47 = ssub.s32 4096, 4096
      %48 = vsyncadd [#allocation9], %s47
      %s49 = sshll.u32 [#allocation8], 4
      %s50 = int_to_ptr.vmem [resolvable:$true] %s49
      %55 = dma.hbm_to_vmem [thread:$0]  %s6, 4096, %s50, [#allocation9], 256, 256, 16
    $region29: #{tpu_custom_call.1} parent=1 // pred_fallthru
      _
    // Predicated region
    $region30: #{tpu_custom_call.1} parent=1 // pred_check
      _
    $region31: #{tpu_custom_call.1} parent=1 // pred_check_branch
      %57 = sbr.rel (0) target = $region33
    $region32: #{tpu_custom_call.1} parent=1 // pred_region
      _
    $region33: #{tpu_custom_call.1} parent=1 // pred_fallthru
      _
    // Predicated region
    $region34: #{tpu_custom_call.1} parent=1 // pred_check
      _
    $region35: #{tpu_custom_call.1} parent=1 // pred_check_branch
      %59 = sbr.rel (0) target = $region37
    $region36: #{tpu_custom_call.1} parent=1 // pred_region
      _
    $region37: #{tpu_custom_call.1} parent=1 // pred_fallthru
      _
    // Predicated region
    $region38: #{tpu_custom_call.1} parent=1 // pred_check
      _
    $region39: #{tpu_custom_call.1} parent=1 // pred_check_branch
      %61 = sbr.rel (0) target = $region41
    $region40: #{tpu_custom_call.1} parent=1 // pred_region
      _
    $region41: #{tpu_custom_call.1} parent=1 // pred_fallthru
      _
    // Predicated region
    $region42: #{tpu_custom_call.1} parent=1 // pred_check
      _
    $region43: #{tpu_custom_call.1} parent=1 // pred_check_branch
      %63 = sbr.rel (0) target = $region45
    $region44: #{tpu_custom_call.1} parent=1 // pred_region
      _
    $region45: #{tpu_custom_call.1} parent=1 // pred_fallthru
      _
    // Predicated region
    $region46: #{tpu_custom_call.1} parent=1 // pred_check
      _
    $region47: #{tpu_custom_call.1} parent=1 // pred_check_branch
      %65 = sbr.rel (0) target = $region49
    $region48: #{tpu_custom_call.1} parent=1 // pred_region
      %s67 = ssub.s32 32, 32
      %68 = vsyncadd [#allocation7], %s67
      %s70 = sshll.u32 %s11, 4
      %s71 = int_to_ptr.vmem [resolvable:$true] %s70
      %73 = dma.vmem_to_smem %s71, 32, [#allocation10], [#allocation7]
    $region49: #{tpu_custom_call.1} parent=1 // pred_fallthru
      _
    // Predicated region
    $region50: #{tpu_custom_call.1} parent=1 // pred_check
      _
    $region51: #{tpu_custom_call.1} parent=1 // pred_check_branch
      %75 = sbr.rel (0) target = $region53
    $region52: #{tpu_custom_call.1} parent=1 // pred_region
      _
    $region53: #{tpu_custom_call.1} parent=1 // pred_fallthru
      _
    // Predicated region
    $region54: #{tpu_custom_call.1} parent=1 // pred_check
      _
    $region55: #{tpu_custom_call.1} parent=1 // pred_check_branch
      %77 = sbr.rel (0) target = $region57
    $region56: #{tpu_custom_call.1} parent=1 // pred_region
      %78 = dma.done [#allocation6], 1024
    $region57: #{tpu_custom_call.1} parent=1 // pred_fallthru
      _
    // Predicated region
    $region58: #{tpu_custom_call.1} parent=1 // pred_check
      _
    $region59: #{tpu_custom_call.1} parent=1 // pred_check_branch
      %80 = sbr.rel (0) target = $region61
    $region60: #{tpu_custom_call.1} parent=1 // pred_region
      %81 = dma.done [#allocation9], 4096
    $region61: #{tpu_custom_call.1} parent=1 // pred_fallthru
      _
    // Predicated region
    $region62: #{tpu_custom_call.1} parent=1 // pred_check
      _
    $region63: #{tpu_custom_call.1} parent=1 // pred_check_branch
      %83 = sbr.rel (0) target = $region65
    $region64: #{tpu_custom_call.1} parent=1 // pred_region
      %84 = dma.done [#allocation7], 32
    $region65: #{tpu_custom_call.1} parent=1 // pred_fallthru
      _
    %85 = sfence
    %v87 = vld [vmem:[%s0] sm:$0xff]
    %v88 = vld [vmem:[%s0 + $0x8] sm:$0xff]
    %v89 = vld [vmem:[%s0 + $0x10] sm:$0xff]
    %v90 = vld [vmem:[%s0 + $0x18] sm:$0xff]
    %v91 = vld [vmem:[%s0 + $0x20] sm:$0xff]
    %v92 = vld [vmem:[%s0 + $0x28] sm:$0xff]
    %v93 = vld [vmem:[%s0 + $0x30] sm:$0xff]
    %v94 = vld [vmem:[%s0 + $0x38] sm:$0xff]
    %v95 = vld [vmem:[%s1] sm:$0xff]
    %v96 = vld [vmem:[%s1 + $0x8] sm:$0xff]
    %v97 = vld [vmem:[%s1 + $0x10] sm:$0xff]
    %v98 = vld [vmem:[%s1 + $0x18] sm:$0xff]
    %v99 = vld [vmem:[%s1 + $0x20] sm:$0xff]
    %v100 = vld [vmem:[%s1 + $0x28] sm:$0xff]
    %v101 = vld [vmem:[%s1 + $0x30] sm:$0xff]
    %v102 = vld [vmem:[%s1 + $0x38] sm:$0xff]
    %v103 = vpack.c.bf16 %v96, %v95
    %v104 = vpack.c.bf16 %v98, %v97
    %v105 = vpack.c.bf16 %v100, %v99
    %v106 = vpack.c.bf16 %v102, %v101
    %v107 = vld [vmem:[#allocation5] sm:$0xff]
    %v108 = vld [vmem:[#allocation5 + $0x8] sm:$0xff]
    %v109 = vld [vmem:[#allocation5 + $0x10] sm:$0xff]
    %v110 = vld [vmem:[#allocation5 + $0x18] sm:$0xff]
    %v111 = vld [vmem:[#allocation5 + $0x20] sm:$0xff]
    %v112 = vld [vmem:[#allocation5 + $0x28] sm:$0xff]
    %v113 = vld [vmem:[#allocation5 + $0x30] sm:$0x77]
    %v114 = vld [vmem:[#allocation5 + $0x38] sm:$0x77]
    %v123 = vunpack.c.l.b16 %v107
    %v124 = vunpack.c.h.b16 %v107
    %v125 = vunpack.c.l.b16 %v108
    %v126 = vunpack.c.h.b16 %v108
    %v127 = vunpack.c.l.b16 %v109
    %v128 = vunpack.c.h.b16 %v109
    %v129 = vunpack.c.l.b16 %v110
    %v130 = vunpack.c.h.b16 %v110
    %v131 = vunpack.c.l.b16 %v111
    %v132 = vunpack.c.h.b16 %v111
    %v133 = vunpack.c.l.b16 %v112
    %v134 = vunpack.c.h.b16 %v112
    %v135 = vunpack.c.l.b16 %v113
    %v136 = vunpack.c.h.b16 %v113
    %v137 = vunpack.c.l.b16 %v114
    %v138 = vunpack.c.h.b16 %v114
    %v139 = vpack.c.b16 %v127, %v123
    %v140 = vpack.c.b16 %v128, %v124
    %v141 = vpack.c.b16 %v129, %v125
    %v142 = vpack.c.b16 %v130, %v126
    %v143 = vpack.c.b16 %v135, %v131
    %v144 = vpack.c.b16 %v136, %v132
    %v145 = vpack.c.b16 %v137, %v133
    %v146 = vpack.c.b16 %v138, %v134
    %vm151 = vcmask 244736
    %v153 = vsel %vm151, %v103, 0
    %v156 = vsel %vm151, %v104, 0
    %v159 = vsel %vm151, %v105, 0
    %v162 = vsel %vm151, %v106, 0
    %vm164 = vcmask 1046528
    %v166 = vsel %vm164, %v143, 0
    %v169 = vsel %vm164, %v144, 0
    %v172 = vsel %vm164, %v145, 0
    %v175 = vsel %vm164, %v146, 0
    %177 = vmatprep.subr.bf16.mxu0 %v140
    %178 = vmatpush1.bf16.msra.mxu0 %v139
    %179 = vmatprep.subr.bf16.mxu0 %v169
    %180 = vmatpush1.bf16.msra.mxu0 %v166
    %181 = vmatprep.subr.bf16.mxu0 0
    %182 = vmatpush1.bf16.msra.mxu0 0
    %183 = vmatprep.subr.bf16.mxu0 0
    %184 = vmatpush1.bf16.msra.mxu0 0
    %185 = vmatprep.subr.bf16.mxu0 0
    %186 = vmatpush1.bf16.msra.mxu0 0
    %187 = vmatprep.subr.bf16.mxu0 0
    %188 = vmatpush1.bf16.msra.mxu0 0
    %189 = vmatprep.subr.bf16.mxu0 0
    %190 = vmatpush1.bf16.msra.mxu0 0
    %191 = vmatprep.subr.bf16.mxu0 0
    %192 = vmatpush1.bf16.msra.mxu0 0
    %193 = vmatprep.subr.bf16.mxu0 0
    %194 = vmatpush1.bf16.msra.mxu0 0
    %195 = vmatprep.subr.bf16.mxu0 0
    %196 = vmatpush1.bf16.msra.mxu0 0
    %197 = vmatprep.subr.bf16.mxu0 0
    %198 = vmatpush1.bf16.msra.mxu0 0
    %199 = vmatprep.subr.bf16.mxu0 0
    %200 = vmatpush1.bf16.msra.mxu0 0
    %201 = vmatprep.subr.bf16.mxu0 0
    %202 = vmatpush1.bf16.msra.mxu0 0
    %203 = vmatprep.subr.bf16.mxu0 0
    %204 = vmatpush1.bf16.msra.mxu0 0
    %205 = vmatprep.subr.bf16.mxu0 0
    %206 = vmatpush1.bf16.msra.mxu0 0
    %207 = vmatprep.subr.bf16.mxu0 0
    %208 = vmatpush1.bf16.msra.mxu0 0
    %209 = vmatprep.mubr.bf16.mxu0 0
    %210 = vmatmul.mubr.bf16.gmra.mrb[0].mxu0 %v153
    %v211 = vpop.f32.mrb[0].mxu0
    %v212 = vadd.f32 0.0, %v211
    %v213 = vpop.f32.mrb[0].mxu0
    %v214 = vadd.f32 0.0, %v213
    %v215 = vpop.f32.mrb[0].mxu0
    %v216 = vadd.f32 0.0, %v215
    %v217 = vpop.f32.mrb[0].mxu0
    %v218 = vadd.f32 0.0, %v217
    %219 = vmatprep.mubr.bf16.mxu0 0
    %220 = vmatmul.mubr.bf16.gmra.mrb[0].mxu0 %v156
    %v221 = vpop.f32.mrb[0].mxu0
    %v222 = vadd.f32 0.0, %v221
    %v223 = vpop.f32.mrb[0].mxu0
    %v224 = vadd.f32 0.0, %v223
    %v225 = vpop.f32.mrb[0].mxu0
    %v226 = vadd.f32 0.0, %v225
    %v227 = vpop.f32.mrb[0].mxu0
    %v228 = vadd.f32 0.0, %v227
    %229 = vmatprep.mubr.bf16.mxu0 0
    %230 = vmatmul.mubr.bf16.gmra.mrb[0].mxu0 %v159
    %v231 = vpop.f32.mrb[0].mxu0
    %v232 = vadd.f32 0.0, %v231
    %v233 = vpop.f32.mrb[0].mxu0
    %v234 = vadd.f32 0.0, %v233
    %v235 = vpop.f32.mrb[0].mxu0
    %v236 = vadd.f32 0.0, %v235
    %v237 = vpop.f32.mrb[0].mxu0
    %v238 = vadd.f32 0.0, %v237
    %239 = vmatprep.mubr.bf16.mxu0 0
    %240 = vmatmul.mubr.bf16.gmra.mrb[0].mxu0 %v162
    %v241 = vpop.f32.mrb[0].mxu0
    %v242 = vadd.f32 0.0, %v241
    %v243 = vpop.f32.mrb[0].mxu0
    %v244 = vadd.f32 0.0, %v243
    %v245 = vpop.f32.mrb[0].mxu0
    %v246 = vadd.f32 0.0, %v245
    %v247 = vpop.f32.mrb[0].mxu0
    %v248 = vadd.f32 0.0, %v247
    %249 = vdwg.mxu0
    %250 = vmatprep.subr.bf16.mxu0 %v142
    %251 = vmatpush1.bf16.msra.mxu0 %v141
    %252 = vmatprep.subr.bf16.mxu0 %v175
    %253 = vmatpush1.bf16.msra.mxu0 %v172
    %254 = vmatprep.subr.bf16.mxu0 0
    %255 = vmatpush1.bf16.msra.mxu0 0
    %256 = vmatprep.subr.bf16.mxu0 0
    %257 = vmatpush1.bf16.msra.mxu0 0
    %258 = vmatprep.subr.bf16.mxu0 0
    %259 = vmatpush1.bf16.msra.mxu0 0
    %260 = vmatprep.subr.bf16.mxu0 0
    %261 = vmatpush1.bf16.msra.mxu0 0
    %262 = vmatprep.subr.bf16.mxu0 0
    %263 = vmatpush1.bf16.msra.mxu0 0
    %264 = vmatprep.subr.bf16.mxu0 0
    %265 = vmatpush1.bf16.msra.mxu0 0
    %266 = vmatprep.subr.bf16.mxu0 0
    %267 = vmatpush1.bf16.msra.mxu0 0
    %268 = vmatprep.subr.bf16.mxu0 0
    %269 = vmatpush1.bf16.msra.mxu0 0
    %270 = vmatprep.subr.bf16.mxu0 0
    %271 = vmatpush1.bf16.msra.mxu0 0
    %272 = vmatprep.subr.bf16.mxu0 0
    %273 = vmatpush1.bf16.msra.mxu0 0
    %274 = vmatprep.subr.bf16.mxu0 0
    %275 = vmatpush1.bf16.msra.mxu0 0
    %276 = vmatprep.subr.bf16.mxu0 0
    %277 = vmatpush1.bf16.msra.mxu0 0
    %278 = vmatprep.subr.bf16.mxu0 0
    %279 = vmatpush1.bf16.msra.mxu0 0
    %280 = vmatprep.subr.bf16.mxu0 0
    %281 = vmatpush1.bf16.msra.mxu0 0
    %282 = vmatprep.mubr.bf16.mxu0 0
    %283 = vmatmul.mubr.bf16.gmra.mrb[0].mxu0 %v153
    %v284 = vpop.f32.mrb[0].mxu0
    %v285 = vadd.f32 0.0, %v284
    %v286 = vpop.f32.mrb[0].mxu0
    %v287 = vadd.f32 0.0, %v286
    %v288 = vpop.f32.mrb[0].mxu0
    %v289 = vadd.f32 0.0, %v288
    %v290 = vpop.f32.mrb[0].mxu0
    %v291 = vadd.f32 0.0, %v290
    %292 = vmatprep.mubr.bf16.mxu0 0
    %293 = vmatmul.mubr.bf16.gmra.mrb[0].mxu0 %v156
    %v294 = vpop.f32.mrb[0].mxu0
    %v295 = vadd.f32 0.0, %v294
    %v296 = vpop.f32.mrb[0].mxu0
    %v297 = vadd.f32 0.0, %v296
    %v298 = vpop.f32.mrb[0].mxu0
    %v299 = vadd.f32 0.0, %v298
    %v300 = vpop.f32.mrb[0].mxu0
    %v301 = vadd.f32 0.0, %v300
    %302 = vmatprep.mubr.bf16.mxu0 0
    %303 = vmatmul.mubr.bf16.gmra.mrb[0].mxu0 %v159
    %v304 = vpop.f32.mrb[0].mxu0
    %v305 = vadd.f32 0.0, %v304
    %v306 = vpop.f32.mrb[0].mxu0
    %v307 = vadd.f32 0.0, %v306
    %v308 = vpop.f32.mrb[0].mxu0
    %v309 = vadd.f32 0.0, %v308
    %v310 = vpop.f32.mrb[0].mxu0
    %v311 = vadd.f32 0.0, %v310
    %312 = vmatprep.mubr.bf16.mxu0 0
    %313 = vmatmul.mubr.bf16.gmra.mrb[0].mxu0 %v162
    %v314 = vpop.f32.mrb[0].mxu0
    %v315 = vadd.f32 0.0, %v314
    %v316 = vpop.f32.mrb[0].mxu0
    %v317 = vadd.f32 0.0, %v316
    %v318 = vpop.f32.mrb[0].mxu0
    %v319 = vadd.f32 0.0, %v318
    %v320 = vpop.f32.mrb[0].mxu0
    %v321 = vadd.f32 0.0, %v320
    %322 = vdwg.mxu0
    %v323 = vld [vmem:[%s4] sm:$0x1]
    %v324 = vlaneseq
    %v325 = vshrl.u32 %v324, 7
    %v326 = vsub.s32 0, %v325
    %v327 = vrot.slane %v323, %v326
    %v328 = vmul.f32 %v212, %v327
    %v329 = vmul.f32 %v216, %v327
    %v330 = vmul.f32 %v222, %v327
    %v331 = vmul.f32 %v226, %v327
    %v332 = vmul.f32 %v232, %v327
    %v333 = vmul.f32 %v236, %v327
    %v334 = vmul.f32 %v242, %v327
    %v335 = vmul.f32 %v246, %v327
    %336 = vadd.xlane.f32.xlu0 %v328
    %v337 = vpop.xlane.xlu0 %336
    %338 = vadd.xlane.f32.xlu0 %v329
    %v339 = vpop.xlane.xlu0 %338
    %340 = vadd.xlane.f32.xlu0 %v330
    %v341 = vpop.xlane.xlu0 %340
    %342 = vadd.xlane.f32.xlu0 %v331
    %v343 = vpop.xlane.xlu0 %342
    %344 = vadd.xlane.f32.xlu0 %v332
    %v345 = vpop.xlane.xlu0 %344
    %346 = vadd.xlane.f32.xlu0 %v333
    %v347 = vpop.xlane.xlu0 %346
    %348 = vadd.xlane.f32.xlu0 %v334
    %v349 = vpop.xlane.xlu0 %348
    %350 = vadd.xlane.f32.xlu0 %v335
    %v351 = vpop.xlane.xlu0 %350
    %v352 = vld [vmem:[%s3] sm:$0x1]
    %v353 = vlaneseq
    %v354 = vshrl.u32 %v353, 7
    %v355 = vsub.s32 0, %v354
    %v356 = vrot.slane %v352, %v355
    %v357 = vmul.f32 %v212, %v356
    %v358 = vmul.f32 %v216, %v356
    %v359 = vmul.f32 %v222, %v356
    %v360 = vmul.f32 %v226, %v356
    %v361 = vmul.f32 %v232, %v356
    %v362 = vmul.f32 %v236, %v356
    %v363 = vmul.f32 %v242, %v356
    %v364 = vmul.f32 %v246, %v356
    %365 = vadd.xlane.f32.xlu0 %v357
    %v366 = vpop.xlane.xlu0 %365
    %367 = vadd.xlane.f32.xlu0 %v358
    %v368 = vpop.xlane.xlu0 %367
    %369 = vadd.xlane.f32.xlu0 %v359
    %v370 = vpop.xlane.xlu0 %369
    %371 = vadd.xlane.f32.xlu0 %v360
    %v372 = vpop.xlane.xlu0 %371
    %373 = vadd.xlane.f32.xlu0 %v361
    %v374 = vpop.xlane.xlu0 %373
    %375 = vadd.xlane.f32.xlu0 %v362
    %v376 = vpop.xlane.xlu0 %375
    %377 = vadd.xlane.f32.xlu0 %v363
    %v378 = vpop.xlane.xlu0 %377
    %379 = vadd.xlane.f32.xlu0 %v364
    %v380 = vpop.xlane.xlu0 %379
    %381 = vxpose.xlu0.b32.start [1/16] %v366, 128
    %382 = vxpose.xlu0.b32.cont [2/16] %v368, 128
    %383 = vxpose.xlu0.b32.cont [3/16] %v370, 128
    %384 = vxpose.xlu0.b32.cont [4/16] %v372, 128
    %385 = vxpose.xlu0.b32.cont [5/16] %v374, 128
    %386 = vxpose.xlu0.b32.cont [6/16] %v376, 128
    %387 = vxpose.xlu0.b32.cont [7/16] %v378, 128
    %388 = vxpose.xlu0.b32.cont [8/16] %v380, 128
    %389 = vxpose.xlu0.b32.cont [9/16] 0.0, 128
    %390 = vxpose.xlu0.b32.cont [10/16] 0.0, 128
    %391 = vxpose.xlu0.b32.cont [11/16] 0.0, 128
    %392 = vxpose.xlu0.b32.cont [12/16] 0.0, 128
    %393 = vxpose.xlu0.b32.cont [13/16] 0.0, 128
    %394 = vxpose.xlu0.b32.cont [14/16] 0.0, 128
    %395 = vxpose.xlu0.b32.cont [15/16] 0.0, 128
    %396 = vxpose.xlu0.b32.end [16/16] 0.0, 128
    %v397 = vpop.trf.xlu0
    %v398 = vpop.trf.xlu0
    %v399 = vpop.trf.xlu0
    %v400 = vpop.trf.xlu0
    %v401 = vpop.trf.xlu0
    %v402 = vpop.trf.xlu0
    %v403 = vpop.trf.xlu0
    %v404 = vpop.trf.xlu0
    %v405 = vpop.trf.xlu0
    %v406 = vpop.trf.xlu0
    %v407 = vpop.trf.xlu0
    %v408 = vpop.trf.xlu0
    %v409 = vpop.trf.xlu0
    %v410 = vpop.trf.xlu0
    %v411 = vpop.trf.xlu0
    %v412 = vpop.trf.xlu0
    %v413 = vadd.f32 %v337, %v397
    %v414 = vadd.f32 %v339, %v398
    %v415 = vadd.f32 %v341, %v399
    %v416 = vadd.f32 %v343, %v400
    %v417 = vadd.f32 %v345, %v401
    %v418 = vadd.f32 %v347, %v402
    %v419 = vadd.f32 %v349, %v403
    %v420 = vadd.f32 %v351, %v404
    %vm421 = vcmp.ge.f32.partialorder %v413, 0.0
    %vm422 = vcmp.ge.f32.partialorder %v414, 0.0
    %vm423 = vcmp.ge.f32.partialorder %v415, 0.0
    %vm424 = vcmp.ge.f32.partialorder %v416, 0.0
    %vm425 = vcmp.ge.f32.partialorder %v417, 0.0
    %vm426 = vcmp.ge.f32.partialorder %v418, 0.0
    %vm427 = vcmp.ge.f32.partialorder %v419, 0.0
    %vm428 = vcmp.ge.f32.partialorder %v420, 0.0
    %v429 = vmul.f32 %v413, 0.2
    %v430 = vmul.f32 %v414, 0.2
    %v431 = vmul.f32 %v415, 0.2
    %v432 = vmul.f32 %v416, 0.2
    %v433 = vmul.f32 %v417, 0.2
    %v434 = vmul.f32 %v418, 0.2
    %v435 = vmul.f32 %v419, 0.2
    %v436 = vmul.f32 %v420, 0.2
    %v437 = vsel %vm421, %v413, %v429
    %v438 = vsel %vm422, %v414, %v430
    %v439 = vsel %vm423, %v415, %v431
    %v440 = vsel %vm424, %v416, %v432
    %v441 = vsel %vm425, %v417, %v433
    %v442 = vsel %vm426, %v418, %v434
    %v443 = vsel %vm427, %v419, %v435
    %v444 = vsel %vm428, %v420, %v436
    %v445 = vadd.f32 %v437, %v87
    %v446 = vadd.f32 %v438, %v88
    %v447 = vadd.f32 %v439, %v89
    %v448 = vadd.f32 %v440, %v90
    %v449 = vadd.f32 %v441, %v91
    %v450 = vadd.f32 %v442, %v92
    %v451 = vadd.f32 %v443, %v93
    %v452 = vadd.f32 %v444, %v94
    %vm453 = vcmask 523264
    %v454 = vsel %vm453, %v445, -inf
    %455 = vmax.xlane.f32.xlu0 %v454
    %v456 = vpop.xlane.xlu0 %455
    %v457 = vsel %vm453, %v446, -inf
    %458 = vmax.xlane.f32.xlu0 %v457
    %v459 = vpop.xlane.xlu0 %458
    %v460 = vsel %vm453, %v447, -inf
    %461 = vmax.xlane.f32.xlu0 %v460
    %v462 = vpop.xlane.xlu0 %461
    %v463 = vsel %vm453, %v448, -inf
    %464 = vmax.xlane.f32.xlu0 %v463
    %v465 = vpop.xlane.xlu0 %464
    %v466 = vsel %vm453, %v449, -inf
    %467 = vmax.xlane.f32.xlu0 %v466
    %v468 = vpop.xlane.xlu0 %467
    %v469 = vsel %vm453, %v450, -inf
    %470 = vmax.xlane.f32.xlu0 %v469
    %v471 = vpop.xlane.xlu0 %470
    %v472 = vsel %vm453, %v451, -inf
    %473 = vmax.xlane.f32.xlu0 %v472
    %v474 = vpop.xlane.xlu0 %473
    %v475 = vsel %vm453, %v452, -inf
    %476 = vmax.xlane.f32.xlu0 %v475
    %v477 = vpop.xlane.xlu0 %476
    %v478 = vsub.f32 %v445, %v456
    %v479 = vsub.f32 %v446, %v459
    %v480 = vsub.f32 %v447, %v462
    %v481 = vsub.f32 %v448, %v465
    %v482 = vsub.f32 %v449, %v468
    %v483 = vsub.f32 %v450, %v471
    %v484 = vsub.f32 %v451, %v474
    %v485 = vsub.f32 %v452, %v477
    %v486 = vmul.f32 %v478, 1.442695
    %v487 = vpow.pop %v486
    %v488 = vmul.f32 %v479, 1.442695
    %v489 = vpow.pop %v488
    %v490 = vmul.f32 %v480, 1.442695
    %v491 = vpow.pop %v490
    %v492 = vmul.f32 %v481, 1.442695
    %v493 = vpow.pop %v492
    %v494 = vmul.f32 %v482, 1.442695
    %v495 = vpow.pop %v494
    %v496 = vmul.f32 %v483, 1.442695
    %v497 = vpow.pop %v496
    %v498 = vmul.f32 %v484, 1.442695
    %v499 = vpow.pop %v498
    %v500 = vmul.f32 %v485, 1.442695
    %v501 = vpow.pop %v500
    %v502 = vsel %vm453, %v487, 0.0
    %503 = vadd.xlane.f32.xlu0 %v502
    %v504 = vpop.xlane.xlu0 %503
    %v505 = vsel %vm453, %v489, 0.0
    %506 = vadd.xlane.f32.xlu0 %v505
    %v507 = vpop.xlane.xlu0 %506
    %v508 = vsel %vm453, %v491, 0.0
    %509 = vadd.xlane.f32.xlu0 %v508
    %v510 = vpop.xlane.xlu0 %509
    %v511 = vsel %vm453, %v493, 0.0
    %512 = vadd.xlane.f32.xlu0 %v511
    %v513 = vpop.xlane.xlu0 %512
    %v514 = vsel %vm453, %v495, 0.0
    %515 = vadd.xlane.f32.xlu0 %v514
    %v516 = vpop.xlane.xlu0 %515
    %v517 = vsel %vm453, %v497, 0.0
    %518 = vadd.xlane.f32.xlu0 %v517
    %v519 = vpop.xlane.xlu0 %518
    %v520 = vsel %vm453, %v499, 0.0
    %521 = vadd.xlane.f32.xlu0 %v520
    %v522 = vpop.xlane.xlu0 %521
    %v523 = vsel %vm453, %v501, 0.0
    %524 = vadd.xlane.f32.xlu0 %v523
    %v525 = vpop.xlane.xlu0 %524
    %v526 = vrcp.pop %v504
    %v527 = vrcp.pop %v507
    %v528 = vrcp.pop %v510
    %v529 = vrcp.pop %v513
    %v530 = vrcp.pop %v516
    %v531 = vrcp.pop %v519
    %v532 = vrcp.pop %v522
    %v533 = vrcp.pop %v525
    %v534 = vmul.f32 %v487, %v526
    %v535 = vmul.f32 %v489, %v527
    %v536 = vmul.f32 %v491, %v528
    %v537 = vmul.f32 %v493, %v529
    %v538 = vmul.f32 %v495, %v530
    %v539 = vmul.f32 %v497, %v531
    %v540 = vmul.f32 %v499, %v532
    %v541 = vmul.f32 %v501, %v533
    %v542 = vpack.c.bf16 %v535, %v534
    %v543 = vpack.c.bf16 %v537, %v536
    %v544 = vpack.c.bf16 %v539, %v538
    %v545 = vpack.c.bf16 %v541, %v540
    %546 = vst.msk [vmem:[#allocation2] sm:$0xff] %vm453, %v542
    %547 = vst.msk [vmem:[#allocation2 + $0x10] sm:$0xff] %vm453, %v543
    %548 = vst.msk [vmem:[#allocation2 + $0x20] sm:$0xff] %vm453, %v544
    %549 = vst.msk [vmem:[#allocation2 + $0x30] sm:$0xff] %vm453, %v545
    %v550 = vpack.c.bf16 %v216, %v212
    %v551 = vpack.c.bf16 %v226, %v222
    %v552 = vpack.c.bf16 %v236, %v232
    %v553 = vpack.c.bf16 %v246, %v242
    %554 = vst [vmem:[#allocation3] sm:$0xff] %v550
    %555 = vst [vmem:[#allocation3 + $0x8] sm:$0xff] %v551
    %556 = vst [vmem:[#allocation3 + $0x10] sm:$0xff] %v552
    %557 = vst [vmem:[#allocation3 + $0x18] sm:$0xff] %v553
    %v558 = vld [vmem:[%s4 + $0x1] sm:$0x1]
    %v559 = vlaneseq
    %v560 = vshrl.u32 %v559, 7
    %v561 = vsub.s32 0, %v560
    %v562 = vrot.slane %v558, %v561
    %v563 = vmul.f32 %v214, %v562
    %v564 = vmul.f32 %v218, %v562
    %v565 = vmul.f32 %v224, %v562
    %v566 = vmul.f32 %v228, %v562
    %v567 = vmul.f32 %v234, %v562
    %v568 = vmul.f32 %v238, %v562
    %v569 = vmul.f32 %v244, %v562
    %v570 = vmul.f32 %v248, %v562
    %571 = vadd.xlane.f32.xlu0 %v563
    %v572 = vpop.xlane.xlu0 %571
    %573 = vadd.xlane.f32.xlu0 %v564
    %v574 = vpop.xlane.xlu0 %573
    %575 = vadd.xlane.f32.xlu0 %v565
    %v576 = vpop.xlane.xlu0 %575
    %577 = vadd.xlane.f32.xlu0 %v566
    %v578 = vpop.xlane.xlu0 %577
    %579 = vadd.xlane.f32.xlu0 %v567
    %v580 = vpop.xlane.xlu0 %579
    %581 = vadd.xlane.f32.xlu0 %v568
    %v582 = vpop.xlane.xlu0 %581
    %583 = vadd.xlane.f32.xlu0 %v569
    %v584 = vpop.xlane.xlu0 %583
    %585 = vadd.xlane.f32.xlu0 %v570
    %v586 = vpop.xlane.xlu0 %585
    %v587 = vld [vmem:[%s3 + $0x1] sm:$0x1]
    %v588 = vlaneseq
    %v589 = vshrl.u32 %v588, 7
    %v590 = vsub.s32 0, %v589
    %v591 = vrot.slane %v587, %v590
    %v592 = vmul.f32 %v214, %v591
    %v593 = vmul.f32 %v218, %v591
    %v594 = vmul.f32 %v224, %v591
    %v595 = vmul.f32 %v228, %v591
    %v596 = vmul.f32 %v234, %v591
    %v597 = vmul.f32 %v238, %v591
    %v598 = vmul.f32 %v244, %v591
    %v599 = vmul.f32 %v248, %v591
    %600 = vadd.xlane.f32.xlu0 %v592
    %v601 = vpop.xlane.xlu0 %600
    %602 = vadd.xlane.f32.xlu0 %v593
    %v603 = vpop.xlane.xlu0 %602
    %604 = vadd.xlane.f32.xlu0 %v594
    %v605 = vpop.xlane.xlu0 %604
    %606 = vadd.xlane.f32.xlu0 %v595
    %v607 = vpop.xlane.xlu0 %606
    %608 = vadd.xlane.f32.xlu0 %v596
    %v609 = vpop.xlane.xlu0 %608
    %610 = vadd.xlane.f32.xlu0 %v597
    %v611 = vpop.xlane.xlu0 %610
    %612 = vadd.xlane.f32.xlu0 %v598
    %v613 = vpop.xlane.xlu0 %612
    %614 = vadd.xlane.f32.xlu0 %v599
    %v615 = vpop.xlane.xlu0 %614
    %616 = vxpose.xlu0.b32.start [1/16] %v601, 128
    %617 = vxpose.xlu0.b32.cont [2/16] %v603, 128
    %618 = vxpose.xlu0.b32.cont [3/16] %v605, 128
    %619 = vxpose.xlu0.b32.cont [4/16] %v607, 128
    %620 = vxpose.xlu0.b32.cont [5/16] %v609, 128
    %621 = vxpose.xlu0.b32.cont [6/16] %v611, 128
    %622 = vxpose.xlu0.b32.cont [7/16] %v613, 128
    %623 = vxpose.xlu0.b32.cont [8/16] %v615, 128
    %624 = vxpose.xlu0.b32.cont [9/16] 0.0, 128
    %625 = vxpose.xlu0.b32.cont [10/16] 0.0, 128
    %626 = vxpose.xlu0.b32.cont [11/16] 0.0, 128
    %627 = vxpose.xlu0.b32.cont [12/16] 0.0, 128
    %628 = vxpose.xlu0.b32.cont [13/16] 0.0, 128
    %629 = vxpose.xlu0.b32.cont [14/16] 0.0, 128
    %630 = vxpose.xlu0.b32.cont [15/16] 0.0, 128
    %631 = vxpose.xlu0.b32.end [16/16] 0.0, 128
    %v632 = vpop.trf.xlu0
    %v633 = vpop.trf.xlu0
    %v634 = vpop.trf.xlu0
    %v635 = vpop.trf.xlu0
    %v636 = vpop.trf.xlu0
    %v637 = vpop.trf.xlu0
    %v638 = vpop.trf.xlu0
    %v639 = vpop.trf.xlu0
    %v640 = vpop.trf.xlu0
    %v641 = vpop.trf.xlu0
    %v642 = vpop.trf.xlu0
    %v643 = vpop.trf.xlu0
    %v644 = vpop.trf.xlu0
    %v645 = vpop.trf.xlu0
    %v646 = vpop.trf.xlu0
    %v647 = vpop.trf.xlu0
    %v648 = vadd.f32 %v572, %v632
    %v649 = vadd.f32 %v574, %v633
    %v650 = vadd.f32 %v576, %v634
    %v651 = vadd.f32 %v578, %v635
    %v652 = vadd.f32 %v580, %v636
    %v653 = vadd.f32 %v582, %v637
    %v654 = vadd.f32 %v584, %v638
    %v655 = vadd.f32 %v586, %v639
    %vm656 = vcmp.ge.f32.partialorder %v648, 0.0
    %vm657 = vcmp.ge.f32.partialorder %v649, 0.0
    %vm658 = vcmp.ge.f32.partialorder %v650, 0.0
    %vm659 = vcmp.ge.f32.partialorder %v651, 0.0
    %vm660 = vcmp.ge.f32.partialorder %v652, 0.0
    %vm661 = vcmp.ge.f32.partialorder %v653, 0.0
    %vm662 = vcmp.ge.f32.partialorder %v654, 0.0
    %vm663 = vcmp.ge.f32.partialorder %v655, 0.0
    %v664 = vmul.f32 %v648, 0.2
    %v665 = vmul.f32 %v649, 0.2
    %v666 = vmul.f32 %v650, 0.2
    %v667 = vmul.f32 %v651, 0.2
    %v668 = vmul.f32 %v652, 0.2
    %v669 = vmul.f32 %v653, 0.2
    %v670 = vmul.f32 %v654, 0.2
    %v671 = vmul.f32 %v655, 0.2
    %v672 = vsel %vm656, %v648, %v664
    %v673 = vsel %vm657, %v649, %v665
    %v674 = vsel %vm658, %v650, %v666
    %v675 = vsel %vm659, %v651, %v667
    %v676 = vsel %vm660, %v652, %v668
    %v677 = vsel %vm661, %v653, %v669
    %v678 = vsel %vm662, %v654, %v670
    %v679 = vsel %vm663, %v655, %v671
    %v680 = vadd.f32 %v672, %v87
    %v681 = vadd.f32 %v673, %v88
    %v682 = vadd.f32 %v674, %v89
    %v683 = vadd.f32 %v675, %v90
    %v684 = vadd.f32 %v676, %v91
    %v685 = vadd.f32 %v677, %v92
    %v686 = vadd.f32 %v678, %v93
    %v687 = vadd.f32 %v679, %v94
    %v688 = vsel %vm453, %v680, -inf
    %689 = vmax.xlane.f32.xlu0 %v688
    %v690 = vpop.xlane.xlu0 %689
    %v691 = vsel %vm453, %v681, -inf
    %692 = vmax.xlane.f32.xlu0 %v691
    %v693 = vpop.xlane.xlu0 %692
    %v694 = vsel %vm453, %v682, -inf
    %695 = vmax.xlane.f32.xlu0 %v694
    %v696 = vpop.xlane.xlu0 %695
    %v697 = vsel %vm453, %v683, -inf
    %698 = vmax.xlane.f32.xlu0 %v697
    %v699 = vpop.xlane.xlu0 %698
    %v700 = vsel %vm453, %v684, -inf
    %701 = vmax.xlane.f32.xlu0 %v700
    %v702 = vpop.xlane.xlu0 %701
    %v703 = vsel %vm453, %v685, -inf
    %704 = vmax.xlane.f32.xlu0 %v703
    %v705 = vpop.xlane.xlu0 %704
    %v706 = vsel %vm453, %v686, -inf
    %707 = vmax.xlane.f32.xlu0 %v706
    %v708 = vpop.xlane.xlu0 %707
    %v709 = vsel %vm453, %v687, -inf
    %710 = vmax.xlane.f32.xlu0 %v709
    %v711 = vpop.xlane.xlu0 %710
    %v712 = vsub.f32 %v680, %v690
    %v713 = vsub.f32 %v681, %v693
    %v714 = vsub.f32 %v682, %v696
    %v715 = vsub.f32 %v683, %v699
    %v716 = vsub.f32 %v684, %v702
    %v717 = vsub.f32 %v685, %v705
    %v718 = vsub.f32 %v686, %v708
    %v719 = vsub.f32 %v687, %v711
    %v720 = vmul.f32 %v712, 1.442695
    %v721 = vpow.pop %v720
    %v722 = vmul.f32 %v713, 1.442695
    %v723 = vpow.pop %v722
    %v724 = vmul.f32 %v714, 1.442695
    %v725 = vpow.pop %v724
    %v726 = vmul.f32 %v715, 1.442695
    %v727 = vpow.pop %v726
    %v728 = vmul.f32 %v716, 1.442695
    %v729 = vpow.pop %v728
    %v730 = vmul.f32 %v717, 1.442695
    %v731 = vpow.pop %v730
    %v732 = vmul.f32 %v718, 1.442695
    %v733 = vpow.pop %v732
    %v734 = vmul.f32 %v719, 1.442695
    %v735 = vpow.pop %v734
    %v736 = vsel %vm453, %v721, 0.0
    %737 = vadd.xlane.f32.xlu0 %v736
    %v738 = vpop.xlane.xlu0 %737
    %v739 = vsel %vm453, %v723, 0.0
    %740 = vadd.xlane.f32.xlu0 %v739
    %v741 = vpop.xlane.xlu0 %740
    %v742 = vsel %vm453, %v725, 0.0
    %743 = vadd.xlane.f32.xlu0 %v742
    %v744 = vpop.xlane.xlu0 %743
    %v745 = vsel %vm453, %v727, 0.0
    %746 = vadd.xlane.f32.xlu0 %v745
    %v747 = vpop.xlane.xlu0 %746
    %v748 = vsel %vm453, %v729, 0.0
    %749 = vadd.xlane.f32.xlu0 %v748
    %v750 = vpop.xlane.xlu0 %749
    %v751 = vsel %vm453, %v731, 0.0
    %752 = vadd.xlane.f32.xlu0 %v751
    %v753 = vpop.xlane.xlu0 %752
    %v754 = vsel %vm453, %v733, 0.0
    %755 = vadd.xlane.f32.xlu0 %v754
    %v756 = vpop.xlane.xlu0 %755
    %v757 = vsel %vm453, %v735, 0.0
    %758 = vadd.xlane.f32.xlu0 %v757
    %v759 = vpop.xlane.xlu0 %758
    %v760 = vrcp.pop %v738
    %v761 = vrcp.pop %v741
    %v762 = vrcp.pop %v744
    %v763 = vrcp.pop %v747
    %v764 = vrcp.pop %v750
    %v765 = vrcp.pop %v753
    %v766 = vrcp.pop %v756
    %v767 = vrcp.pop %v759
    %v768 = vmul.f32 %v721, %v760
    %v769 = vmul.f32 %v723, %v761
    %v770 = vmul.f32 %v725, %v762
    %v771 = vmul.f32 %v727, %v763
    %v772 = vmul.f32 %v729, %v764
    %v773 = vmul.f32 %v731, %v765
    %v774 = vmul.f32 %v733, %v766
    %v775 = vmul.f32 %v735, %v767
    %v776 = vpack.c.bf16 %v769, %v768
    %v777 = vpack.c.bf16 %v771, %v770
    %v778 = vpack.c.bf16 %v773, %v772
    %v779 = vpack.c.bf16 %v775, %v774
    %784 = vrot.lane.b32.xlu0 %v776, 64
    %v785 = vpop.permute.xlu0 %784
    %786 = vrot.lane.b32.xlu0 %v777, 64
    %v787 = vpop.permute.xlu0 %786
    %788 = vrot.lane.b32.xlu0 %v778, 64
    %v789 = vpop.permute.xlu0 %788
    %790 = vrot.lane.b32.xlu0 %v779, 64
    %v791 = vpop.permute.xlu0 %790
    %vm796 = vcmask 1048064
    %797 = vst.msk [vmem:[#allocation2] sm:$0xff] %vm796, %v785
    %798 = vst.msk [vmem:[#allocation2 + $0x10] sm:$0xff] %vm796, %v787
    %799 = vst.msk [vmem:[#allocation2 + $0x20] sm:$0xff] %vm796, %v789
    %800 = vst.msk [vmem:[#allocation2 + $0x30] sm:$0xff] %vm796, %v791
    %v801 = vpack.c.bf16 %v218, %v214
    %v802 = vpack.c.bf16 %v228, %v224
    %v803 = vpack.c.bf16 %v238, %v234
    %v804 = vpack.c.bf16 %v248, %v244
    %805 = vst [vmem:[#allocation3 + $0x20] sm:$0xff] %v801
    %806 = vst [vmem:[#allocation3 + $0x28] sm:$0xff] %v802
    %807 = vst [vmem:[#allocation3 + $0x30] sm:$0xff] %v803
    %808 = vst [vmem:[#allocation3 + $0x38] sm:$0xff] %v804
    %v809 = vld [vmem:[%s4 + $0x2] sm:$0x1]
    %v810 = vlaneseq
    %v811 = vshrl.u32 %v810, 7
    %v812 = vsub.s32 0, %v811
    %v813 = vrot.slane %v809, %v812
    %v814 = vmul.f32 %v285, %v813
    %v815 = vmul.f32 %v289, %v813
    %v816 = vmul.f32 %v295, %v813
    %v817 = vmul.f32 %v299, %v813
    %v818 = vmul.f32 %v305, %v813
    %v819 = vmul.f32 %v309, %v813
    %v820 = vmul.f32 %v315, %v813
    %v821 = vmul.f32 %v319, %v813
    %822 = vadd.xlane.f32.xlu0 %v814
    %v823 = vpop.xlane.xlu0 %822
    %824 = vadd.xlane.f32.xlu0 %v815
    %v825 = vpop.xlane.xlu0 %824
    %826 = vadd.xlane.f32.xlu0 %v816
    %v827 = vpop.xlane.xlu0 %826
    %828 = vadd.xlane.f32.xlu0 %v817
    %v829 = vpop.xlane.xlu0 %828
    %830 = vadd.xlane.f32.xlu0 %v818
    %v831 = vpop.xlane.xlu0 %830
    %832 = vadd.xlane.f32.xlu0 %v819
    %v833 = vpop.xlane.xlu0 %832
    %834 = vadd.xlane.f32.xlu0 %v820
    %v835 = vpop.xlane.xlu0 %834
    %836 = vadd.xlane.f32.xlu0 %v821
    %v837 = vpop.xlane.xlu0 %836
    %v838 = vld [vmem:[%s3 + $0x2] sm:$0x1]
    %v839 = vlaneseq
    %v840 = vshrl.u32 %v839, 7
    %v841 = vsub.s32 0, %v840
    %v842 = vrot.slane %v838, %v841
    %v843 = vmul.f32 %v285, %v842
    %v844 = vmul.f32 %v289, %v842
    %v845 = vmul.f32 %v295, %v842
    %v846 = vmul.f32 %v299, %v842
    %v847 = vmul.f32 %v305, %v842
    %v848 = vmul.f32 %v309, %v842
    %v849 = vmul.f32 %v315, %v842
    %v850 = vmul.f32 %v319, %v842
    %851 = vadd.xlane.f32.xlu0 %v843
    %v852 = vpop.xlane.xlu0 %851
    %853 = vadd.xlane.f32.xlu0 %v844
    %v854 = vpop.xlane.xlu0 %853
    %855 = vadd.xlane.f32.xlu0 %v845
    %v856 = vpop.xlane.xlu0 %855
    %857 = vadd.xlane.f32.xlu0 %v846
    %v858 = vpop.xlane.xlu0 %857
    %859 = vadd.xlane.f32.xlu0 %v847
    %v860 = vpop.xlane.xlu0 %859
    %861 = vadd.xlane.f32.xlu0 %v848
    %v862 = vpop.xlane.xlu0 %861
    %863 = vadd.xlane.f32.xlu0 %v849
    %v864 = vpop.xlane.xlu0 %863
    %865 = vadd.xlane.f32.xlu0 %v850
    %v866 = vpop.xlane.xlu0 %865
    %867 = vxpose.xlu0.b32.start [1/16] %v852, 128
    %868 = vxpose.xlu0.b32.cont [2/16] %v854, 128
    %869 = vxpose.xlu0.b32.cont [3/16] %v856, 128
    %870 = vxpose.xlu0.b32.cont [4/16] %v858, 128
    %871 = vxpose.xlu0.b32.cont [5/16] %v860, 128
    %872 = vxpose.xlu0.b32.cont [6/16] %v862, 128
    %873 = vxpose.xlu0.b32.cont [7/16] %v864, 128
    %874 = vxpose.xlu0.b32.cont [8/16] %v866, 128
    %875 = vxpose.xlu0.b32.cont [9/16] 0.0, 128
    %876 = vxpose.xlu0.b32.cont [10/16] 0.0, 128
    %877 = vxpose.xlu0.b32.cont [11/16] 0.0, 128
    %878 = vxpose.xlu0.b32.cont [12/16] 0.0, 128
    %879 = vxpose.xlu0.b32.cont [13/16] 0.0, 128
    %880 = vxpose.xlu0.b32.cont [14/16] 0.0, 128
    %881 = vxpose.xlu0.b32.cont [15/16] 0.0, 128
    %882 = vxpose.xlu0.b32.end [16/16] 0.0, 128
    %v883 = vpop.trf.xlu0
    %v884 = vpop.trf.xlu0
    %v885 = vpop.trf.xlu0
    %v886 = vpop.trf.xlu0
    %v887 = vpop.trf.xlu0
    %v888 = vpop.trf.xlu0
    %v889 = vpop.trf.xlu0
    %v890 = vpop.trf.xlu0
    %v891 = vpop.trf.xlu0
    %v892 = vpop.trf.xlu0
    %v893 = vpop.trf.xlu0
    %v894 = vpop.trf.xlu0
    %v895 = vpop.trf.xlu0
    %v896 = vpop.trf.xlu0
    %v897 = vpop.trf.xlu0
    %v898 = vpop.trf.xlu0
    %v899 = vadd.f32 %v823, %v883
    %v900 = vadd.f32 %v825, %v884
    %v901 = vadd.f32 %v827, %v885
    %v902 = vadd.f32 %v829, %v886
    %v903 = vadd.f32 %v831, %v887
    %v904 = vadd.f32 %v833, %v888
    %v905 = vadd.f32 %v835, %v889
    %v906 = vadd.f32 %v837, %v890
    %vm907 = vcmp.ge.f32.partialorder %v899, 0.0
    %vm908 = vcmp.ge.f32.partialorder %v900, 0.0
    %vm909 = vcmp.ge.f32.partialorder %v901, 0.0
    %vm910 = vcmp.ge.f32.partialorder %v902, 0.0
    %vm911 = vcmp.ge.f32.partialorder %v903, 0.0
    %vm912 = vcmp.ge.f32.partialorder %v904, 0.0
    %vm913 = vcmp.ge.f32.partialorder %v905, 0.0
    %vm914 = vcmp.ge.f32.partialorder %v906, 0.0
    %v915 = vmul.f32 %v899, 0.2
    %v916 = vmul.f32 %v900, 0.2
    %v917 = vmul.f32 %v901, 0.2
    %v918 = vmul.f32 %v902, 0.2
    %v919 = vmul.f32 %v903, 0.2
    %v920 = vmul.f32 %v904, 0.2
    %v921 = vmul.f32 %v905, 0.2
    %v922 = vmul.f32 %v906, 0.2
    %v923 = vsel %vm907, %v899, %v915
    %v924 = vsel %vm908, %v900, %v916
    %v925 = vsel %vm909, %v901, %v917
    %v926 = vsel %vm910, %v902, %v918
    %v927 = vsel %vm911, %v903, %v919
    %v928 = vsel %vm912, %v904, %v920
    %v929 = vsel %vm913, %v905, %v921
    %v930 = vsel %vm914, %v906, %v922
    %v931 = vadd.f32 %v923, %v87
    %v932 = vadd.f32 %v924, %v88
    %v933 = vadd.f32 %v925, %v89
    %v934 = vadd.f32 %v926, %v90
    %v935 = vadd.f32 %v927, %v91
    %v936 = vadd.f32 %v928, %v92
    %v937 = vadd.f32 %v929, %v93
    %v938 = vadd.f32 %v930, %v94
    %v939 = vsel %vm453, %v931, -inf
    %940 = vmax.xlane.f32.xlu0 %v939
    %v941 = vpop.xlane.xlu0 %940
    %v942 = vsel %vm453, %v932, -inf
    %943 = vmax.xlane.f32.xlu0 %v942
    %v944 = vpop.xlane.xlu0 %943
    %v945 = vsel %vm453, %v933, -inf
    %946 = vmax.xlane.f32.xlu0 %v945
    %v947 = vpop.xlane.xlu0 %946
    %v948 = vsel %vm453, %v934, -inf
    %949 = vmax.xlane.f32.xlu0 %v948
    %v950 = vpop.xlane.xlu0 %949
    %v951 = vsel %vm453, %v935, -inf
    %952 = vmax.xlane.f32.xlu0 %v951
    %v953 = vpop.xlane.xlu0 %952
    %v954 = vsel %vm453, %v936, -inf
    %955 = vmax.xlane.f32.xlu0 %v954
    %v956 = vpop.xlane.xlu0 %955
    %v957 = vsel %vm453, %v937, -inf
    %958 = vmax.xlane.f32.xlu0 %v957
    %v959 = vpop.xlane.xlu0 %958
    %v960 = vsel %vm453, %v938, -inf
    %961 = vmax.xlane.f32.xlu0 %v960
    %v962 = vpop.xlane.xlu0 %961
    %v963 = vsub.f32 %v931, %v941
    %v964 = vsub.f32 %v932, %v944
    %v965 = vsub.f32 %v933, %v947
    %v966 = vsub.f32 %v934, %v950
    %v967 = vsub.f32 %v935, %v953
    %v968 = vsub.f32 %v936, %v956
    %v969 = vsub.f32 %v937, %v959
    %v970 = vsub.f32 %v938, %v962
    %v971 = vmul.f32 %v963, 1.442695
    %v972 = vpow.pop %v971
    %v973 = vmul.f32 %v964, 1.442695
    %v974 = vpow.pop %v973
    %v975 = vmul.f32 %v965, 1.442695
    %v976 = vpow.pop %v975
    %v977 = vmul.f32 %v966, 1.442695
    %v978 = vpow.pop %v977
    %v979 = vmul.f32 %v967, 1.442695
    %v980 = vpow.pop %v979
    %v981 = vmul.f32 %v968, 1.442695
    %v982 = vpow.pop %v981
    %v983 = vmul.f32 %v969, 1.442695
    %v984 = vpow.pop %v983
    %v985 = vmul.f32 %v970, 1.442695
    %v986 = vpow.pop %v985
    %v987 = vsel %vm453, %v972, 0.0
    %988 = vadd.xlane.f32.xlu0 %v987
    %v989 = vpop.xlane.xlu0 %988
    %v990 = vsel %vm453, %v974, 0.0
    %991 = vadd.xlane.f32.xlu0 %v990
    %v992 = vpop.xlane.xlu0 %991
    %v993 = vsel %vm453, %v976, 0.0
    %994 = vadd.xlane.f32.xlu0 %v993
    %v995 = vpop.xlane.xlu0 %994
    %v996 = vsel %vm453, %v978, 0.0
    %997 = vadd.xlane.f32.xlu0 %v996
    %v998 = vpop.xlane.xlu0 %997
    %v999 = vsel %vm453, %v980, 0.0
    %1000 = vadd.xlane.f32.xlu0 %v999
    %v1001 = vpop.xlane.xlu0 %1000
    %v1002 = vsel %vm453, %v982, 0.0
    %1003 = vadd.xlane.f32.xlu0 %v1002
    %v1004 = vpop.xlane.xlu0 %1003
    %v1005 = vsel %vm453, %v984, 0.0
    %1006 = vadd.xlane.f32.xlu0 %v1005
    %v1007 = vpop.xlane.xlu0 %1006
    %v1008 = vsel %vm453, %v986, 0.0
    %1009 = vadd.xlane.f32.xlu0 %v1008
    %v1010 = vpop.xlane.xlu0 %1009
    %v1011 = vrcp.pop %v989
    %v1012 = vrcp.pop %v992
    %v1013 = vrcp.pop %v995
    %v1014 = vrcp.pop %v998
    %v1015 = vrcp.pop %v1001
    %v1016 = vrcp.pop %v1004
    %v1017 = vrcp.pop %v1007
    %v1018 = vrcp.pop %v1010
    %v1019 = vmul.f32 %v972, %v1011
    %v1020 = vmul.f32 %v974, %v1012
    %v1021 = vmul.f32 %v976, %v1013
    %v1022 = vmul.f32 %v978, %v1014
    %v1023 = vmul.f32 %v980, %v1015
    %v1024 = vmul.f32 %v982, %v1016
    %v1025 = vmul.f32 %v984, %v1017
    %v1026 = vmul.f32 %v986, %v1018
    %v1027 = vpack.c.bf16 %v1020, %v1019
    %v1028 = vpack.c.bf16 %v1022, %v1021
    %v1029 = vpack.c.bf16 %v1024, %v1023
    %v1030 = vpack.c.bf16 %v1026, %v1025
    %1031 = vst.msk [vmem:[#allocation2 + $0x8] sm:$0xff] %vm453, %v1027
    %1032 = vst.msk [vmem:[#allocation2 + $0x18] sm:$0xff] %vm453, %v1028
    %1033 = vst.msk [vmem:[#allocation2 + $0x28] sm:$0xff] %vm453, %v1029
    %1034 = vst.msk [vmem:[#allocation2 + $0x38] sm:$0xff] %vm453, %v1030
    %v1035 = vpack.c.bf16 %v289, %v285
    %v1036 = vpack.c.bf16 %v299, %v295
    %v1037 = vpack.c.bf16 %v309, %v305
    %v1038 = vpack.c.bf16 %v319, %v315
    %1039 = vst [vmem:[#allocation3 + $0x40] sm:$0xff] %v1035
    %1040 = vst [vmem:[#allocation3 + $0x48] sm:$0xff] %v1036
    %1041 = vst [vmem:[#allocation3 + $0x50] sm:$0xff] %v1037
    %1042 = vst [vmem:[#allocation3 + $0x58] sm:$0xff] %v1038
    %v1043 = vld [vmem:[%s4 + $0x3] sm:$0x1]
    %v1044 = vlaneseq
    %v1045 = vshrl.u32 %v1044, 7
    %v1046 = vsub.s32 0, %v1045
    %v1047 = vrot.slane %v1043, %v1046
    %v1048 = vmul.f32 %v287, %v1047
    %v1049 = vmul.f32 %v291, %v1047
    %v1050 = vmul.f32 %v297, %v1047
    %v1051 = vmul.f32 %v301, %v1047
    %v1052 = vmul.f32 %v307, %v1047
    %v1053 = vmul.f32 %v311, %v1047
    %v1054 = vmul.f32 %v317, %v1047
    %v1055 = vmul.f32 %v321, %v1047
    %1056 = vadd.xlane.f32.xlu0 %v1048
    %v1057 = vpop.xlane.xlu0 %1056
    %1058 = vadd.xlane.f32.xlu0 %v1049
    %v1059 = vpop.xlane.xlu0 %1058
    %1060 = vadd.xlane.f32.xlu0 %v1050
    %v1061 = vpop.xlane.xlu0 %1060
    %1062 = vadd.xlane.f32.xlu0 %v1051
    %v1063 = vpop.xlane.xlu0 %1062
    %1064 = vadd.xlane.f32.xlu0 %v1052
    %v1065 = vpop.xlane.xlu0 %1064
    %1066 = vadd.xlane.f32.xlu0 %v1053
    %v1067 = vpop.xlane.xlu0 %1066
    %1068 = vadd.xlane.f32.xlu0 %v1054
    %v1069 = vpop.xlane.xlu0 %1068
    %1070 = vadd.xlane.f32.xlu0 %v1055
    %v1071 = vpop.xlane.xlu0 %1070
    %v1072 = vld [vmem:[%s3 + $0x3] sm:$0x1]
    %v1073 = vlaneseq
    %v1074 = vshrl.u32 %v1073, 7
    %v1075 = vsub.s32 0, %v1074
    %v1076 = vrot.slane %v1072, %v1075
    %v1077 = vmul.f32 %v287, %v1076
    %v1078 = vmul.f32 %v291, %v1076
    %v1079 = vmul.f32 %v297, %v1076
    %v1080 = vmul.f32 %v301, %v1076
    %v1081 = vmul.f32 %v307, %v1076
    %v1082 = vmul.f32 %v311, %v1076
    %v1083 = vmul.f32 %v317, %v1076
    %v1084 = vmul.f32 %v321, %v1076
    %1085 = vadd.xlane.f32.xlu0 %v1077
    %v1086 = vpop.xlane.xlu0 %1085
    %1087 = vadd.xlane.f32.xlu0 %v1078
    %v1088 = vpop.xlane.xlu0 %1087
    %1089 = vadd.xlane.f32.xlu0 %v1079
    %v1090 = vpop.xlane.xlu0 %1089
    %1091 = vadd.xlane.f32.xlu0 %v1080
    %v1092 = vpop.xlane.xlu0 %1091
    %1093 = vadd.xlane.f32.xlu0 %v1081
    %v1094 = vpop.xlane.xlu0 %1093
    %1095 = vadd.xlane.f32.xlu0 %v1082
    %v1096 = vpop.xlane.xlu0 %1095
    %1097 = vadd.xlane.f32.xlu0 %v1083
    %v1098 = vpop.xlane.xlu0 %1097
    %1099 = vadd.xlane.f32.xlu0 %v1084
    %v1100 = vpop.xlane.xlu0 %1099
    %1101 = vxpose.xlu0.b32.start [1/16] %v1086, 128
    %1102 = vxpose.xlu0.b32.cont [2/16] %v1088, 128
    %1103 = vxpose.xlu0.b32.cont [3/16] %v1090, 128
    %1104 = vxpose.xlu0.b32.cont [4/16] %v1092, 128
    %1105 = vxpose.xlu0.b32.cont [5/16] %v1094, 128
    %1106 = vxpose.xlu0.b32.cont [6/16] %v1096, 128
    %1107 = vxpose.xlu0.b32.cont [7/16] %v1098, 128
    %1108 = vxpose.xlu0.b32.cont [8/16] %v1100, 128
    %1109 = vxpose.xlu0.b32.cont [9/16] 0.0, 128
    %1110 = vxpose.xlu0.b32.cont [10/16] 0.0, 128
    %1111 = vxpose.xlu0.b32.cont [11/16] 0.0, 128
    %1112 = vxpose.xlu0.b32.cont [12/16] 0.0, 128
    %1113 = vxpose.xlu0.b32.cont [13/16] 0.0, 128
    %1114 = vxpose.xlu0.b32.cont [14/16] 0.0, 128
    %1115 = vxpose.xlu0.b32.cont [15/16] 0.0, 128
    %1116 = vxpose.xlu0.b32.end [16/16] 0.0, 128
    %v1117 = vpop.trf.xlu0
    %v1118 = vpop.trf.xlu0
    %v1119 = vpop.trf.xlu0
    %v1120 = vpop.trf.xlu0
    %v1121 = vpop.trf.xlu0
    %v1122 = vpop.trf.xlu0
    %v1123 = vpop.trf.xlu0
    %v1124 = vpop.trf.xlu0
    %v1125 = vpop.trf.xlu0
    %v1126 = vpop.trf.xlu0
    %v1127 = vpop.trf.xlu0
    %v1128 = vpop.trf.xlu0
    %v1129 = vpop.trf.xlu0
    %v1130 = vpop.trf.xlu0
    %v1131 = vpop.trf.xlu0
    %v1132 = vpop.trf.xlu0
    %v1133 = vadd.f32 %v1057, %v1117
    %v1134 = vadd.f32 %v1059, %v1118
    %v1135 = vadd.f32 %v1061, %v1119
    %v1136 = vadd.f32 %v1063, %v1120
    %v1137 = vadd.f32 %v1065, %v1121
    %v1138 = vadd.f32 %v1067, %v1122
    %v1139 = vadd.f32 %v1069, %v1123
    %v1140 = vadd.f32 %v1071, %v1124
    %vm1141 = vcmp.ge.f32.partialorder %v1133, 0.0
    %vm1142 = vcmp.ge.f32.partialorder %v1134, 0.0
    %vm1143 = vcmp.ge.f32.partialorder %v1135, 0.0
    %vm1144 = vcmp.ge.f32.partialorder %v1136, 0.0
    %vm1145 = vcmp.ge.f32.partialorder %v1137, 0.0
    %vm1146 = vcmp.ge.f32.partialorder %v1138, 0.0
    %vm1147 = vcmp.ge.f32.partialorder %v1139, 0.0
    %vm1148 = vcmp.ge.f32.partialorder %v1140, 0.0
    %v1149 = vmul.f32 %v1133, 0.2
    %v1150 = vmul.f32 %v1134, 0.2
    %v1151 = vmul.f32 %v1135, 0.2
    %v1152 = vmul.f32 %v1136, 0.2
    %v1153 = vmul.f32 %v1137, 0.2
    %v1154 = vmul.f32 %v1138, 0.2
    %v1155 = vmul.f32 %v1139, 0.2
    %v1156 = vmul.f32 %v1140, 0.2
    %v1157 = vsel %vm1141, %v1133, %v1149
    %v1158 = vsel %vm1142, %v1134, %v1150
    %v1159 = vsel %vm1143, %v1135, %v1151
    %v1160 = vsel %vm1144, %v1136, %v1152
    %v1161 = vsel %vm1145, %v1137, %v1153
    %v1162 = vsel %vm1146, %v1138, %v1154
    %v1163 = vsel %vm1147, %v1139, %v1155
    %v1164 = vsel %vm1148, %v1140, %v1156
    %v1165 = vadd.f32 %v1157, %v87
    %v1166 = vadd.f32 %v1158, %v88
    %v1167 = vadd.f32 %v1159, %v89
    %v1168 = vadd.f32 %v1160, %v90
    %v1169 = vadd.f32 %v1161, %v91
    %v1170 = vadd.f32 %v1162, %v92
    %v1171 = vadd.f32 %v1163, %v93
    %v1172 = vadd.f32 %v1164, %v94
    %v1173 = vsel %vm453, %v1165, -inf
    %1174 = vmax.xlane.f32.xlu0 %v1173
    %v1175 = vpop.xlane.xlu0 %1174
    %v1176 = vsel %vm453, %v1166, -inf
    %1177 = vmax.xlane.f32.xlu0 %v1176
    %v1178 = vpop.xlane.xlu0 %1177
    %v1179 = vsel %vm453, %v1167, -inf
    %1180 = vmax.xlane.f32.xlu0 %v1179
    %v1181 = vpop.xlane.xlu0 %1180
    %v1182 = vsel %vm453, %v1168, -inf
    %1183 = vmax.xlane.f32.xlu0 %v1182
    %v1184 = vpop.xlane.xlu0 %1183
    %v1185 = vsel %vm453, %v1169, -inf
    %1186 = vmax.xlane.f32.xlu0 %v1185
    %v1187 = vpop.xlane.xlu0 %1186
    %v1188 = vsel %vm453, %v1170, -inf
    %1189 = vmax.xlane.f32.xlu0 %v1188
    %v1190 = vpop.xlane.xlu0 %1189
    %v1191 = vsel %vm453, %v1171, -inf
    %1192 = vmax.xlane.f32.xlu0 %v1191
    %v1193 = vpop.xlane.xlu0 %1192
    %v1194 = vsel %vm453, %v1172, -inf
    %1195 = vmax.xlane.f32.xlu0 %v1194
    %v1196 = vpop.xlane.xlu0 %1195
    %v1197 = vsub.f32 %v1165, %v1175
    %v1198 = vsub.f32 %v1166, %v1178
    %v1199 = vsub.f32 %v1167, %v1181
    %v1200 = vsub.f32 %v1168, %v1184
    %v1201 = vsub.f32 %v1169, %v1187
    %v1202 = vsub.f32 %v1170, %v1190
    %v1203 = vsub.f32 %v1171, %v1193
    %v1204 = vsub.f32 %v1172, %v1196
    %v1205 = vmul.f32 %v1197, 1.442695
    %v1206 = vpow.pop %v1205
    %v1207 = vmul.f32 %v1198, 1.442695
    %v1208 = vpow.pop %v1207
    %v1209 = vmul.f32 %v1199, 1.442695
    %v1210 = vpow.pop %v1209
    %v1211 = vmul.f32 %v1200, 1.442695
    %v1212 = vpow.pop %v1211
    %v1213 = vmul.f32 %v1201, 1.442695
    %v1214 = vpow.pop %v1213
    %v1215 = vmul.f32 %v1202, 1.442695
    %v1216 = vpow.pop %v1215
    %v1217 = vmul.f32 %v1203, 1.442695
    %v1218 = vpow.pop %v1217
    %v1219 = vmul.f32 %v1204, 1.442695
    %v1220 = vpow.pop %v1219
    %v1221 = vsel %vm453, %v1206, 0.0
    %1222 = vadd.xlane.f32.xlu0 %v1221
    %v1223 = vpop.xlane.xlu0 %1222
    %v1224 = vsel %vm453, %v1208, 0.0
    %1225 = vadd.xlane.f32.xlu0 %v1224
    %v1226 = vpop.xlane.xlu0 %1225
    %v1227 = vsel %vm453, %v1210, 0.0
    %1228 = vadd.xlane.f32.xlu0 %v1227
    %v1229 = vpop.xlane.xlu0 %1228
    %v1230 = vsel %vm453, %v1212, 0.0
    %1231 = vadd.xlane.f32.xlu0 %v1230
    %v1232 = vpop.xlane.xlu0 %1231
    %v1233 = vsel %vm453, %v1214, 0.0
    %1234 = vadd.xlane.f32.xlu0 %v1233
    %v1235 = vpop.xlane.xlu0 %1234
    %v1236 = vsel %vm453, %v1216, 0.0
    %1237 = vadd.xlane.f32.xlu0 %v1236
    %v1238 = vpop.xlane.xlu0 %1237
    %v1239 = vsel %vm453, %v1218, 0.0
    %1240 = vadd.xlane.f32.xlu0 %v1239
    %v1241 = vpop.xlane.xlu0 %1240
    %v1242 = vsel %vm453, %v1220, 0.0
    %1243 = vadd.xlane.f32.xlu0 %v1242
    %v1244 = vpop.xlane.xlu0 %1243
    %v1245 = vrcp.pop %v1223
    %v1246 = vrcp.pop %v1226
    %v1247 = vrcp.pop %v1229
    %v1248 = vrcp.pop %v1232
    %v1249 = vrcp.pop %v1235
    %v1250 = vrcp.pop %v1238
    %v1251 = vrcp.pop %v1241
    %v1252 = vrcp.pop %v1244
    %v1253 = vmul.f32 %v1206, %v1245
    %v1254 = vmul.f32 %v1208, %v1246
    %v1255 = vmul.f32 %v1210, %v1247
    %v1256 = vmul.f32 %v1212, %v1248
    %v1257 = vmul.f32 %v1214, %v1249
    %v1258 = vmul.f32 %v1216, %v1250
    %v1259 = vmul.f32 %v1218, %v1251
    %v1260 = vmul.f32 %v1220, %v1252
    %v1261 = vpack.c.bf16 %v1254, %v1253
    %v1262 = vpack.c.bf16 %v1256, %v1255
    %v1263 = vpack.c.bf16 %v1258, %v1257
    %v1264 = vpack.c.bf16 %v1260, %v1259
    %1269 = vrot.lane.b32.xlu0 %v1261, 64
    %v1270 = vpop.permute.xlu0 %1269
    %1271 = vrot.lane.b32.xlu0 %v1262, 64
    %v1272 = vpop.permute.xlu0 %1271
    %1273 = vrot.lane.b32.xlu0 %v1263, 64
    %v1274 = vpop.permute.xlu0 %1273
    %1275 = vrot.lane.b32.xlu0 %v1264, 64
    %v1276 = vpop.permute.xlu0 %1275
    %1281 = vst.msk [vmem:[#allocation2 + $0x8] sm:$0xff] %vm796, %v1270
    %1282 = vst.msk [vmem:[#allocation2 + $0x18] sm:$0xff] %vm796, %v1272
    %1283 = vst.msk [vmem:[#allocation2 + $0x28] sm:$0xff] %vm796, %v1274
    %1284 = vst.msk [vmem:[#allocation2 + $0x38] sm:$0xff] %vm796, %v1276
    %v1285 = vpack.c.bf16 %v291, %v287
    %v1286 = vpack.c.bf16 %v301, %v297
    %v1287 = vpack.c.bf16 %v311, %v307
    %v1288 = vpack.c.bf16 %v321, %v317
    %1289 = vst [vmem:[#allocation3 + $0x60] sm:$0xff] %v1285
    %1290 = vst [vmem:[#allocation3 + $0x68] sm:$0xff] %v1286
    %1291 = vst [vmem:[#allocation3 + $0x70] sm:$0xff] %v1287
    %1292 = vst [vmem:[#allocation3 + $0x78] sm:$0xff] %v1288
    %v1293 = vld [vmem:[#allocation2] sm:$0xff]
    %v1294 = vld [vmem:[#allocation2 + $0x8] sm:$0xff]
    %v1295 = vld [vmem:[#allocation2 + $0x10] sm:$0xff]
    %v1296 = vld [vmem:[#allocation2 + $0x18] sm:$0xff]
    %v1297 = vld [vmem:[#allocation2 + $0x20] sm:$0xff]
    %v1298 = vld [vmem:[#allocation2 + $0x28] sm:$0xff]
    %v1299 = vld [vmem:[#allocation2 + $0x30] sm:$0xff]
    %v1300 = vld [vmem:[#allocation2 + $0x38] sm:$0xff]
    %v1301 = vld [vmem:[#allocation3] sm:$0xff]
    %v1302 = vld [vmem:[#allocation3 + $0x8] sm:$0xff]
    %v1303 = vld [vmem:[#allocation3 + $0x10] sm:$0xff]
    %v1304 = vld [vmem:[#allocation3 + $0x18] sm:$0xff]
    %v1305 = vld [vmem:[#allocation3 + $0x20] sm:$0xff]
    %v1306 = vld [vmem:[#allocation3 + $0x28] sm:$0xff]
    %v1307 = vld [vmem:[#allocation3 + $0x30] sm:$0xff]
    %v1308 = vld [vmem:[#allocation3 + $0x38] sm:$0xff]
    %v1309 = vld [vmem:[#allocation3 + $0x40] sm:$0xff]
    %v1310 = vld [vmem:[#allocation3 + $0x48] sm:$0xff]
    %v1311 = vld [vmem:[#allocation3 + $0x50] sm:$0xff]
    %v1312 = vld [vmem:[#allocation3 + $0x58] sm:$0xff]
    %v1313 = vld [vmem:[#allocation3 + $0x60] sm:$0xff]
    %v1314 = vld [vmem:[#allocation3 + $0x68] sm:$0xff]
    %v1315 = vld [vmem:[#allocation3 + $0x70] sm:$0xff]
    %v1316 = vld [vmem:[#allocation3 + $0x78] sm:$0xff]
    %1317 = vmatprep.subr.bf16.mxu0 0
    %1318 = vmatpush1.bf16.msra.mxu0 %v1301
    %1319 = vmatprep.subr.bf16.mxu0 0
    %1320 = vmatpush1.bf16.msra.mxu0 %v1302
    %1321 = vmatprep.subr.bf16.mxu0 0
    %1322 = vmatpush1.bf16.msra.mxu0 %v1303
    %1323 = vmatprep.subr.bf16.mxu0 0
    %1324 = vmatpush1.bf16.msra.mxu0 %v1304
    %1325 = vmatprep.subr.bf16.mxu0 0
    %1326 = vmatpush1.bf16.msra.mxu0 %v1305
    %1327 = vmatprep.subr.bf16.mxu0 0
    %1328 = vmatpush1.bf16.msra.mxu0 %v1306
    %1329 = vmatprep.subr.bf16.mxu0 0
    %1330 = vmatpush1.bf16.msra.mxu0 %v1307
    %1331 = vmatprep.subr.bf16.mxu0 0
    %1332 = vmatpush1.bf16.msra.mxu0 %v1308
    %1333 = vmatprep.subr.bf16.mxu0 0
    %1334 = vmatpush1.bf16.msra.mxu0 %v1309
    %1335 = vmatprep.subr.bf16.mxu0 0
    %1336 = vmatpush1.bf16.msra.mxu0 %v1310
    %1337 = vmatprep.subr.bf16.mxu0 0
    %1338 = vmatpush1.bf16.msra.mxu0 %v1311
    %1339 = vmatprep.subr.bf16.mxu0 0
    %1340 = vmatpush1.bf16.msra.mxu0 %v1312
    %1341 = vmatprep.subr.bf16.mxu0 0
    %1342 = vmatpush1.bf16.msra.mxu0 %v1313
    %1343 = vmatprep.subr.bf16.mxu0 0
    %1344 = vmatpush1.bf16.msra.mxu0 %v1314
    %1345 = vmatprep.subr.bf16.mxu0 0
    %1346 = vmatpush1.bf16.msra.mxu0 %v1315
    %1347 = vmatprep.subr.bf16.mxu0 0
    %1348 = vmatpush1.bf16.msra.mxu0 %v1316
    %1349 = vmatprep.mubr.bf16.mxu0 %v1294
    %1350 = vmatmul.mubr.bf16.gmra.mrb[0].mxu0 %v1293
    %v1351 = vpop.f32.mrb[0].mxu0
    %v1352 = vadd.f32 0.0, %v1351
    %v1353 = vpop.f32.mrb[0].mxu0
    %v1354 = vpop.f32.mrb[0].mxu0
    %v1355 = vadd.f32 0.0, %v1354
    %v1356 = vpop.f32.mrb[0].mxu0
    %1357 = vmatprep.mubr.bf16.mxu0 %v1296
    %1358 = vmatmul.mubr.bf16.gmra.mrb[0].mxu0 %v1295
    %v1359 = vpop.f32.mrb[0].mxu0
    %v1360 = vadd.f32 0.0, %v1359
    %v1361 = vpop.f32.mrb[0].mxu0
    %v1362 = vpop.f32.mrb[0].mxu0
    %v1363 = vadd.f32 0.0, %v1362
    %v1364 = vpop.f32.mrb[0].mxu0
    %1365 = vmatprep.mubr.bf16.mxu0 %v1298
    %1366 = vmatmul.mubr.bf16.gmra.mrb[0].mxu0 %v1297
    %v1367 = vpop.f32.mrb[0].mxu0
    %v1368 = vadd.f32 0.0, %v1367
    %v1369 = vpop.f32.mrb[0].mxu0
    %v1370 = vpop.f32.mrb[0].mxu0
    %v1371 = vadd.f32 0.0, %v1370
    %v1372 = vpop.f32.mrb[0].mxu0
    %1373 = vmatprep.mubr.bf16.mxu0 %v1300
    %1374 = vmatmul.mubr.bf16.gmra.mrb[0].mxu0 %v1299
    %v1375 = vpop.f32.mrb[0].mxu0
    %v1376 = vadd.f32 0.0, %v1375
    %v1377 = vpop.f32.mrb[0].mxu0
    %v1378 = vpop.f32.mrb[0].mxu0
    %v1379 = vadd.f32 0.0, %v1378
    %v1380 = vpop.f32.mrb[0].mxu0
    %1381 = vdwg.mxu0
    %v1382 = vmul.f32 %v1352, 0.25
    %v1383 = vmul.f32 %v1355, 0.25
    %v1384 = vmul.f32 %v1360, 0.25
    %v1385 = vmul.f32 %v1363, 0.25
    %v1386 = vmul.f32 %v1368, 0.25
    %v1387 = vmul.f32 %v1371, 0.25
    %v1388 = vmul.f32 %v1376, 0.25
    %v1389 = vmul.f32 %v1379, 0.25
    %v1390 = vld [vmem:[%s5] sm:$0x1]
    %v1392 = vlaneseq
    %v1393 = vshrl.u32 %v1392, 7
    %v1394 = vsub.s32 0, %v1393
    %v1395 = vrot.slane %v1390, %v1394
    %v1397 = vadd.f32 %v1382, %v1395
    %v1398 = vadd.f32 %v1383, %v1395
    %v1399 = vadd.f32 %v1384, %v1395
    %v1400 = vadd.f32 %v1385, %v1395
    %v1401 = vadd.f32 %v1386, %v1395
    %v1402 = vadd.f32 %v1387, %v1395
    %v1403 = vadd.f32 %v1388, %v1395
    %v1404 = vadd.f32 %v1389, %v1395
    %v1405 = vmax.f32 %v1397, 0.0
    %v1406 = vmax.f32 %v1398, 0.0
    %v1407 = vmax.f32 %v1399, 0.0
    %v1408 = vmax.f32 %v1400, 0.0
    %v1409 = vmax.f32 %v1401, 0.0
    %v1410 = vmax.f32 %v1402, 0.0
    %v1411 = vmax.f32 %v1403, 0.0
    %v1412 = vmax.f32 %v1404, 0.0
    %v1413 = vpack.c.bf16 %v1406, %v1405
    %v1414 = vpack.c.bf16 %v1408, %v1407
    %v1415 = vpack.c.bf16 %v1410, %v1409
    %v1416 = vpack.c.bf16 %v1412, %v1411
    %v1417 = vld [vmem:[#allocation8] sm:$0xff]
    %v1418 = vld [vmem:[#allocation8 + $0x8] sm:$0xff]
    %v1419 = vld [vmem:[#allocation8 + $0x10] sm:$0xff]
    %v1420 = vld [vmem:[#allocation8 + $0x18] sm:$0xff]
    %v1421 = vld [vmem:[#allocation8 + $0x20] sm:$0xff]
    %v1422 = vld [vmem:[#allocation8 + $0x28] sm:$0xff]
    %v1423 = vld [vmem:[#allocation8 + $0x30] sm:$0xff]
    %v1424 = vld [vmem:[#allocation8 + $0x38] sm:$0xff]
    %v1425 = vld [vmem:[#allocation8 + $0x40] sm:$0xff]
    %v1426 = vld [vmem:[#allocation8 + $0x48] sm:$0xff]
    %v1427 = vld [vmem:[#allocation8 + $0x50] sm:$0xff]
    %v1428 = vld [vmem:[#allocation8 + $0x58] sm:$0xff]
    %v1429 = vld [vmem:[#allocation8 + $0x60] sm:$0xff]
    %v1430 = vld [vmem:[#allocation8 + $0x68] sm:$0xff]
    %v1431 = vld [vmem:[#allocation8 + $0x70] sm:$0xff]
    %v1432 = vld [vmem:[#allocation8 + $0x78] sm:$0xff]
    %v1433 = vld [vmem:[#allocation8 + $0x80] sm:$0xff]
    %v1434 = vld [vmem:[#allocation8 + $0x88] sm:$0xff]
    %v1435 = vld [vmem:[#allocation8 + $0x90] sm:$0xff]
    %v1436 = vld [vmem:[#allocation8 + $0x98] sm:$0xff]
    %v1437 = vld [vmem:[#allocation8 + $0xa0] sm:$0xff]
    %v1438 = vld [vmem:[#allocation8 + $0xa8] sm:$0xff]
    %v1439 = vld [vmem:[#allocation8 + $0xb0] sm:$0xff]
    %v1440 = vld [vmem:[#allocation8 + $0xb8] sm:$0xff]
    %v1441 = vld [vmem:[#allocation8 + $0xc0] sm:$0xff]
    %v1442 = vld [vmem:[#allocation8 + $0xc8] sm:$0xff]
    %v1443 = vld [vmem:[#allocation8 + $0xd0] sm:$0xff]
    %v1444 = vld [vmem:[#allocation8 + $0xd8] sm:$0xff]
    %v1445 = vld [vmem:[#allocation8 + $0xe0] sm:$0xff]
    %v1446 = vld [vmem:[#allocation8 + $0xe8] sm:$0xff]
    %v1447 = vld [vmem:[#allocation8 + $0xf0] sm:$0xff]
    %v1448 = vld [vmem:[#allocation8 + $0xf8] sm:$0xff]
    %v1481 = vunpack.c.l.b16 %v1417
    %v1482 = vunpack.c.h.b16 %v1417
    %v1483 = vunpack.c.l.b16 %v1418
    %v1484 = vunpack.c.h.b16 %v1418
    %v1485 = vunpack.c.l.b16 %v1419
    %v1486 = vunpack.c.h.b16 %v1419
    %v1487 = vunpack.c.l.b16 %v1420
    %v1488 = vunpack.c.h.b16 %v1420
    %v1489 = vunpack.c.l.b16 %v1421
    %v1490 = vunpack.c.h.b16 %v1421
    %v1491 = vunpack.c.l.b16 %v1422
    %v1492 = vunpack.c.h.b16 %v1422
    %v1493 = vunpack.c.l.b16 %v1423
    %v1494 = vunpack.c.h.b16 %v1423
    %v1495 = vunpack.c.l.b16 %v1424
    %v1496 = vunpack.c.h.b16 %v1424
    %v1497 = vunpack.c.l.b16 %v1425
    %v1498 = vunpack.c.h.b16 %v1425
    %v1499 = vunpack.c.l.b16 %v1426
    %v1500 = vunpack.c.h.b16 %v1426
    %v1501 = vunpack.c.l.b16 %v1427
    %v1502 = vunpack.c.h.b16 %v1427
    %v1503 = vunpack.c.l.b16 %v1428
    %v1504 = vunpack.c.h.b16 %v1428
    %v1505 = vunpack.c.l.b16 %v1429
    %v1506 = vunpack.c.h.b16 %v1429
    %v1507 = vunpack.c.l.b16 %v1430
    %v1508 = vunpack.c.h.b16 %v1430
    %v1509 = vunpack.c.l.b16 %v1431
    %v1510 = vunpack.c.h.b16 %v1431
    %v1511 = vunpack.c.l.b16 %v1432
    %v1512 = vunpack.c.h.b16 %v1432
    %v1513 = vunpack.c.l.b16 %v1433
    %v1514 = vunpack.c.h.b16 %v1433
    %v1515 = vunpack.c.l.b16 %v1434
    %v1516 = vunpack.c.h.b16 %v1434
    %v1517 = vunpack.c.l.b16 %v1435
    %v1518 = vunpack.c.h.b16 %v1435
    %v1519 = vunpack.c.l.b16 %v1436
    %v1520 = vunpack.c.h.b16 %v1436
    %v1521 = vunpack.c.l.b16 %v1437
    %v1522 = vunpack.c.h.b16 %v1437
    %v1523 = vunpack.c.l.b16 %v1438
    %v1524 = vunpack.c.h.b16 %v1438
    %v1525 = vunpack.c.l.b16 %v1439
    %v1526 = vunpack.c.h.b16 %v1439
    %v1527 = vunpack.c.l.b16 %v1440
    %v1528 = vunpack.c.h.b16 %v1440
    %v1529 = vunpack.c.l.b16 %v1441
    %v1530 = vunpack.c.h.b16 %v1441
    %v1531 = vunpack.c.l.b16 %v1442
    %v1532 = vunpack.c.h.b16 %v1442
    %v1533 = vunpack.c.l.b16 %v1443
    %v1534 = vunpack.c.h.b16 %v1443
    %v1535 = vunpack.c.l.b16 %v1444
    %v1536 = vunpack.c.h.b16 %v1444
    %v1537 = vunpack.c.l.b16 %v1445
    %v1538 = vunpack.c.h.b16 %v1445
    %v1539 = vunpack.c.l.b16 %v1446
    %v1540 = vunpack.c.h.b16 %v1446
    %v1541 = vunpack.c.l.b16 %v1447
    %v1542 = vunpack.c.h.b16 %v1447
    %v1543 = vunpack.c.l.b16 %v1448
    %v1544 = vunpack.c.h.b16 %v1448
    %v1545 = vpack.c.b16 %v1485, %v1481
    %v1546 = vpack.c.b16 %v1486, %v1482
    %v1547 = vpack.c.b16 %v1487, %v1483
    %v1548 = vpack.c.b16 %v1488, %v1484
    %v1549 = vpack.c.b16 %v1493, %v1489
    %v1550 = vpack.c.b16 %v1494, %v1490
    %v1551 = vpack.c.b16 %v1495, %v1491
    %v1552 = vpack.c.b16 %v1496, %v1492
    %v1553 = vpack.c.b16 %v1501, %v1497
    %v1554 = vpack.c.b16 %v1502, %v1498
    %v1555 = vpack.c.b16 %v1503, %v1499
    %v1556 = vpack.c.b16 %v1504, %v1500
    %v1557 = vpack.c.b16 %v1509, %v1505
    %v1558 = vpack.c.b16 %v1510, %v1506
    %v1559 = vpack.c.b16 %v1511, %v1507
    %v1560 = vpack.c.b16 %v1512, %v1508
    %v1561 = vpack.c.b16 %v1517, %v1513
    %v1562 = vpack.c.b16 %v1518, %v1514
    %v1563 = vpack.c.b16 %v1519, %v1515
    %v1564 = vpack.c.b16 %v1520, %v1516
    %v1565 = vpack.c.b16 %v1525, %v1521
    %v1566 = vpack.c.b16 %v1526, %v1522
    %v1567 = vpack.c.b16 %v1527, %v1523
    %v1568 = vpack.c.b16 %v1528, %v1524
    %v1569 = vpack.c.b16 %v1533, %v1529
    %v1570 = vpack.c.b16 %v1534, %v1530
    %v1571 = vpack.c.b16 %v1535, %v1531
    %v1572 = vpack.c.b16 %v1536, %v1532
    %v1573 = vpack.c.b16 %v1541, %v1537
    %v1574 = vpack.c.b16 %v1542, %v1538
    %v1575 = vpack.c.b16 %v1543, %v1539
    %v1576 = vpack.c.b16 %v1544, %v1540
    %1609 = vmatprep.subr.bf16.mxu0 %v1546
    %1610 = vmatpush1.bf16.msra.mxu0 %v1545
    %1611 = vmatprep.subr.bf16.mxu0 %v1550
    %1612 = vmatpush1.bf16.msra.mxu0 %v1549
    %1613 = vmatprep.subr.bf16.mxu0 %v1554
    %1614 = vmatpush1.bf16.msra.mxu0 %v1553
    %1615 = vmatprep.subr.bf16.mxu0 %v1558
    %1616 = vmatpush1.bf16.msra.mxu0 %v1557
    %1617 = vmatprep.subr.bf16.mxu0 %v1562
    %1618 = vmatpush1.bf16.msra.mxu0 %v1561
    %1619 = vmatprep.subr.bf16.mxu0 %v1566
    %1620 = vmatpush1.bf16.msra.mxu0 %v1565
    %1621 = vmatprep.subr.bf16.mxu0 %v1570
    %1622 = vmatpush1.bf16.msra.mxu0 %v1569
    %1623 = vmatprep.subr.bf16.mxu0 %v1574
    %1624 = vmatpush1.bf16.msra.mxu0 %v1573
    %1625 = vmatprep.subr.bf16.mxu0 0
    %1626 = vmatpush1.bf16.msra.mxu0 0
    %1627 = vmatprep.subr.bf16.mxu0 0
    %1628 = vmatpush1.bf16.msra.mxu0 0
    %1629 = vmatprep.subr.bf16.mxu0 0
    %1630 = vmatpush1.bf16.msra.mxu0 0
    %1631 = vmatprep.subr.bf16.mxu0 0
    %1632 = vmatpush1.bf16.msra.mxu0 0
    %1633 = vmatprep.subr.bf16.mxu0 0
    %1634 = vmatpush1.bf16.msra.mxu0 0
    %1635 = vmatprep.subr.bf16.mxu0 0
    %1636 = vmatpush1.bf16.msra.mxu0 0
    %1637 = vmatprep.subr.bf16.mxu0 0
    %1638 = vmatpush1.bf16.msra.mxu0 0
    %1639 = vmatprep.subr.bf16.mxu0 0
    %1640 = vmatpush1.bf16.msra.mxu0 0
    %1641 = vmatprep.mubr.bf16.mxu0 0
    %1642 = vmatmul.mubr.bf16.gmra.mrb[0].mxu0 %v1413
    %v1643 = vpop.f32.mrb[0].mxu0
    %v1644 = vadd.f32 0.0, %v1643
    %v1645 = vpop.f32.mrb[0].mxu0
    %v1646 = vadd.f32 0.0, %v1645
    %v1647 = vpop.f32.mrb[0].mxu0
    %v1648 = vadd.f32 0.0, %v1647
    %v1649 = vpop.f32.mrb[0].mxu0
    %v1650 = vadd.f32 0.0, %v1649
    %1651 = vmatprep.mubr.bf16.mxu0 0
    %1652 = vmatmul.mubr.bf16.gmra.mrb[0].mxu0 %v1414
    %v1653 = vpop.f32.mrb[0].mxu0
    %v1654 = vadd.f32 0.0, %v1653
    %v1655 = vpop.f32.mrb[0].mxu0
    %v1656 = vadd.f32 0.0, %v1655
    %v1657 = vpop.f32.mrb[0].mxu0
    %v1658 = vadd.f32 0.0, %v1657
    %v1659 = vpop.f32.mrb[0].mxu0
    %v1660 = vadd.f32 0.0, %v1659
    %1661 = vmatprep.mubr.bf16.mxu0 0
    %1662 = vmatmul.mubr.bf16.gmra.mrb[0].mxu0 %v1415
    %v1663 = vpop.f32.mrb[0].mxu0
    %v1664 = vadd.f32 0.0, %v1663
    %v1665 = vpop.f32.mrb[0].mxu0
    %v1666 = vadd.f32 0.0, %v1665
    %v1667 = vpop.f32.mrb[0].mxu0
    %v1668 = vadd.f32 0.0, %v1667
    %v1669 = vpop.f32.mrb[0].mxu0
    %v1670 = vadd.f32 0.0, %v1669
    %1671 = vmatprep.mubr.bf16.mxu0 0
    %1672 = vmatmul.mubr.bf16.gmra.mrb[0].mxu0 %v1416
    %v1673 = vpop.f32.mrb[0].mxu0
    %v1674 = vadd.f32 0.0, %v1673
    %v1675 = vpop.f32.mrb[0].mxu0
    %v1676 = vadd.f32 0.0, %v1675
    %v1677 = vpop.f32.mrb[0].mxu0
    %v1678 = vadd.f32 0.0, %v1677
    %v1679 = vpop.f32.mrb[0].mxu0
    %v1680 = vadd.f32 0.0, %v1679
    %1681 = vdwg.mxu0
    %1682 = vmatprep.subr.bf16.mxu0 %v1548
    %1683 = vmatpush1.bf16.msra.mxu0 %v1547
    %1684 = vmatprep.subr.bf16.mxu0 %v1552
    %1685 = vmatpush1.bf16.msra.mxu0 %v1551
    %1686 = vmatprep.subr.bf16.mxu0 %v1556
    %1687 = vmatpush1.bf16.msra.mxu0 %v1555
    %1688 = vmatprep.subr.bf16.mxu0 %v1560
    %1689 = vmatpush1.bf16.msra.mxu0 %v1559
    %1690 = vmatprep.subr.bf16.mxu0 %v1564
    %1691 = vmatpush1.bf16.msra.mxu0 %v1563
    %1692 = vmatprep.subr.bf16.mxu0 %v1568
    %1693 = vmatpush1.bf16.msra.mxu0 %v1567
    %1694 = vmatprep.subr.bf16.mxu0 %v1572
    %1695 = vmatpush1.bf16.msra.mxu0 %v1571
    %1696 = vmatprep.subr.bf16.mxu0 %v1576
    %1697 = vmatpush1.bf16.msra.mxu0 %v1575
    %1698 = vmatprep.subr.bf16.mxu0 0
    %1699 = vmatpush1.bf16.msra.mxu0 0
    %1700 = vmatprep.subr.bf16.mxu0 0
    %1701 = vmatpush1.bf16.msra.mxu0 0
    %1702 = vmatprep.subr.bf16.mxu0 0
    %1703 = vmatpush1.bf16.msra.mxu0 0
    %1704 = vmatprep.subr.bf16.mxu0 0
    %1705 = vmatpush1.bf16.msra.mxu0 0
    %1706 = vmatprep.subr.bf16.mxu0 0
    %1707 = vmatpush1.bf16.msra.mxu0 0
    %1708 = vmatprep.subr.bf16.mxu0 0
    %1709 = vmatpush1.bf16.msra.mxu0 0
    %1710 = vmatprep.subr.bf16.mxu0 0
    %1711 = vmatpush1.bf16.msra.mxu0 0
    %1712 = vmatprep.subr.bf16.mxu0 0
    %1713 = vmatpush1.bf16.msra.mxu0 0
    %1714 = vmatprep.mubr.bf16.mxu0 0
    %1715 = vmatmul.mubr.bf16.gmra.mrb[0].mxu0 %v1413
    %v1716 = vpop.f32.mrb[0].mxu0
    %v1717 = vadd.f32 0.0, %v1716
    %v1718 = vpop.f32.mrb[0].mxu0
    %v1719 = vadd.f32 0.0, %v1718
    %v1720 = vpop.f32.mrb[0].mxu0
    %v1721 = vadd.f32 0.0, %v1720
    %v1722 = vpop.f32.mrb[0].mxu0
    %v1723 = vadd.f32 0.0, %v1722
    %1724 = vmatprep.mubr.bf16.mxu0 0
    %1725 = vmatmul.mubr.bf16.gmra.mrb[0].mxu0 %v1414
    %v1726 = vpop.f32.mrb[0].mxu0
    %v1727 = vadd.f32 0.0, %v1726
    %v1728 = vpop.f32.mrb[0].mxu0
    %v1729 = vadd.f32 0.0, %v1728
    %v1730 = vpop.f32.mrb[0].mxu0
    %v1731 = vadd.f32 0.0, %v1730
    %v1732 = vpop.f32.mrb[0].mxu0
    %v1733 = vadd.f32 0.0, %v1732
    %1734 = vmatprep.mubr.bf16.mxu0 0
    %1735 = vmatmul.mubr.bf16.gmra.mrb[0].mxu0 %v1415
    %v1736 = vpop.f32.mrb[0].mxu0
    %v1737 = vadd.f32 0.0, %v1736
    %v1738 = vpop.f32.mrb[0].mxu0
    %v1739 = vadd.f32 0.0, %v1738
    %v1740 = vpop.f32.mrb[0].mxu0
    %v1741 = vadd.f32 0.0, %v1740
    %v1742 = vpop.f32.mrb[0].mxu0
    %v1743 = vadd.f32 0.0, %v1742
    %1744 = vmatprep.mubr.bf16.mxu0 0
    %1745 = vmatmul.mubr.bf16.gmra.mrb[0].mxu0 %v1416
    %v1746 = vpop.f32.mrb[0].mxu0
    %v1747 = vadd.f32 0.0, %v1746
    %v1748 = vpop.f32.mrb[0].mxu0
    %v1749 = vadd.f32 0.0, %v1748
    %v1750 = vpop.f32.mrb[0].mxu0
    %v1751 = vadd.f32 0.0, %v1750
    %v1752 = vpop.f32.mrb[0].mxu0
    %v1753 = vadd.f32 0.0, %v1752
    %1754 = vdwg.mxu0
    %v1755 = vld [vmem:[%s8] sm:$0x1]
    %v1756 = vlaneseq
    %v1757 = vshrl.u32 %v1756, 7
    %v1758 = vsub.s32 0, %v1757
    %v1759 = vrot.slane %v1755, %v1758
    %v1760 = vmul.f32 %v1644, %v1759
    %v1761 = vmul.f32 %v1648, %v1759
    %v1762 = vmul.f32 %v1654, %v1759
    %v1763 = vmul.f32 %v1658, %v1759
    %v1764 = vmul.f32 %v1664, %v1759
    %v1765 = vmul.f32 %v1668, %v1759
    %v1766 = vmul.f32 %v1674, %v1759
    %v1767 = vmul.f32 %v1678, %v1759
    %1768 = vadd.xlane.f32.xlu0 %v1760
    %v1769 = vpop.xlane.xlu0 %1768
    %1770 = vadd.xlane.f32.xlu0 %v1761
    %v1771 = vpop.xlane.xlu0 %1770
    %1772 = vadd.xlane.f32.xlu0 %v1762
    %v1773 = vpop.xlane.xlu0 %1772
    %1774 = vadd.xlane.f32.xlu0 %v1763
    %v1775 = vpop.xlane.xlu0 %1774
    %1776 = vadd.xlane.f32.xlu0 %v1764
    %v1777 = vpop.xlane.xlu0 %1776
    %1778 = vadd.xlane.f32.xlu0 %v1765
    %v1779 = vpop.xlane.xlu0 %1778
    %1780 = vadd.xlane.f32.xlu0 %v1766
    %v1781 = vpop.xlane.xlu0 %1780
    %1782 = vadd.xlane.f32.xlu0 %v1767
    %v1783 = vpop.xlane.xlu0 %1782
    %v1784 = vld [vmem:[%s7] sm:$0x1]
    %v1785 = vlaneseq
    %v1786 = vshrl.u32 %v1785, 7
    %v1787 = vsub.s32 0, %v1786
    %v1788 = vrot.slane %v1784, %v1787
    %v1789 = vmul.f32 %v1644, %v1788
    %v1790 = vmul.f32 %v1648, %v1788
    %v1791 = vmul.f32 %v1654, %v1788
    %v1792 = vmul.f32 %v1658, %v1788
    %v1793 = vmul.f32 %v1664, %v1788
    %v1794 = vmul.f32 %v1668, %v1788
    %v1795 = vmul.f32 %v1674, %v1788
    %v1796 = vmul.f32 %v1678, %v1788
    %1797 = vadd.xlane.f32.xlu0 %v1789
    %v1798 = vpop.xlane.xlu0 %1797
    %1799 = vadd.xlane.f32.xlu0 %v1790
    %v1800 = vpop.xlane.xlu0 %1799
    %1801 = vadd.xlane.f32.xlu0 %v1791
    %v1802 = vpop.xlane.xlu0 %1801
    %1803 = vadd.xlane.f32.xlu0 %v1792
    %v1804 = vpop.xlane.xlu0 %1803
    %1805 = vadd.xlane.f32.xlu0 %v1793
    %v1806 = vpop.xlane.xlu0 %1805
    %1807 = vadd.xlane.f32.xlu0 %v1794
    %v1808 = vpop.xlane.xlu0 %1807
    %1809 = vadd.xlane.f32.xlu0 %v1795
    %v1810 = vpop.xlane.xlu0 %1809
    %1811 = vadd.xlane.f32.xlu0 %v1796
    %v1812 = vpop.xlane.xlu0 %1811
    %1813 = vxpose.xlu0.b32.start [1/16] %v1798, 128
    %1814 = vxpose.xlu0.b32.cont [2/16] %v1800, 128
    %1815 = vxpose.xlu0.b32.cont [3/16] %v1802, 128
    %1816 = vxpose.xlu0.b32.cont [4/16] %v1804, 128
    %1817 = vxpose.xlu0.b32.cont [5/16] %v1806, 128
    %1818 = vxpose.xlu0.b32.cont [6/16] %v1808, 128
    %1819 = vxpose.xlu0.b32.cont [7/16] %v1810, 128
    %1820 = vxpose.xlu0.b32.cont [8/16] %v1812, 128
    %1821 = vxpose.xlu0.b32.cont [9/16] 0.0, 128
    %1822 = vxpose.xlu0.b32.cont [10/16] 0.0, 128
    %1823 = vxpose.xlu0.b32.cont [11/16] 0.0, 128
    %1824 = vxpose.xlu0.b32.cont [12/16] 0.0, 128
    %1825 = vxpose.xlu0.b32.cont [13/16] 0.0, 128
    %1826 = vxpose.xlu0.b32.cont [14/16] 0.0, 128
    %1827 = vxpose.xlu0.b32.cont [15/16] 0.0, 128
    %1828 = vxpose.xlu0.b32.end [16/16] 0.0, 128
    %v1829 = vpop.trf.xlu0
    %v1830 = vpop.trf.xlu0
    %v1831 = vpop.trf.xlu0
    %v1832 = vpop.trf.xlu0
    %v1833 = vpop.trf.xlu0
    %v1834 = vpop.trf.xlu0
    %v1835 = vpop.trf.xlu0
    %v1836 = vpop.trf.xlu0
    %v1837 = vpop.trf.xlu0
    %v1838 = vpop.trf.xlu0
    %v1839 = vpop.trf.xlu0
    %v1840 = vpop.trf.xlu0
    %v1841 = vpop.trf.xlu0
    %v1842 = vpop.trf.xlu0
    %v1843 = vpop.trf.xlu0
    %v1844 = vpop.trf.xlu0
    %v1845 = vadd.f32 %v1769, %v1829
    %v1846 = vadd.f32 %v1771, %v1830
    %v1847 = vadd.f32 %v1773, %v1831
    %v1848 = vadd.f32 %v1775, %v1832
    %v1849 = vadd.f32 %v1777, %v1833
    %v1850 = vadd.f32 %v1779, %v1834
    %v1851 = vadd.f32 %v1781, %v1835
    %v1852 = vadd.f32 %v1783, %v1836
    %vm1853 = vcmp.ge.f32.partialorder %v1845, 0.0
    %vm1854 = vcmp.ge.f32.partialorder %v1846, 0.0
    %vm1855 = vcmp.ge.f32.partialorder %v1847, 0.0
    %vm1856 = vcmp.ge.f32.partialorder %v1848, 0.0
    %vm1857 = vcmp.ge.f32.partialorder %v1849, 0.0
    %vm1858 = vcmp.ge.f32.partialorder %v1850, 0.0
    %vm1859 = vcmp.ge.f32.partialorder %v1851, 0.0
    %vm1860 = vcmp.ge.f32.partialorder %v1852, 0.0
    %v1861 = vmul.f32 %v1845, 0.2
    %v1862 = vmul.f32 %v1846, 0.2
    %v1863 = vmul.f32 %v1847, 0.2
    %v1864 = vmul.f32 %v1848, 0.2
    %v1865 = vmul.f32 %v1849, 0.2
    %v1866 = vmul.f32 %v1850, 0.2
    %v1867 = vmul.f32 %v1851, 0.2
    %v1868 = vmul.f32 %v1852, 0.2
    %v1869 = vsel %vm1853, %v1845, %v1861
    %v1870 = vsel %vm1854, %v1846, %v1862
    %v1871 = vsel %vm1855, %v1847, %v1863
    %v1872 = vsel %vm1856, %v1848, %v1864
    %v1873 = vsel %vm1857, %v1849, %v1865
    %v1874 = vsel %vm1858, %v1850, %v1866
    %v1875 = vsel %vm1859, %v1851, %v1867
    %v1876 = vsel %vm1860, %v1852, %v1868
    %v1877 = vadd.f32 %v1869, %v87
    %v1878 = vadd.f32 %v1870, %v88
    %v1879 = vadd.f32 %v1871, %v89
    %v1880 = vadd.f32 %v1872, %v90
    %v1881 = vadd.f32 %v1873, %v91
    %v1882 = vadd.f32 %v1874, %v92
    %v1883 = vadd.f32 %v1875, %v93
    %v1884 = vadd.f32 %v1876, %v94
    %v1885 = vsel %vm453, %v1877, -inf
    %1886 = vmax.xlane.f32.xlu0 %v1885
    %v1887 = vpop.xlane.xlu0 %1886
    %v1888 = vsel %vm453, %v1878, -inf
    %1889 = vmax.xlane.f32.xlu0 %v1888
    %v1890 = vpop.xlane.xlu0 %1889
    %v1891 = vsel %vm453, %v1879, -inf
    %1892 = vmax.xlane.f32.xlu0 %v1891
    %v1893 = vpop.xlane.xlu0 %1892
    %v1894 = vsel %vm453, %v1880, -inf
    %1895 = vmax.xlane.f32.xlu0 %v1894
    %v1896 = vpop.xlane.xlu0 %1895
    %v1897 = vsel %vm453, %v1881, -inf
    %1898 = vmax.xlane.f32.xlu0 %v1897
    %v1899 = vpop.xlane.xlu0 %1898
    %v1900 = vsel %vm453, %v1882, -inf
    %1901 = vmax.xlane.f32.xlu0 %v1900
    %v1902 = vpop.xlane.xlu0 %1901
    %v1903 = vsel %vm453, %v1883, -inf
    %1904 = vmax.xlane.f32.xlu0 %v1903
    %v1905 = vpop.xlane.xlu0 %1904
    %v1906 = vsel %vm453, %v1884, -inf
    %1907 = vmax.xlane.f32.xlu0 %v1906
    %v1908 = vpop.xlane.xlu0 %1907
    %v1909 = vsub.f32 %v1877, %v1887
    %v1910 = vsub.f32 %v1878, %v1890
    %v1911 = vsub.f32 %v1879, %v1893
    %v1912 = vsub.f32 %v1880, %v1896
    %v1913 = vsub.f32 %v1881, %v1899
    %v1914 = vsub.f32 %v1882, %v1902
    %v1915 = vsub.f32 %v1883, %v1905
    %v1916 = vsub.f32 %v1884, %v1908
    %v1917 = vmul.f32 %v1909, 1.442695
    %v1918 = vpow.pop %v1917
    %v1919 = vmul.f32 %v1910, 1.442695
    %v1920 = vpow.pop %v1919
    %v1921 = vmul.f32 %v1911, 1.442695
    %v1922 = vpow.pop %v1921
    %v1923 = vmul.f32 %v1912, 1.442695
    %v1924 = vpow.pop %v1923
    %v1925 = vmul.f32 %v1913, 1.442695
    %v1926 = vpow.pop %v1925
    %v1927 = vmul.f32 %v1914, 1.442695
    %v1928 = vpow.pop %v1927
    %v1929 = vmul.f32 %v1915, 1.442695
    %v1930 = vpow.pop %v1929
    %v1931 = vmul.f32 %v1916, 1.442695
    %v1932 = vpow.pop %v1931
    %v1933 = vsel %vm453, %v1918, 0.0
    %1934 = vadd.xlane.f32.xlu0 %v1933
    %v1935 = vpop.xlane.xlu0 %1934
    %v1936 = vsel %vm453, %v1920, 0.0
    %1937 = vadd.xlane.f32.xlu0 %v1936
    %v1938 = vpop.xlane.xlu0 %1937
    %v1939 = vsel %vm453, %v1922, 0.0
    %1940 = vadd.xlane.f32.xlu0 %v1939
    %v1941 = vpop.xlane.xlu0 %1940
    %v1942 = vsel %vm453, %v1924, 0.0
    %1943 = vadd.xlane.f32.xlu0 %v1942
    %v1944 = vpop.xlane.xlu0 %1943
    %v1945 = vsel %vm453, %v1926, 0.0
    %1946 = vadd.xlane.f32.xlu0 %v1945
    %v1947 = vpop.xlane.xlu0 %1946
    %v1948 = vsel %vm453, %v1928, 0.0
    %1949 = vadd.xlane.f32.xlu0 %v1948
    %v1950 = vpop.xlane.xlu0 %1949
    %v1951 = vsel %vm453, %v1930, 0.0
    %1952 = vadd.xlane.f32.xlu0 %v1951
    %v1953 = vpop.xlane.xlu0 %1952
    %v1954 = vsel %vm453, %v1932, 0.0
    %1955 = vadd.xlane.f32.xlu0 %v1954
    %v1956 = vpop.xlane.xlu0 %1955
    %v1957 = vrcp.pop %v1935
    %v1958 = vrcp.pop %v1938
    %v1959 = vrcp.pop %v1941
    %v1960 = vrcp.pop %v1944
    %v1961 = vrcp.pop %v1947
    %v1962 = vrcp.pop %v1950
    %v1963 = vrcp.pop %v1953
    %v1964 = vrcp.pop %v1956
    %v1965 = vmul.f32 %v1918, %v1957
    %v1966 = vmul.f32 %v1920, %v1958
    %v1967 = vmul.f32 %v1922, %v1959
    %v1968 = vmul.f32 %v1924, %v1960
    %v1969 = vmul.f32 %v1926, %v1961
    %v1970 = vmul.f32 %v1928, %v1962
    %v1971 = vmul.f32 %v1930, %v1963
    %v1972 = vmul.f32 %v1932, %v1964
    %v1973 = vpack.c.bf16 %v1966, %v1965
    %v1974 = vpack.c.bf16 %v1968, %v1967
    %v1975 = vpack.c.bf16 %v1970, %v1969
    %v1976 = vpack.c.bf16 %v1972, %v1971
    %1977 = vst.msk [vmem:[#allocation2] sm:$0xff] %vm453, %v1973
    %1978 = vst.msk [vmem:[#allocation2 + $0x10] sm:$0xff] %vm453, %v1974
    %1979 = vst.msk [vmem:[#allocation2 + $0x20] sm:$0xff] %vm453, %v1975
    %1980 = vst.msk [vmem:[#allocation2 + $0x30] sm:$0xff] %vm453, %v1976
    %v1981 = vpack.c.bf16 %v1648, %v1644
    %v1982 = vpack.c.bf16 %v1658, %v1654
    %v1983 = vpack.c.bf16 %v1668, %v1664
    %v1984 = vpack.c.bf16 %v1678, %v1674
    %1985 = vst [vmem:[#allocation3] sm:$0xff] %v1981
    %1986 = vst [vmem:[#allocation3 + $0x8] sm:$0xff] %v1982
    %1987 = vst [vmem:[#allocation3 + $0x10] sm:$0xff] %v1983
    %1988 = vst [vmem:[#allocation3 + $0x18] sm:$0xff] %v1984
    %v1989 = vld [vmem:[%s8 + $0x1] sm:$0x1]
    %v1990 = vlaneseq
    %v1991 = vshrl.u32 %v1990, 7
    %v1992 = vsub.s32 0, %v1991
    %v1993 = vrot.slane %v1989, %v1992
    %v1994 = vmul.f32 %v1646, %v1993
    %v1995 = vmul.f32 %v1650, %v1993
    %v1996 = vmul.f32 %v1656, %v1993
    %v1997 = vmul.f32 %v1660, %v1993
    %v1998 = vmul.f32 %v1666, %v1993
    %v1999 = vmul.f32 %v1670, %v1993
    %v2000 = vmul.f32 %v1676, %v1993
    %v2001 = vmul.f32 %v1680, %v1993
    %2002 = vadd.xlane.f32.xlu0 %v1994
    %v2003 = vpop.xlane.xlu0 %2002
    %2004 = vadd.xlane.f32.xlu0 %v1995
    %v2005 = vpop.xlane.xlu0 %2004
    %2006 = vadd.xlane.f32.xlu0 %v1996
    %v2007 = vpop.xlane.xlu0 %2006
    %2008 = vadd.xlane.f32.xlu0 %v1997
    %v2009 = vpop.xlane.xlu0 %2008
    %2010 = vadd.xlane.f32.xlu0 %v1998
    %v2011 = vpop.xlane.xlu0 %2010
    %2012 = vadd.xlane.f32.xlu0 %v1999
    %v2013 = vpop.xlane.xlu0 %2012
    %2014 = vadd.xlane.f32.xlu0 %v2000
    %v2015 = vpop.xlane.xlu0 %2014
    %2016 = vadd.xlane.f32.xlu0 %v2001
    %v2017 = vpop.xlane.xlu0 %2016
    %v2018 = vld [vmem:[%s7 + $0x1] sm:$0x1]
    %v2019 = vlaneseq
    %v2020 = vshrl.u32 %v2019, 7
    %v2021 = vsub.s32 0, %v2020
    %v2022 = vrot.slane %v2018, %v2021
    %v2023 = vmul.f32 %v1646, %v2022
    %v2024 = vmul.f32 %v1650, %v2022
    %v2025 = vmul.f32 %v1656, %v2022
    %v2026 = vmul.f32 %v1660, %v2022
    %v2027 = vmul.f32 %v1666, %v2022
    %v2028 = vmul.f32 %v1670, %v2022
    %v2029 = vmul.f32 %v1676, %v2022
    %v2030 = vmul.f32 %v1680, %v2022
    %2031 = vadd.xlane.f32.xlu0 %v2023
    %v2032 = vpop.xlane.xlu0 %2031
    %2033 = vadd.xlane.f32.xlu0 %v2024
    %v2034 = vpop.xlane.xlu0 %2033
    %2035 = vadd.xlane.f32.xlu0 %v2025
    %v2036 = vpop.xlane.xlu0 %2035
    %2037 = vadd.xlane.f32.xlu0 %v2026
    %v2038 = vpop.xlane.xlu0 %2037
    %2039 = vadd.xlane.f32.xlu0 %v2027
    %v2040 = vpop.xlane.xlu0 %2039
    %2041 = vadd.xlane.f32.xlu0 %v2028
    %v2042 = vpop.xlane.xlu0 %2041
    %2043 = vadd.xlane.f32.xlu0 %v2029
    %v2044 = vpop.xlane.xlu0 %2043
    %2045 = vadd.xlane.f32.xlu0 %v2030
    %v2046 = vpop.xlane.xlu0 %2045
    %2047 = vxpose.xlu0.b32.start [1/16] %v2032, 128
    %2048 = vxpose.xlu0.b32.cont [2/16] %v2034, 128
    %2049 = vxpose.xlu0.b32.cont [3/16] %v2036, 128
    %2050 = vxpose.xlu0.b32.cont [4/16] %v2038, 128
    %2051 = vxpose.xlu0.b32.cont [5/16] %v2040, 128
    %2052 = vxpose.xlu0.b32.cont [6/16] %v2042, 128
    %2053 = vxpose.xlu0.b32.cont [7/16] %v2044, 128
    %2054 = vxpose.xlu0.b32.cont [8/16] %v2046, 128
    %2055 = vxpose.xlu0.b32.cont [9/16] 0.0, 128
    %2056 = vxpose.xlu0.b32.cont [10/16] 0.0, 128
    %2057 = vxpose.xlu0.b32.cont [11/16] 0.0, 128
    %2058 = vxpose.xlu0.b32.cont [12/16] 0.0, 128
    %2059 = vxpose.xlu0.b32.cont [13/16] 0.0, 128
    %2060 = vxpose.xlu0.b32.cont [14/16] 0.0, 128
    %2061 = vxpose.xlu0.b32.cont [15/16] 0.0, 128
    %2062 = vxpose.xlu0.b32.end [16/16] 0.0, 128
    %v2063 = vpop.trf.xlu0
    %v2064 = vpop.trf.xlu0
    %v2065 = vpop.trf.xlu0
    %v2066 = vpop.trf.xlu0
    %v2067 = vpop.trf.xlu0
    %v2068 = vpop.trf.xlu0
    %v2069 = vpop.trf.xlu0
    %v2070 = vpop.trf.xlu0
    %v2071 = vpop.trf.xlu0
    %v2072 = vpop.trf.xlu0
    %v2073 = vpop.trf.xlu0
    %v2074 = vpop.trf.xlu0
    %v2075 = vpop.trf.xlu0
    %v2076 = vpop.trf.xlu0
    %v2077 = vpop.trf.xlu0
    %v2078 = vpop.trf.xlu0
    %v2079 = vadd.f32 %v2003, %v2063
    %v2080 = vadd.f32 %v2005, %v2064
    %v2081 = vadd.f32 %v2007, %v2065
    %v2082 = vadd.f32 %v2009, %v2066
    %v2083 = vadd.f32 %v2011, %v2067
    %v2084 = vadd.f32 %v2013, %v2068
    %v2085 = vadd.f32 %v2015, %v2069
    %v2086 = vadd.f32 %v2017, %v2070
    %vm2087 = vcmp.ge.f32.partialorder %v2079, 0.0
    %vm2088 = vcmp.ge.f32.partialorder %v2080, 0.0
    %vm2089 = vcmp.ge.f32.partialorder %v2081, 0.0
    %vm2090 = vcmp.ge.f32.partialorder %v2082, 0.0
    %vm2091 = vcmp.ge.f32.partialorder %v2083, 0.0
    %vm2092 = vcmp.ge.f32.partialorder %v2084, 0.0
    %vm2093 = vcmp.ge.f32.partialorder %v2085, 0.0
    %vm2094 = vcmp.ge.f32.partialorder %v2086, 0.0
    %v2095 = vmul.f32 %v2079, 0.2
    %v2096 = vmul.f32 %v2080, 0.2
    %v2097 = vmul.f32 %v2081, 0.2
    %v2098 = vmul.f32 %v2082, 0.2
    %v2099 = vmul.f32 %v2083, 0.2
    %v2100 = vmul.f32 %v2084, 0.2
    %v2101 = vmul.f32 %v2085, 0.2
    %v2102 = vmul.f32 %v2086, 0.2
    %v2103 = vsel %vm2087, %v2079, %v2095
    %v2104 = vsel %vm2088, %v2080, %v2096
    %v2105 = vsel %vm2089, %v2081, %v2097
    %v2106 = vsel %vm2090, %v2082, %v2098
    %v2107 = vsel %vm2091, %v2083, %v2099
    %v2108 = vsel %vm2092, %v2084, %v2100
    %v2109 = vsel %vm2093, %v2085, %v2101
    %v2110 = vsel %vm2094, %v2086, %v2102
    %v2111 = vadd.f32 %v2103, %v87
    %v2112 = vadd.f32 %v2104, %v88
    %v2113 = vadd.f32 %v2105, %v89
    %v2114 = vadd.f32 %v2106, %v90
    %v2115 = vadd.f32 %v2107, %v91
    %v2116 = vadd.f32 %v2108, %v92
    %v2117 = vadd.f32 %v2109, %v93
    %v2118 = vadd.f32 %v2110, %v94
    %v2119 = vsel %vm453, %v2111, -inf
    %2120 = vmax.xlane.f32.xlu0 %v2119
    %v2121 = vpop.xlane.xlu0 %2120
    %v2122 = vsel %vm453, %v2112, -inf
    %2123 = vmax.xlane.f32.xlu0 %v2122
    %v2124 = vpop.xlane.xlu0 %2123
    %v2125 = vsel %vm453, %v2113, -inf
    %2126 = vmax.xlane.f32.xlu0 %v2125
    %v2127 = vpop.xlane.xlu0 %2126
    %v2128 = vsel %vm453, %v2114, -inf
    %2129 = vmax.xlane.f32.xlu0 %v2128
    %v2130 = vpop.xlane.xlu0 %2129
    %v2131 = vsel %vm453, %v2115, -inf
    %2132 = vmax.xlane.f32.xlu0 %v2131
    %v2133 = vpop.xlane.xlu0 %2132
    %v2134 = vsel %vm453, %v2116, -inf
    %2135 = vmax.xlane.f32.xlu0 %v2134
    %v2136 = vpop.xlane.xlu0 %2135
    %v2137 = vsel %vm453, %v2117, -inf
    %2138 = vmax.xlane.f32.xlu0 %v2137
    %v2139 = vpop.xlane.xlu0 %2138
    %v2140 = vsel %vm453, %v2118, -inf
    %2141 = vmax.xlane.f32.xlu0 %v2140
    %v2142 = vpop.xlane.xlu0 %2141
    %v2143 = vsub.f32 %v2111, %v2121
    %v2144 = vsub.f32 %v2112, %v2124
    %v2145 = vsub.f32 %v2113, %v2127
    %v2146 = vsub.f32 %v2114, %v2130
    %v2147 = vsub.f32 %v2115, %v2133
    %v2148 = vsub.f32 %v2116, %v2136
    %v2149 = vsub.f32 %v2117, %v2139
    %v2150 = vsub.f32 %v2118, %v2142
    %v2151 = vmul.f32 %v2143, 1.442695
    %v2152 = vpow.pop %v2151
    %v2153 = vmul.f32 %v2144, 1.442695
    %v2154 = vpow.pop %v2153
    %v2155 = vmul.f32 %v2145, 1.442695
    %v2156 = vpow.pop %v2155
    %v2157 = vmul.f32 %v2146, 1.442695
    %v2158 = vpow.pop %v2157
    %v2159 = vmul.f32 %v2147, 1.442695
    %v2160 = vpow.pop %v2159
    %v2161 = vmul.f32 %v2148, 1.442695
    %v2162 = vpow.pop %v2161
    %v2163 = vmul.f32 %v2149, 1.442695
    %v2164 = vpow.pop %v2163
    %v2165 = vmul.f32 %v2150, 1.442695
    %v2166 = vpow.pop %v2165
    %v2167 = vsel %vm453, %v2152, 0.0
    %2168 = vadd.xlane.f32.xlu0 %v2167
    %v2169 = vpop.xlane.xlu0 %2168
    %v2170 = vsel %vm453, %v2154, 0.0
    %2171 = vadd.xlane.f32.xlu0 %v2170
    %v2172 = vpop.xlane.xlu0 %2171
    %v2173 = vsel %vm453, %v2156, 0.0
    %2174 = vadd.xlane.f32.xlu0 %v2173
    %v2175 = vpop.xlane.xlu0 %2174
    %v2176 = vsel %vm453, %v2158, 0.0
    %2177 = vadd.xlane.f32.xlu0 %v2176
    %v2178 = vpop.xlane.xlu0 %2177
    %v2179 = vsel %vm453, %v2160, 0.0
    %2180 = vadd.xlane.f32.xlu0 %v2179
    %v2181 = vpop.xlane.xlu0 %2180
    %v2182 = vsel %vm453, %v2162, 0.0
    %2183 = vadd.xlane.f32.xlu0 %v2182
    %v2184 = vpop.xlane.xlu0 %2183
    %v2185 = vsel %vm453, %v2164, 0.0
    %2186 = vadd.xlane.f32.xlu0 %v2185
    %v2187 = vpop.xlane.xlu0 %2186
    %v2188 = vsel %vm453, %v2166, 0.0
    %2189 = vadd.xlane.f32.xlu0 %v2188
    %v2190 = vpop.xlane.xlu0 %2189
    %v2191 = vrcp.pop %v2169
    %v2192 = vrcp.pop %v2172
    %v2193 = vrcp.pop %v2175
    %v2194 = vrcp.pop %v2178
    %v2195 = vrcp.pop %v2181
    %v2196 = vrcp.pop %v2184
    %v2197 = vrcp.pop %v2187
    %v2198 = vrcp.pop %v2190
    %v2199 = vmul.f32 %v2152, %v2191
    %v2200 = vmul.f32 %v2154, %v2192
    %v2201 = vmul.f32 %v2156, %v2193
    %v2202 = vmul.f32 %v2158, %v2194
    %v2203 = vmul.f32 %v2160, %v2195
    %v2204 = vmul.f32 %v2162, %v2196
    %v2205 = vmul.f32 %v2164, %v2197
    %v2206 = vmul.f32 %v2166, %v2198
    %v2207 = vpack.c.bf16 %v2200, %v2199
    %v2208 = vpack.c.bf16 %v2202, %v2201
    %v2209 = vpack.c.bf16 %v2204, %v2203
    %v2210 = vpack.c.bf16 %v2206, %v2205
    %2215 = vrot.lane.b32.xlu0 %v2207, 64
    %v2216 = vpop.permute.xlu0 %2215
    %2217 = vrot.lane.b32.xlu0 %v2208, 64
    %v2218 = vpop.permute.xlu0 %2217
    %2219 = vrot.lane.b32.xlu0 %v2209, 64
    %v2220 = vpop.permute.xlu0 %2219
    %2221 = vrot.lane.b32.xlu0 %v2210, 64
    %v2222 = vpop.permute.xlu0 %2221
    %2227 = vst.msk [vmem:[#allocation2] sm:$0xff] %vm796, %v2216
    %2228 = vst.msk [vmem:[#allocation2 + $0x10] sm:$0xff] %vm796, %v2218
    %2229 = vst.msk [vmem:[#allocation2 + $0x20] sm:$0xff] %vm796, %v2220
    %2230 = vst.msk [vmem:[#allocation2 + $0x30] sm:$0xff] %vm796, %v2222
    %v2231 = vpack.c.bf16 %v1650, %v1646
    %v2232 = vpack.c.bf16 %v1660, %v1656
    %v2233 = vpack.c.bf16 %v1670, %v1666
    %v2234 = vpack.c.bf16 %v1680, %v1676
    %2235 = vst [vmem:[#allocation3 + $0x20] sm:$0xff] %v2231
    %2236 = vst [vmem:[#allocation3 + $0x28] sm:$0xff] %v2232
    %2237 = vst [vmem:[#allocation3 + $0x30] sm:$0xff] %v2233
    %2238 = vst [vmem:[#allocation3 + $0x38] sm:$0xff] %v2234
    %v2239 = vld [vmem:[%s8 + $0x2] sm:$0x1]
    %v2240 = vlaneseq
    %v2241 = vshrl.u32 %v2240, 7
    %v2242 = vsub.s32 0, %v2241
    %v2243 = vrot.slane %v2239, %v2242
    %v2244 = vmul.f32 %v1717, %v2243
    %v2245 = vmul.f32 %v1721, %v2243
    %v2246 = vmul.f32 %v1727, %v2243
    %v2247 = vmul.f32 %v1731, %v2243
    %v2248 = vmul.f32 %v1737, %v2243
    %v2249 = vmul.f32 %v1741, %v2243
    %v2250 = vmul.f32 %v1747, %v2243
    %v2251 = vmul.f32 %v1751, %v2243
    %2252 = vadd.xlane.f32.xlu0 %v2244
    %v2253 = vpop.xlane.xlu0 %2252
    %2254 = vadd.xlane.f32.xlu0 %v2245
    %v2255 = vpop.xlane.xlu0 %2254
    %2256 = vadd.xlane.f32.xlu0 %v2246
    %v2257 = vpop.xlane.xlu0 %2256
    %2258 = vadd.xlane.f32.xlu0 %v2247
    %v2259 = vpop.xlane.xlu0 %2258
    %2260 = vadd.xlane.f32.xlu0 %v2248
    %v2261 = vpop.xlane.xlu0 %2260
    %2262 = vadd.xlane.f32.xlu0 %v2249
    %v2263 = vpop.xlane.xlu0 %2262
    %2264 = vadd.xlane.f32.xlu0 %v2250
    %v2265 = vpop.xlane.xlu0 %2264
    %2266 = vadd.xlane.f32.xlu0 %v2251
    %v2267 = vpop.xlane.xlu0 %2266
    %v2268 = vld [vmem:[%s7 + $0x2] sm:$0x1]
    %v2269 = vlaneseq
    %v2270 = vshrl.u32 %v2269, 7
    %v2271 = vsub.s32 0, %v2270
    %v2272 = vrot.slane %v2268, %v2271
    %v2273 = vmul.f32 %v1717, %v2272
    %v2274 = vmul.f32 %v1721, %v2272
    %v2275 = vmul.f32 %v1727, %v2272
    %v2276 = vmul.f32 %v1731, %v2272
    %v2277 = vmul.f32 %v1737, %v2272
    %v2278 = vmul.f32 %v1741, %v2272
    %v2279 = vmul.f32 %v1747, %v2272
    %v2280 = vmul.f32 %v1751, %v2272
    %2281 = vadd.xlane.f32.xlu0 %v2273
    %v2282 = vpop.xlane.xlu0 %2281
    %2283 = vadd.xlane.f32.xlu0 %v2274
    %v2284 = vpop.xlane.xlu0 %2283
    %2285 = vadd.xlane.f32.xlu0 %v2275
    %v2286 = vpop.xlane.xlu0 %2285
    %2287 = vadd.xlane.f32.xlu0 %v2276
    %v2288 = vpop.xlane.xlu0 %2287
    %2289 = vadd.xlane.f32.xlu0 %v2277
    %v2290 = vpop.xlane.xlu0 %2289
    %2291 = vadd.xlane.f32.xlu0 %v2278
    %v2292 = vpop.xlane.xlu0 %2291
    %2293 = vadd.xlane.f32.xlu0 %v2279
    %v2294 = vpop.xlane.xlu0 %2293
    %2295 = vadd.xlane.f32.xlu0 %v2280
    %v2296 = vpop.xlane.xlu0 %2295
    %2297 = vxpose.xlu0.b32.start [1/16] %v2282, 128
    %2298 = vxpose.xlu0.b32.cont [2/16] %v2284, 128
    %2299 = vxpose.xlu0.b32.cont [3/16] %v2286, 128
    %2300 = vxpose.xlu0.b32.cont [4/16] %v2288, 128
    %2301 = vxpose.xlu0.b32.cont [5/16] %v2290, 128
    %2302 = vxpose.xlu0.b32.cont [6/16] %v2292, 128
    %2303 = vxpose.xlu0.b32.cont [7/16] %v2294, 128
    %2304 = vxpose.xlu0.b32.cont [8/16] %v2296, 128
    %2305 = vxpose.xlu0.b32.cont [9/16] 0.0, 128
    %2306 = vxpose.xlu0.b32.cont [10/16] 0.0, 128
    %2307 = vxpose.xlu0.b32.cont [11/16] 0.0, 128
    %2308 = vxpose.xlu0.b32.cont [12/16] 0.0, 128
    %2309 = vxpose.xlu0.b32.cont [13/16] 0.0, 128
    %2310 = vxpose.xlu0.b32.cont [14/16] 0.0, 128
    %2311 = vxpose.xlu0.b32.cont [15/16] 0.0, 128
    %2312 = vxpose.xlu0.b32.end [16/16] 0.0, 128
    %v2313 = vpop.trf.xlu0
    %v2314 = vpop.trf.xlu0
    %v2315 = vpop.trf.xlu0
    %v2316 = vpop.trf.xlu0
    %v2317 = vpop.trf.xlu0
    %v2318 = vpop.trf.xlu0
    %v2319 = vpop.trf.xlu0
    %v2320 = vpop.trf.xlu0
    %v2321 = vpop.trf.xlu0
    %v2322 = vpop.trf.xlu0
    %v2323 = vpop.trf.xlu0
    %v2324 = vpop.trf.xlu0
    %v2325 = vpop.trf.xlu0
    %v2326 = vpop.trf.xlu0
    %v2327 = vpop.trf.xlu0
    %v2328 = vpop.trf.xlu0
    %v2329 = vadd.f32 %v2253, %v2313
    %v2330 = vadd.f32 %v2255, %v2314
    %v2331 = vadd.f32 %v2257, %v2315
    %v2332 = vadd.f32 %v2259, %v2316
    %v2333 = vadd.f32 %v2261, %v2317
    %v2334 = vadd.f32 %v2263, %v2318
    %v2335 = vadd.f32 %v2265, %v2319
    %v2336 = vadd.f32 %v2267, %v2320
    %vm2337 = vcmp.ge.f32.partialorder %v2329, 0.0
    %vm2338 = vcmp.ge.f32.partialorder %v2330, 0.0
    %vm2339 = vcmp.ge.f32.partialorder %v2331, 0.0
    %vm2340 = vcmp.ge.f32.partialorder %v2332, 0.0
    %vm2341 = vcmp.ge.f32.partialorder %v2333, 0.0
    %vm2342 = vcmp.ge.f32.partialorder %v2334, 0.0
    %vm2343 = vcmp.ge.f32.partialorder %v2335, 0.0
    %vm2344 = vcmp.ge.f32.partialorder %v2336, 0.0
    %v2345 = vmul.f32 %v2329, 0.2
    %v2346 = vmul.f32 %v2330, 0.2
    %v2347 = vmul.f32 %v2331, 0.2
    %v2348 = vmul.f32 %v2332, 0.2
    %v2349 = vmul.f32 %v2333, 0.2
    %v2350 = vmul.f32 %v2334, 0.2
    %v2351 = vmul.f32 %v2335, 0.2
    %v2352 = vmul.f32 %v2336, 0.2
    %v2353 = vsel %vm2337, %v2329, %v2345
    %v2354 = vsel %vm2338, %v2330, %v2346
    %v2355 = vsel %vm2339, %v2331, %v2347
    %v2356 = vsel %vm2340, %v2332, %v2348
    %v2357 = vsel %vm2341, %v2333, %v2349
    %v2358 = vsel %vm2342, %v2334, %v2350
    %v2359 = vsel %vm2343, %v2335, %v2351
    %v2360 = vsel %vm2344, %v2336, %v2352
    %v2361 = vadd.f32 %v2353, %v87
    %v2362 = vadd.f32 %v2354, %v88
    %v2363 = vadd.f32 %v2355, %v89
    %v2364 = vadd.f32 %v2356, %v90
    %v2365 = vadd.f32 %v2357, %v91
    %v2366 = vadd.f32 %v2358, %v92
    %v2367 = vadd.f32 %v2359, %v93
    %v2368 = vadd.f32 %v2360, %v94
    %v2369 = vsel %vm453, %v2361, -inf
    %2370 = vmax.xlane.f32.xlu0 %v2369
    %v2371 = vpop.xlane.xlu0 %2370
    %v2372 = vsel %vm453, %v2362, -inf
    %2373 = vmax.xlane.f32.xlu0 %v2372
    %v2374 = vpop.xlane.xlu0 %2373
    %v2375 = vsel %vm453, %v2363, -inf
    %2376 = vmax.xlane.f32.xlu0 %v2375
    %v2377 = vpop.xlane.xlu0 %2376
    %v2378 = vsel %vm453, %v2364, -inf
    %2379 = vmax.xlane.f32.xlu0 %v2378
    %v2380 = vpop.xlane.xlu0 %2379
    %v2381 = vsel %vm453, %v2365, -inf
    %2382 = vmax.xlane.f32.xlu0 %v2381
    %v2383 = vpop.xlane.xlu0 %2382
    %v2384 = vsel %vm453, %v2366, -inf
    %2385 = vmax.xlane.f32.xlu0 %v2384
    %v2386 = vpop.xlane.xlu0 %2385
    %v2387 = vsel %vm453, %v2367, -inf
    %2388 = vmax.xlane.f32.xlu0 %v2387
    %v2389 = vpop.xlane.xlu0 %2388
    %v2390 = vsel %vm453, %v2368, -inf
    %2391 = vmax.xlane.f32.xlu0 %v2390
    %v2392 = vpop.xlane.xlu0 %2391
    %v2393 = vsub.f32 %v2361, %v2371
    %v2394 = vsub.f32 %v2362, %v2374
    %v2395 = vsub.f32 %v2363, %v2377
    %v2396 = vsub.f32 %v2364, %v2380
    %v2397 = vsub.f32 %v2365, %v2383
    %v2398 = vsub.f32 %v2366, %v2386
    %v2399 = vsub.f32 %v2367, %v2389
    %v2400 = vsub.f32 %v2368, %v2392
    %v2401 = vmul.f32 %v2393, 1.442695
    %v2402 = vpow.pop %v2401
    %v2403 = vmul.f32 %v2394, 1.442695
    %v2404 = vpow.pop %v2403
    %v2405 = vmul.f32 %v2395, 1.442695
    %v2406 = vpow.pop %v2405
    %v2407 = vmul.f32 %v2396, 1.442695
    %v2408 = vpow.pop %v2407
    %v2409 = vmul.f32 %v2397, 1.442695
    %v2410 = vpow.pop %v2409
    %v2411 = vmul.f32 %v2398, 1.442695
    %v2412 = vpow.pop %v2411
    %v2413 = vmul.f32 %v2399, 1.442695
    %v2414 = vpow.pop %v2413
    %v2415 = vmul.f32 %v2400, 1.442695
    %v2416 = vpow.pop %v2415
    %v2417 = vsel %vm453, %v2402, 0.0
    %2418 = vadd.xlane.f32.xlu0 %v2417
    %v2419 = vpop.xlane.xlu0 %2418
    %v2420 = vsel %vm453, %v2404, 0.0
    %2421 = vadd.xlane.f32.xlu0 %v2420
    %v2422 = vpop.xlane.xlu0 %2421
    %v2423 = vsel %vm453, %v2406, 0.0
    %2424 = vadd.xlane.f32.xlu0 %v2423
    %v2425 = vpop.xlane.xlu0 %2424
    %v2426 = vsel %vm453, %v2408, 0.0
    %2427 = vadd.xlane.f32.xlu0 %v2426
    %v2428 = vpop.xlane.xlu0 %2427
    %v2429 = vsel %vm453, %v2410, 0.0
    %2430 = vadd.xlane.f32.xlu0 %v2429
    %v2431 = vpop.xlane.xlu0 %2430
    %v2432 = vsel %vm453, %v2412, 0.0
    %2433 = vadd.xlane.f32.xlu0 %v2432
    %v2434 = vpop.xlane.xlu0 %2433
    %v2435 = vsel %vm453, %v2414, 0.0
    %2436 = vadd.xlane.f32.xlu0 %v2435
    %v2437 = vpop.xlane.xlu0 %2436
    %v2438 = vsel %vm453, %v2416, 0.0
    %2439 = vadd.xlane.f32.xlu0 %v2438
    %v2440 = vpop.xlane.xlu0 %2439
    %v2441 = vrcp.pop %v2419
    %v2442 = vrcp.pop %v2422
    %v2443 = vrcp.pop %v2425
    %v2444 = vrcp.pop %v2428
    %v2445 = vrcp.pop %v2431
    %v2446 = vrcp.pop %v2434
    %v2447 = vrcp.pop %v2437
    %v2448 = vrcp.pop %v2440
    %v2449 = vmul.f32 %v2402, %v2441
    %v2450 = vmul.f32 %v2404, %v2442
    %v2451 = vmul.f32 %v2406, %v2443
    %v2452 = vmul.f32 %v2408, %v2444
    %v2453 = vmul.f32 %v2410, %v2445
    %v2454 = vmul.f32 %v2412, %v2446
    %v2455 = vmul.f32 %v2414, %v2447
    %v2456 = vmul.f32 %v2416, %v2448
    %v2457 = vpack.c.bf16 %v2450, %v2449
    %v2458 = vpack.c.bf16 %v2452, %v2451
    %v2459 = vpack.c.bf16 %v2454, %v2453
    %v2460 = vpack.c.bf16 %v2456, %v2455
    %2461 = vst.msk [vmem:[#allocation2 + $0x8] sm:$0xff] %vm453, %v2457
    %2462 = vst.msk [vmem:[#allocation2 + $0x18] sm:$0xff] %vm453, %v2458
    %2463 = vst.msk [vmem:[#allocation2 + $0x28] sm:$0xff] %vm453, %v2459
    %2464 = vst.msk [vmem:[#allocation2 + $0x38] sm:$0xff] %vm453, %v2460
    %v2465 = vpack.c.bf16 %v1721, %v1717
    %v2466 = vpack.c.bf16 %v1731, %v1727
    %v2467 = vpack.c.bf16 %v1741, %v1737
    %v2468 = vpack.c.bf16 %v1751, %v1747
    %2469 = vst [vmem:[#allocation3 + $0x40] sm:$0xff] %v2465
    %2470 = vst [vmem:[#allocation3 + $0x48] sm:$0xff] %v2466
    %2471 = vst [vmem:[#allocation3 + $0x50] sm:$0xff] %v2467
    %2472 = vst [vmem:[#allocation3 + $0x58] sm:$0xff] %v2468
    %v2473 = vld [vmem:[%s8 + $0x3] sm:$0x1]
    %v2474 = vlaneseq
    %v2475 = vshrl.u32 %v2474, 7
    %v2476 = vsub.s32 0, %v2475
    %v2477 = vrot.slane %v2473, %v2476
    %v2478 = vmul.f32 %v1719, %v2477
    %v2479 = vmul.f32 %v1723, %v2477
    %v2480 = vmul.f32 %v1729, %v2477
    %v2481 = vmul.f32 %v1733, %v2477
    %v2482 = vmul.f32 %v1739, %v2477
    %v2483 = vmul.f32 %v1743, %v2477
    %v2484 = vmul.f32 %v1749, %v2477
    %v2485 = vmul.f32 %v1753, %v2477
    %2486 = vadd.xlane.f32.xlu0 %v2478
    %v2487 = vpop.xlane.xlu0 %2486
    %2488 = vadd.xlane.f32.xlu0 %v2479
    %v2489 = vpop.xlane.xlu0 %2488
    %2490 = vadd.xlane.f32.xlu0 %v2480
    %v2491 = vpop.xlane.xlu0 %2490
    %2492 = vadd.xlane.f32.xlu0 %v2481
    %v2493 = vpop.xlane.xlu0 %2492
    %2494 = vadd.xlane.f32.xlu0 %v2482
    %v2495 = vpop.xlane.xlu0 %2494
    %2496 = vadd.xlane.f32.xlu0 %v2483
    %v2497 = vpop.xlane.xlu0 %2496
    %2498 = vadd.xlane.f32.xlu0 %v2484
    %v2499 = vpop.xlane.xlu0 %2498
    %2500 = vadd.xlane.f32.xlu0 %v2485
    %v2501 = vpop.xlane.xlu0 %2500
    %v2502 = vld [vmem:[%s7 + $0x3] sm:$0x1]
    %v2503 = vlaneseq
    %v2504 = vshrl.u32 %v2503, 7
    %v2505 = vsub.s32 0, %v2504
    %v2506 = vrot.slane %v2502, %v2505
    %v2507 = vmul.f32 %v1719, %v2506
    %v2508 = vmul.f32 %v1723, %v2506
    %v2509 = vmul.f32 %v1729, %v2506
    %v2510 = vmul.f32 %v1733, %v2506
    %v2511 = vmul.f32 %v1739, %v2506
    %v2512 = vmul.f32 %v1743, %v2506
    %v2513 = vmul.f32 %v1749, %v2506
    %v2514 = vmul.f32 %v1753, %v2506
    %2515 = vadd.xlane.f32.xlu0 %v2507
    %v2516 = vpop.xlane.xlu0 %2515
    %2517 = vadd.xlane.f32.xlu0 %v2508
    %v2518 = vpop.xlane.xlu0 %2517
    %2519 = vadd.xlane.f32.xlu0 %v2509
    %v2520 = vpop.xlane.xlu0 %2519
    %2521 = vadd.xlane.f32.xlu0 %v2510
    %v2522 = vpop.xlane.xlu0 %2521
    %2523 = vadd.xlane.f32.xlu0 %v2511
    %v2524 = vpop.xlane.xlu0 %2523
    %2525 = vadd.xlane.f32.xlu0 %v2512
    %v2526 = vpop.xlane.xlu0 %2525
    %2527 = vadd.xlane.f32.xlu0 %v2513
    %v2528 = vpop.xlane.xlu0 %2527
    %2529 = vadd.xlane.f32.xlu0 %v2514
    %v2530 = vpop.xlane.xlu0 %2529
    %2531 = vxpose.xlu0.b32.start [1/16] %v2516, 128
    %2532 = vxpose.xlu0.b32.cont [2/16] %v2518, 128
    %2533 = vxpose.xlu0.b32.cont [3/16] %v2520, 128
    %2534 = vxpose.xlu0.b32.cont [4/16] %v2522, 128
    %2535 = vxpose.xlu0.b32.cont [5/16] %v2524, 128
    %2536 = vxpose.xlu0.b32.cont [6/16] %v2526, 128
    %2537 = vxpose.xlu0.b32.cont [7/16] %v2528, 128
    %2538 = vxpose.xlu0.b32.cont [8/16] %v2530, 128
    %2539 = vxpose.xlu0.b32.cont [9/16] 0.0, 128
    %2540 = vxpose.xlu0.b32.cont [10/16] 0.0, 128
    %2541 = vxpose.xlu0.b32.cont [11/16] 0.0, 128
    %2542 = vxpose.xlu0.b32.cont [12/16] 0.0, 128
    %2543 = vxpose.xlu0.b32.cont [13/16] 0.0, 128
    %2544 = vxpose.xlu0.b32.cont [14/16] 0.0, 128
    %2545 = vxpose.xlu0.b32.cont [15/16] 0.0, 128
    %2546 = vxpose.xlu0.b32.end [16/16] 0.0, 128
    %v2547 = vpop.trf.xlu0
    %v2548 = vpop.trf.xlu0
    %v2549 = vpop.trf.xlu0
    %v2550 = vpop.trf.xlu0
    %v2551 = vpop.trf.xlu0
    %v2552 = vpop.trf.xlu0
    %v2553 = vpop.trf.xlu0
    %v2554 = vpop.trf.xlu0
    %v2555 = vpop.trf.xlu0
    %v2556 = vpop.trf.xlu0
    %v2557 = vpop.trf.xlu0
    %v2558 = vpop.trf.xlu0
    %v2559 = vpop.trf.xlu0
    %v2560 = vpop.trf.xlu0
    %v2561 = vpop.trf.xlu0
    %v2562 = vpop.trf.xlu0
    %v2563 = vadd.f32 %v2487, %v2547
    %v2564 = vadd.f32 %v2489, %v2548
    %v2565 = vadd.f32 %v2491, %v2549
    %v2566 = vadd.f32 %v2493, %v2550
    %v2567 = vadd.f32 %v2495, %v2551
    %v2568 = vadd.f32 %v2497, %v2552
    %v2569 = vadd.f32 %v2499, %v2553
    %v2570 = vadd.f32 %v2501, %v2554
    %vm2571 = vcmp.ge.f32.partialorder %v2563, 0.0
    %vm2572 = vcmp.ge.f32.partialorder %v2564, 0.0
    %vm2573 = vcmp.ge.f32.partialorder %v2565, 0.0
    %vm2574 = vcmp.ge.f32.partialorder %v2566, 0.0
    %vm2575 = vcmp.ge.f32.partialorder %v2567, 0.0
    %vm2576 = vcmp.ge.f32.partialorder %v2568, 0.0
    %vm2577 = vcmp.ge.f32.partialorder %v2569, 0.0
    %vm2578 = vcmp.ge.f32.partialorder %v2570, 0.0
    %v2579 = vmul.f32 %v2563, 0.2
    %v2580 = vmul.f32 %v2564, 0.2
    %v2581 = vmul.f32 %v2565, 0.2
    %v2582 = vmul.f32 %v2566, 0.2
    %v2583 = vmul.f32 %v2567, 0.2
    %v2584 = vmul.f32 %v2568, 0.2
    %v2585 = vmul.f32 %v2569, 0.2
    %v2586 = vmul.f32 %v2570, 0.2
    %v2587 = vsel %vm2571, %v2563, %v2579
    %v2588 = vsel %vm2572, %v2564, %v2580
    %v2589 = vsel %vm2573, %v2565, %v2581
    %v2590 = vsel %vm2574, %v2566, %v2582
    %v2591 = vsel %vm2575, %v2567, %v2583
    %v2592 = vsel %vm2576, %v2568, %v2584
    %v2593 = vsel %vm2577, %v2569, %v2585
    %v2594 = vsel %vm2578, %v2570, %v2586
    %v2595 = vadd.f32 %v2587, %v87
    %v2596 = vadd.f32 %v2588, %v88
    %v2597 = vadd.f32 %v2589, %v89
    %v2598 = vadd.f32 %v2590, %v90
    %v2599 = vadd.f32 %v2591, %v91
    %v2600 = vadd.f32 %v2592, %v92
    %v2601 = vadd.f32 %v2593, %v93
    %v2602 = vadd.f32 %v2594, %v94
    %v2603 = vsel %vm453, %v2595, -inf
    %2604 = vmax.xlane.f32.xlu0 %v2603
    %v2605 = vpop.xlane.xlu0 %2604
    %v2606 = vsel %vm453, %v2596, -inf
    %2607 = vmax.xlane.f32.xlu0 %v2606
    %v2608 = vpop.xlane.xlu0 %2607
    %v2609 = vsel %vm453, %v2597, -inf
    %2610 = vmax.xlane.f32.xlu0 %v2609
    %v2611 = vpop.xlane.xlu0 %2610
    %v2612 = vsel %vm453, %v2598, -inf
    %2613 = vmax.xlane.f32.xlu0 %v2612
    %v2614 = vpop.xlane.xlu0 %2613
    %v2615 = vsel %vm453, %v2599, -inf
    %2616 = vmax.xlane.f32.xlu0 %v2615
    %v2617 = vpop.xlane.xlu0 %2616
    %v2618 = vsel %vm453, %v2600, -inf
    %2619 = vmax.xlane.f32.xlu0 %v2618
    %v2620 = vpop.xlane.xlu0 %2619
    %v2621 = vsel %vm453, %v2601, -inf
    %2622 = vmax.xlane.f32.xlu0 %v2621
    %v2623 = vpop.xlane.xlu0 %2622
    %v2624 = vsel %vm453, %v2602, -inf
    %2625 = vmax.xlane.f32.xlu0 %v2624
    %v2626 = vpop.xlane.xlu0 %2625
    %v2627 = vsub.f32 %v2595, %v2605
    %v2628 = vsub.f32 %v2596, %v2608
    %v2629 = vsub.f32 %v2597, %v2611
    %v2630 = vsub.f32 %v2598, %v2614
    %v2631 = vsub.f32 %v2599, %v2617
    %v2632 = vsub.f32 %v2600, %v2620
    %v2633 = vsub.f32 %v2601, %v2623
    %v2634 = vsub.f32 %v2602, %v2626
    %v2635 = vmul.f32 %v2627, 1.442695
    %v2636 = vpow.pop %v2635
    %v2637 = vmul.f32 %v2628, 1.442695
    %v2638 = vpow.pop %v2637
    %v2639 = vmul.f32 %v2629, 1.442695
    %v2640 = vpow.pop %v2639
    %v2641 = vmul.f32 %v2630, 1.442695
    %v2642 = vpow.pop %v2641
    %v2643 = vmul.f32 %v2631, 1.442695
    %v2644 = vpow.pop %v2643
    %v2645 = vmul.f32 %v2632, 1.442695
    %v2646 = vpow.pop %v2645
    %v2647 = vmul.f32 %v2633, 1.442695
    %v2648 = vpow.pop %v2647
    %v2649 = vmul.f32 %v2634, 1.442695
    %v2650 = vpow.pop %v2649
    %v2651 = vsel %vm453, %v2636, 0.0
    %2652 = vadd.xlane.f32.xlu0 %v2651
    %v2653 = vpop.xlane.xlu0 %2652
    %v2654 = vsel %vm453, %v2638, 0.0
    %2655 = vadd.xlane.f32.xlu0 %v2654
    %v2656 = vpop.xlane.xlu0 %2655
    %v2657 = vsel %vm453, %v2640, 0.0
    %2658 = vadd.xlane.f32.xlu0 %v2657
    %v2659 = vpop.xlane.xlu0 %2658
    %v2660 = vsel %vm453, %v2642, 0.0
    %2661 = vadd.xlane.f32.xlu0 %v2660
    %v2662 = vpop.xlane.xlu0 %2661
    %v2663 = vsel %vm453, %v2644, 0.0
    %2664 = vadd.xlane.f32.xlu0 %v2663
    %v2665 = vpop.xlane.xlu0 %2664
    %v2666 = vsel %vm453, %v2646, 0.0
    %2667 = vadd.xlane.f32.xlu0 %v2666
    %v2668 = vpop.xlane.xlu0 %2667
    %v2669 = vsel %vm453, %v2648, 0.0
    %2670 = vadd.xlane.f32.xlu0 %v2669
    %v2671 = vpop.xlane.xlu0 %2670
    %v2672 = vsel %vm453, %v2650, 0.0
    %2673 = vadd.xlane.f32.xlu0 %v2672
    %v2674 = vpop.xlane.xlu0 %2673
    %v2675 = vrcp.pop %v2653
    %v2676 = vrcp.pop %v2656
    %v2677 = vrcp.pop %v2659
    %v2678 = vrcp.pop %v2662
    %v2679 = vrcp.pop %v2665
    %v2680 = vrcp.pop %v2668
    %v2681 = vrcp.pop %v2671
    %v2682 = vrcp.pop %v2674
    %v2683 = vmul.f32 %v2636, %v2675
    %v2684 = vmul.f32 %v2638, %v2676
    %v2685 = vmul.f32 %v2640, %v2677
    %v2686 = vmul.f32 %v2642, %v2678
    %v2687 = vmul.f32 %v2644, %v2679
    %v2688 = vmul.f32 %v2646, %v2680
    %v2689 = vmul.f32 %v2648, %v2681
    %v2690 = vmul.f32 %v2650, %v2682
    %v2691 = vpack.c.bf16 %v2684, %v2683
    %v2692 = vpack.c.bf16 %v2686, %v2685
    %v2693 = vpack.c.bf16 %v2688, %v2687
    %v2694 = vpack.c.bf16 %v2690, %v2689
    %2699 = vrot.lane.b32.xlu0 %v2691, 64
    %v2700 = vpop.permute.xlu0 %2699
    %2701 = vrot.lane.b32.xlu0 %v2692, 64
    %v2702 = vpop.permute.xlu0 %2701
    %2703 = vrot.lane.b32.xlu0 %v2693, 64
    %v2704 = vpop.permute.xlu0 %2703
    %2705 = vrot.lane.b32.xlu0 %v2694, 64
    %v2706 = vpop.permute.xlu0 %2705
    %2711 = vst.msk [vmem:[#allocation2 + $0x8] sm:$0xff] %vm796, %v2700
    %2712 = vst.msk [vmem:[#allocation2 + $0x18] sm:$0xff] %vm796, %v2702
    %2713 = vst.msk [vmem:[#allocation2 + $0x28] sm:$0xff] %vm796, %v2704
    %2714 = vst.msk [vmem:[#allocation2 + $0x38] sm:$0xff] %vm796, %v2706
    %v2715 = vpack.c.bf16 %v1723, %v1719
    %v2716 = vpack.c.bf16 %v1733, %v1729
    %v2717 = vpack.c.bf16 %v1743, %v1739
    %v2718 = vpack.c.bf16 %v1753, %v1749
    %2719 = vst [vmem:[#allocation3 + $0x60] sm:$0xff] %v2715
    %2720 = vst [vmem:[#allocation3 + $0x68] sm:$0xff] %v2716
    %2721 = vst [vmem:[#allocation3 + $0x70] sm:$0xff] %v2717
    %2722 = vst [vmem:[#allocation3 + $0x78] sm:$0xff] %v2718
    %v2723 = vld [vmem:[#allocation2] sm:$0xff]
    %v2724 = vld [vmem:[#allocation2 + $0x8] sm:$0xff]
    %v2725 = vld [vmem:[#allocation2 + $0x10] sm:$0xff]
    %v2726 = vld [vmem:[#allocation2 + $0x18] sm:$0xff]
    %v2727 = vld [vmem:[#allocation2 + $0x20] sm:$0xff]
    %v2728 = vld [vmem:[#allocation2 + $0x28] sm:$0xff]
    %v2729 = vld [vmem:[#allocation2 + $0x30] sm:$0xff]
    %v2730 = vld [vmem:[#allocation2 + $0x38] sm:$0xff]
    %v2731 = vld [vmem:[#allocation3] sm:$0xff]
    %v2732 = vld [vmem:[#allocation3 + $0x8] sm:$0xff]
    %v2733 = vld [vmem:[#allocation3 + $0x10] sm:$0xff]
    %v2734 = vld [vmem:[#allocation3 + $0x18] sm:$0xff]
    %v2735 = vld [vmem:[#allocation3 + $0x20] sm:$0xff]
    %v2736 = vld [vmem:[#allocation3 + $0x28] sm:$0xff]
    %v2737 = vld [vmem:[#allocation3 + $0x30] sm:$0xff]
    %v2738 = vld [vmem:[#allocation3 + $0x38] sm:$0xff]
    %v2739 = vld [vmem:[#allocation3 + $0x40] sm:$0xff]
    %v2740 = vld [vmem:[#allocation3 + $0x48] sm:$0xff]
    %v2741 = vld [vmem:[#allocation3 + $0x50] sm:$0xff]
    %v2742 = vld [vmem:[#allocation3 + $0x58] sm:$0xff]
    %v2743 = vld [vmem:[#allocation3 + $0x60] sm:$0xff]
    %v2744 = vld [vmem:[#allocation3 + $0x68] sm:$0xff]
    %v2745 = vld [vmem:[#allocation3 + $0x70] sm:$0xff]
    %v2746 = vld [vmem:[#allocation3 + $0x78] sm:$0xff]
    %2747 = vmatprep.subr.bf16.mxu0 0
    %2748 = vmatpush1.bf16.msra.mxu0 %v2731
    %2749 = vmatprep.subr.bf16.mxu0 0
    %2750 = vmatpush1.bf16.msra.mxu0 %v2732
    %2751 = vmatprep.subr.bf16.mxu0 0
    %2752 = vmatpush1.bf16.msra.mxu0 %v2733
    %2753 = vmatprep.subr.bf16.mxu0 0
    %2754 = vmatpush1.bf16.msra.mxu0 %v2734
    %2755 = vmatprep.subr.bf16.mxu0 0
    %2756 = vmatpush1.bf16.msra.mxu0 %v2735
    %2757 = vmatprep.subr.bf16.mxu0 0
    %2758 = vmatpush1.bf16.msra.mxu0 %v2736
    %2759 = vmatprep.subr.bf16.mxu0 0
    %2760 = vmatpush1.bf16.msra.mxu0 %v2737
    %2761 = vmatprep.subr.bf16.mxu0 0
    %2762 = vmatpush1.bf16.msra.mxu0 %v2738
    %2763 = vmatprep.subr.bf16.mxu0 0
    %2764 = vmatpush1.bf16.msra.mxu0 %v2739
    %2765 = vmatprep.subr.bf16.mxu0 0
    %2766 = vmatpush1.bf16.msra.mxu0 %v2740
    %2767 = vmatprep.subr.bf16.mxu0 0
    %2768 = vmatpush1.bf16.msra.mxu0 %v2741
    %2769 = vmatprep.subr.bf16.mxu0 0
    %2770 = vmatpush1.bf16.msra.mxu0 %v2742
    %2771 = vmatprep.subr.bf16.mxu0 0
    %2772 = vmatpush1.bf16.msra.mxu0 %v2743
    %2773 = vmatprep.subr.bf16.mxu0 0
    %2774 = vmatpush1.bf16.msra.mxu0 %v2744
    %2775 = vmatprep.subr.bf16.mxu0 0
    %2776 = vmatpush1.bf16.msra.mxu0 %v2745
    %2777 = vmatprep.subr.bf16.mxu0 0
    %2778 = vmatpush1.bf16.msra.mxu0 %v2746
    %2779 = vmatprep.mubr.bf16.mxu0 %v2724
    %2780 = vmatmul.mubr.bf16.gmra.mrb[0].mxu0 %v2723
    %v2781 = vpop.f32.mrb[0].mxu0
    %v2782 = vadd.f32 0.0, %v2781
    %v2783 = vpop.f32.mrb[0].mxu0
    %v2784 = vpop.f32.mrb[0].mxu0
    %v2785 = vadd.f32 0.0, %v2784
    %v2786 = vpop.f32.mrb[0].mxu0
    %2787 = vmatprep.mubr.bf16.mxu0 %v2726
    %2788 = vmatmul.mubr.bf16.gmra.mrb[0].mxu0 %v2725
    %v2789 = vpop.f32.mrb[0].mxu0
    %v2790 = vadd.f32 0.0, %v2789
    %v2791 = vpop.f32.mrb[0].mxu0
    %v2792 = vpop.f32.mrb[0].mxu0
    %v2793 = vadd.f32 0.0, %v2792
    %v2794 = vpop.f32.mrb[0].mxu0
    %2795 = vmatprep.mubr.bf16.mxu0 %v2728
    %2796 = vmatmul.mubr.bf16.gmra.mrb[0].mxu0 %v2727
    %v2797 = vpop.f32.mrb[0].mxu0
    %v2798 = vadd.f32 0.0, %v2797
    %v2799 = vpop.f32.mrb[0].mxu0
    %v2800 = vpop.f32.mrb[0].mxu0
    %v2801 = vadd.f32 0.0, %v2800
    %v2802 = vpop.f32.mrb[0].mxu0
    %2803 = vmatprep.mubr.bf16.mxu0 %v2730
    %2804 = vmatmul.mubr.bf16.gmra.mrb[0].mxu0 %v2729
    %v2805 = vpop.f32.mrb[0].mxu0
    %v2806 = vadd.f32 0.0, %v2805
    %v2807 = vpop.f32.mrb[0].mxu0
    %v2808 = vpop.f32.mrb[0].mxu0
    %v2809 = vadd.f32 0.0, %v2808
    %v2810 = vpop.f32.mrb[0].mxu0
    %2811 = vdwg.mxu0
    %v2812 = vmul.f32 %v2782, 0.25
    %v2813 = vmul.f32 %v2785, 0.25
    %v2814 = vmul.f32 %v2790, 0.25
    %v2815 = vmul.f32 %v2793, 0.25
    %v2816 = vmul.f32 %v2798, 0.25
    %v2817 = vmul.f32 %v2801, 0.25
    %v2818 = vmul.f32 %v2806, 0.25
    %v2819 = vmul.f32 %v2809, 0.25
    %v2820 = vld [vmem:[%s9] sm:$0x1]
    %v2822 = vlaneseq
    %v2823 = vshrl.u32 %v2822, 7
    %v2824 = vsub.s32 0, %v2823
    %v2825 = vrot.slane %v2820, %v2824
    %v2827 = vadd.f32 %v2812, %v2825
    %v2828 = vadd.f32 %v2813, %v2825
    %v2829 = vadd.f32 %v2814, %v2825
    %v2830 = vadd.f32 %v2815, %v2825
    %v2831 = vadd.f32 %v2816, %v2825
    %v2832 = vadd.f32 %v2817, %v2825
    %v2833 = vadd.f32 %v2818, %v2825
    %v2834 = vadd.f32 %v2819, %v2825
    %v2835 = vmax.f32 %v2827, 0.0
    %v2836 = vmax.f32 %v2828, 0.0
    %v2837 = vmax.f32 %v2829, 0.0
    %v2838 = vmax.f32 %v2830, 0.0
    %v2839 = vmax.f32 %v2831, 0.0
    %v2840 = vmax.f32 %v2832, 0.0
    %v2841 = vmax.f32 %v2833, 0.0
    %v2842 = vmax.f32 %v2834, 0.0
    %v2843 = vld [vmem:[%s10] sm:$0x1]
    %v2844 = vlaneseq
    %v2845 = vshrl.u32 %v2844, 7
    %v2846 = vsub.s32 0, %v2845
    %v2847 = vrot.slane %v2843, %v2846
    %v2848 = vmul.f32 %v2835, %v2847
    %v2849 = vmul.f32 %v2836, %v2847
    %v2850 = vmul.f32 %v2837, %v2847
    %v2851 = vmul.f32 %v2838, %v2847
    %v2852 = vmul.f32 %v2839, %v2847
    %v2853 = vmul.f32 %v2840, %v2847
    %v2854 = vmul.f32 %v2841, %v2847
    %v2855 = vmul.f32 %v2842, %v2847
    %2856 = vadd.xlane.f32.xlu0 %v2848
    %v2857 = vpop.xlane.xlu0 %2856
    %2858 = vadd.xlane.f32.xlu0 %v2849
    %v2859 = vpop.xlane.xlu0 %2858
    %2860 = vadd.xlane.f32.xlu0 %v2850
    %v2861 = vpop.xlane.xlu0 %2860
    %2862 = vadd.xlane.f32.xlu0 %v2851
    %v2863 = vpop.xlane.xlu0 %2862
    %2864 = vadd.xlane.f32.xlu0 %v2852
    %v2865 = vpop.xlane.xlu0 %2864
    %2866 = vadd.xlane.f32.xlu0 %v2853
    %v2867 = vpop.xlane.xlu0 %2866
    %2868 = vadd.xlane.f32.xlu0 %v2854
    %v2869 = vpop.xlane.xlu0 %2868
    %2870 = vadd.xlane.f32.xlu0 %v2855
    %v2871 = vpop.xlane.xlu0 %2870
    %2872 = vxpose.xlu0.b32.start [1/16] %v2857, 128
    %2873 = vxpose.xlu0.b32.cont [2/16] %v2859, 128
    %2874 = vxpose.xlu0.b32.cont [3/16] %v2861, 128
    %2875 = vxpose.xlu0.b32.cont [4/16] %v2863, 128
    %2876 = vxpose.xlu0.b32.cont [5/16] %v2865, 128
    %2877 = vxpose.xlu0.b32.cont [6/16] %v2867, 128
    %2878 = vxpose.xlu0.b32.cont [7/16] %v2869, 128
    %2879 = vxpose.xlu0.b32.cont [8/16] %v2871, 128
    %2880 = vxpose.xlu0.b32.cont [9/16] 0.0, 128
    %2881 = vxpose.xlu0.b32.cont [10/16] 0.0, 128
    %2882 = vxpose.xlu0.b32.cont [11/16] 0.0, 128
    %2883 = vxpose.xlu0.b32.cont [12/16] 0.0, 128
    %2884 = vxpose.xlu0.b32.cont [13/16] 0.0, 128
    %2885 = vxpose.xlu0.b32.cont [14/16] 0.0, 128
    %2886 = vxpose.xlu0.b32.cont [15/16] 0.0, 128
    %2887 = vxpose.xlu0.b32.end [16/16] 0.0, 128
    %v2888 = vpop.trf.xlu0
    %v2889 = vpop.trf.xlu0
    %v2890 = vpop.trf.xlu0
    %v2891 = vpop.trf.xlu0
    %v2892 = vpop.trf.xlu0
    %v2893 = vpop.trf.xlu0
    %v2894 = vpop.trf.xlu0
    %v2895 = vpop.trf.xlu0
    %v2896 = vpop.trf.xlu0
    %v2897 = vpop.trf.xlu0
    %v2898 = vpop.trf.xlu0
    %v2899 = vpop.trf.xlu0
    %v2900 = vpop.trf.xlu0
    %v2901 = vpop.trf.xlu0
    %v2902 = vpop.trf.xlu0
    %v2903 = vpop.trf.xlu0
    %s2904 = sld [smem:[#allocation10 + $0x80]]
    %v2905 = vstv %s2904
    %v2906 = vmul.f32 %v2905, %v2857
    %v2907 = vmul.f32 %v2905, %v2859
    %v2908 = vmul.f32 %v2905, %v2861
    %v2909 = vmul.f32 %v2905, %v2863
    %v2910 = vmul.f32 %v2905, %v2865
    %v2911 = vmul.f32 %v2905, %v2867
    %v2912 = vmul.f32 %v2905, %v2869
    %v2913 = vmul.f32 %v2905, %v2871
    %s2914 = sld [smem:[#allocation10]]
    %v2915 = vstv %s2914
    %v2916 = vmul.f32 %v2915, %v2888
    %v2917 = vmul.f32 %v2915, %v2889
    %v2918 = vmul.f32 %v2915, %v2890
    %v2919 = vmul.f32 %v2915, %v2891
    %v2920 = vmul.f32 %v2915, %v2892
    %v2921 = vmul.f32 %v2915, %v2893
    %v2922 = vmul.f32 %v2915, %v2894
    %v2923 = vmul.f32 %v2915, %v2895
    %v2924 = vadd.f32 %v2906, %v2916
    %v2925 = vadd.f32 %v2907, %v2917
    %v2926 = vadd.f32 %v2908, %v2918
    %v2927 = vadd.f32 %v2909, %v2919
    %v2928 = vadd.f32 %v2910, %v2920
    %v2929 = vadd.f32 %v2911, %v2921
    %v2930 = vadd.f32 %v2912, %v2922
    %v2931 = vadd.f32 %v2913, %v2923
    %vm2932 = vcmp.ge.f32.partialorder %v2924, 0.0
    %vm2933 = vcmp.ge.f32.partialorder %v2925, 0.0
    %vm2934 = vcmp.ge.f32.partialorder %v2926, 0.0
    %vm2935 = vcmp.ge.f32.partialorder %v2927, 0.0
    %vm2936 = vcmp.ge.f32.partialorder %v2928, 0.0
    %vm2937 = vcmp.ge.f32.partialorder %v2929, 0.0
    %vm2938 = vcmp.ge.f32.partialorder %v2930, 0.0
    %vm2939 = vcmp.ge.f32.partialorder %v2931, 0.0
    %v2940 = vmul.f32 %v2924, 0.2
    %v2941 = vmul.f32 %v2925, 0.2
    %v2942 = vmul.f32 %v2926, 0.2
    %v2943 = vmul.f32 %v2927, 0.2
    %v2944 = vmul.f32 %v2928, 0.2
    %v2945 = vmul.f32 %v2929, 0.2
    %v2946 = vmul.f32 %v2930, 0.2
    %v2947 = vmul.f32 %v2931, 0.2
    %v2948 = vsel %vm2932, %v2924, %v2940
    %v2949 = vsel %vm2933, %v2925, %v2941
    %v2950 = vsel %vm2934, %v2926, %v2942
    %v2951 = vsel %vm2935, %v2927, %v2943
    %v2952 = vsel %vm2936, %v2928, %v2944
    %v2953 = vsel %vm2937, %v2929, %v2945
    %v2954 = vsel %vm2938, %v2930, %v2946
    %v2955 = vsel %vm2939, %v2931, %v2947
    %v2956 = vadd.f32 %v2948, %v87
    %v2957 = vadd.f32 %v2949, %v88
    %v2958 = vadd.f32 %v2950, %v89
    %v2959 = vadd.f32 %v2951, %v90
    %v2960 = vadd.f32 %v2952, %v91
    %v2961 = vadd.f32 %v2953, %v92
    %v2962 = vadd.f32 %v2954, %v93
    %v2963 = vadd.f32 %v2955, %v94
    %v2964 = vsel %vm453, %v2956, -inf
    %2965 = vmax.xlane.f32.xlu0 %v2964
    %v2966 = vpop.xlane.xlu0 %2965
    %v2967 = vsel %vm453, %v2957, -inf
    %2968 = vmax.xlane.f32.xlu0 %v2967
    %v2969 = vpop.xlane.xlu0 %2968
    %v2970 = vsel %vm453, %v2958, -inf
    %2971 = vmax.xlane.f32.xlu0 %v2970
    %v2972 = vpop.xlane.xlu0 %2971
    %v2973 = vsel %vm453, %v2959, -inf
    %2974 = vmax.xlane.f32.xlu0 %v2973
    %v2975 = vpop.xlane.xlu0 %2974
    %v2976 = vsel %vm453, %v2960, -inf
    %2977 = vmax.xlane.f32.xlu0 %v2976
    %v2978 = vpop.xlane.xlu0 %2977
    %v2979 = vsel %vm453, %v2961, -inf
    %2980 = vmax.xlane.f32.xlu0 %v2979
    %v2981 = vpop.xlane.xlu0 %2980
    %v2982 = vsel %vm453, %v2962, -inf
    %2983 = vmax.xlane.f32.xlu0 %v2982
    %v2984 = vpop.xlane.xlu0 %2983
    %v2985 = vsel %vm453, %v2963, -inf
    %2986 = vmax.xlane.f32.xlu0 %v2985
    %v2987 = vpop.xlane.xlu0 %2986
    %v2988 = vsub.f32 %v2956, %v2966
    %v2989 = vsub.f32 %v2957, %v2969
    %v2990 = vsub.f32 %v2958, %v2972
    %v2991 = vsub.f32 %v2959, %v2975
    %v2992 = vsub.f32 %v2960, %v2978
    %v2993 = vsub.f32 %v2961, %v2981
    %v2994 = vsub.f32 %v2962, %v2984
    %v2995 = vsub.f32 %v2963, %v2987
    %v2996 = vmul.f32 %v2988, 1.442695
    %v2997 = vpow.pop %v2996
    %v2998 = vmul.f32 %v2989, 1.442695
    %v2999 = vpow.pop %v2998
    %v3000 = vmul.f32 %v2990, 1.442695
    %v3001 = vpow.pop %v3000
    %v3002 = vmul.f32 %v2991, 1.442695
    %v3003 = vpow.pop %v3002
    %v3004 = vmul.f32 %v2992, 1.442695
    %v3005 = vpow.pop %v3004
    %v3006 = vmul.f32 %v2993, 1.442695
    %v3007 = vpow.pop %v3006
    %v3008 = vmul.f32 %v2994, 1.442695
    %v3009 = vpow.pop %v3008
    %v3010 = vmul.f32 %v2995, 1.442695
    %v3011 = vpow.pop %v3010
    %v3012 = vsel %vm453, %v2997, 0.0
    %3013 = vadd.xlane.f32.xlu0 %v3012
    %v3014 = vpop.xlane.xlu0 %3013
    %v3015 = vsel %vm453, %v2999, 0.0
    %3016 = vadd.xlane.f32.xlu0 %v3015
    %v3017 = vpop.xlane.xlu0 %3016
    %v3018 = vsel %vm453, %v3001, 0.0
    %3019 = vadd.xlane.f32.xlu0 %v3018
    %v3020 = vpop.xlane.xlu0 %3019
    %v3021 = vsel %vm453, %v3003, 0.0
    %3022 = vadd.xlane.f32.xlu0 %v3021
    %v3023 = vpop.xlane.xlu0 %3022
    %v3024 = vsel %vm453, %v3005, 0.0
    %3025 = vadd.xlane.f32.xlu0 %v3024
    %v3026 = vpop.xlane.xlu0 %3025
    %v3027 = vsel %vm453, %v3007, 0.0
    %3028 = vadd.xlane.f32.xlu0 %v3027
    %v3029 = vpop.xlane.xlu0 %3028
    %v3030 = vsel %vm453, %v3009, 0.0
    %3031 = vadd.xlane.f32.xlu0 %v3030
    %v3032 = vpop.xlane.xlu0 %3031
    %v3033 = vsel %vm453, %v3011, 0.0
    %3034 = vadd.xlane.f32.xlu0 %v3033
    %v3035 = vpop.xlane.xlu0 %3034
    %v3036 = vrcp.pop %v3014
    %v3037 = vrcp.pop %v3017
    %v3038 = vrcp.pop %v3020
    %v3039 = vrcp.pop %v3023
    %v3040 = vrcp.pop %v3026
    %v3041 = vrcp.pop %v3029
    %v3042 = vrcp.pop %v3032
    %v3043 = vrcp.pop %v3035
    %v3044 = vmul.f32 %v2997, %v3036
    %v3045 = vmul.f32 %v2999, %v3037
    %v3046 = vmul.f32 %v3001, %v3038
    %v3047 = vmul.f32 %v3003, %v3039
    %v3048 = vmul.f32 %v3005, %v3040
    %v3049 = vmul.f32 %v3007, %v3041
    %v3050 = vmul.f32 %v3009, %v3042
    %v3051 = vmul.f32 %v3011, %v3043
    %v3052 = vmul.f32 %v3044, %v2888
    %v3053 = vmul.f32 %v3045, %v2889
    %v3054 = vmul.f32 %v3046, %v2890
    %v3055 = vmul.f32 %v3047, %v2891
    %v3056 = vmul.f32 %v3048, %v2892
    %v3057 = vmul.f32 %v3049, %v2893
    %v3058 = vmul.f32 %v3050, %v2894
    %v3059 = vmul.f32 %v3051, %v2895
    %v3060 = vsel %vm453, %v3052, 0.0
    %3061 = vadd.xlane.f32.xlu0 %v3060
    %v3062 = vpop.xlane.xlu0 %3061
    %v3063 = vsel %vm453, %v3053, 0.0
    %3064 = vadd.xlane.f32.xlu0 %v3063
    %v3065 = vpop.xlane.xlu0 %3064
    %v3066 = vsel %vm453, %v3054, 0.0
    %3067 = vadd.xlane.f32.xlu0 %v3066
    %v3068 = vpop.xlane.xlu0 %3067
    %v3069 = vsel %vm453, %v3055, 0.0
    %3070 = vadd.xlane.f32.xlu0 %v3069
    %v3071 = vpop.xlane.xlu0 %3070
    %v3072 = vsel %vm453, %v3056, 0.0
    %3073 = vadd.xlane.f32.xlu0 %v3072
    %v3074 = vpop.xlane.xlu0 %3073
    %v3075 = vsel %vm453, %v3057, 0.0
    %3076 = vadd.xlane.f32.xlu0 %v3075
    %v3077 = vpop.xlane.xlu0 %3076
    %v3078 = vsel %vm453, %v3058, 0.0
    %3079 = vadd.xlane.f32.xlu0 %v3078
    %v3080 = vpop.xlane.xlu0 %3079
    %v3081 = vsel %vm453, %v3059, 0.0
    %3082 = vadd.xlane.f32.xlu0 %v3081
    %v3083 = vpop.xlane.xlu0 %3082
    %v3084 = vadd.f32 %v3062, 0.0
    %v3085 = vadd.f32 %v3065, 0.0
    %v3086 = vadd.f32 %v3068, 0.0
    %v3087 = vadd.f32 %v3071, 0.0
    %v3088 = vadd.f32 %v3074, 0.0
    %v3089 = vadd.f32 %v3077, 0.0
    %v3090 = vadd.f32 %v3080, 0.0
    %v3091 = vadd.f32 %v3083, 0.0
    %v3092 = vld [vmem:[%s10 + $0x1] sm:$0x1]
    %v3093 = vlaneseq
    %v3094 = vshrl.u32 %v3093, 7
    %v3095 = vsub.s32 0, %v3094
    %v3096 = vrot.slane %v3092, %v3095
    %v3097 = vmul.f32 %v2835, %v3096
    %v3098 = vmul.f32 %v2836, %v3096
    %v3099 = vmul.f32 %v2837, %v3096
    %v3100 = vmul.f32 %v2838, %v3096
    %v3101 = vmul.f32 %v2839, %v3096
    %v3102 = vmul.f32 %v2840, %v3096
    %v3103 = vmul.f32 %v2841, %v3096
    %v3104 = vmul.f32 %v2842, %v3096
    %3105 = vadd.xlane.f32.xlu0 %v3097
    %v3106 = vpop.xlane.xlu0 %3105
    %3107 = vadd.xlane.f32.xlu0 %v3098
    %v3108 = vpop.xlane.xlu0 %3107
    %3109 = vadd.xlane.f32.xlu0 %v3099
    %v3110 = vpop.xlane.xlu0 %3109
    %3111 = vadd.xlane.f32.xlu0 %v3100
    %v3112 = vpop.xlane.xlu0 %3111
    %3113 = vadd.xlane.f32.xlu0 %v3101
    %v3114 = vpop.xlane.xlu0 %3113
    %3115 = vadd.xlane.f32.xlu0 %v3102
    %v3116 = vpop.xlane.xlu0 %3115
    %3117 = vadd.xlane.f32.xlu0 %v3103
    %v3118 = vpop.xlane.xlu0 %3117
    %3119 = vadd.xlane.f32.xlu0 %v3104
    %v3120 = vpop.xlane.xlu0 %3119
    %3121 = vxpose.xlu0.b32.start [1/16] %v3106, 128
    %3122 = vxpose.xlu0.b32.cont [2/16] %v3108, 128
    %3123 = vxpose.xlu0.b32.cont [3/16] %v3110, 128
    %3124 = vxpose.xlu0.b32.cont [4/16] %v3112, 128
    %3125 = vxpose.xlu0.b32.cont [5/16] %v3114, 128
    %3126 = vxpose.xlu0.b32.cont [6/16] %v3116, 128
    %3127 = vxpose.xlu0.b32.cont [7/16] %v3118, 128
    %3128 = vxpose.xlu0.b32.cont [8/16] %v3120, 128
    %3129 = vxpose.xlu0.b32.cont [9/16] 0.0, 128
    %3130 = vxpose.xlu0.b32.cont [10/16] 0.0, 128
    %3131 = vxpose.xlu0.b32.cont [11/16] 0.0, 128
    %3132 = vxpose.xlu0.b32.cont [12/16] 0.0, 128
    %3133 = vxpose.xlu0.b32.cont [13/16] 0.0, 128
    %3134 = vxpose.xlu0.b32.cont [14/16] 0.0, 128
    %3135 = vxpose.xlu0.b32.cont [15/16] 0.0, 128
    %3136 = vxpose.xlu0.b32.end [16/16] 0.0, 128
    %v3137 = vpop.trf.xlu0
    %v3138 = vpop.trf.xlu0
    %v3139 = vpop.trf.xlu0
    %v3140 = vpop.trf.xlu0
    %v3141 = vpop.trf.xlu0
    %v3142 = vpop.trf.xlu0
    %v3143 = vpop.trf.xlu0
    %v3144 = vpop.trf.xlu0
    %v3145 = vpop.trf.xlu0
    %v3146 = vpop.trf.xlu0
    %v3147 = vpop.trf.xlu0
    %v3148 = vpop.trf.xlu0
    %v3149 = vpop.trf.xlu0
    %v3150 = vpop.trf.xlu0
    %v3151 = vpop.trf.xlu0
    %v3152 = vpop.trf.xlu0
    %s3153 = sld [smem:[#allocation10 + $0x81]]
    %v3154 = vstv %s3153
    %v3155 = vmul.f32 %v3154, %v3106
    %v3156 = vmul.f32 %v3154, %v3108
    %v3157 = vmul.f32 %v3154, %v3110
    %v3158 = vmul.f32 %v3154, %v3112
    %v3159 = vmul.f32 %v3154, %v3114
    %v3160 = vmul.f32 %v3154, %v3116
    %v3161 = vmul.f32 %v3154, %v3118
    %v3162 = vmul.f32 %v3154, %v3120
    %s3163 = sld [smem:[#allocation10 + $0x1]]
    %v3164 = vstv %s3163
    %v3165 = vmul.f32 %v3164, %v3137
    %v3166 = vmul.f32 %v3164, %v3138
    %v3167 = vmul.f32 %v3164, %v3139
    %v3168 = vmul.f32 %v3164, %v3140
    %v3169 = vmul.f32 %v3164, %v3141
    %v3170 = vmul.f32 %v3164, %v3142
    %v3171 = vmul.f32 %v3164, %v3143
    %v3172 = vmul.f32 %v3164, %v3144
    %v3173 = vadd.f32 %v3155, %v3165
    %v3174 = vadd.f32 %v3156, %v3166
    %v3175 = vadd.f32 %v3157, %v3167
    %v3176 = vadd.f32 %v3158, %v3168
    %v3177 = vadd.f32 %v3159, %v3169
    %v3178 = vadd.f32 %v3160, %v3170
    %v3179 = vadd.f32 %v3161, %v3171
    %v3180 = vadd.f32 %v3162, %v3172
    %vm3181 = vcmp.ge.f32.partialorder %v3173, 0.0
    %vm3182 = vcmp.ge.f32.partialorder %v3174, 0.0
    %vm3183 = vcmp.ge.f32.partialorder %v3175, 0.0
    %vm3184 = vcmp.ge.f32.partialorder %v3176, 0.0
    %vm3185 = vcmp.ge.f32.partialorder %v3177, 0.0
    %vm3186 = vcmp.ge.f32.partialorder %v3178, 0.0
    %vm3187 = vcmp.ge.f32.partialorder %v3179, 0.0
    %vm3188 = vcmp.ge.f32.partialorder %v3180, 0.0
    %v3189 = vmul.f32 %v3173, 0.2
    %v3190 = vmul.f32 %v3174, 0.2
    %v3191 = vmul.f32 %v3175, 0.2
    %v3192 = vmul.f32 %v3176, 0.2
    %v3193 = vmul.f32 %v3177, 0.2
    %v3194 = vmul.f32 %v3178, 0.2
    %v3195 = vmul.f32 %v3179, 0.2
    %v3196 = vmul.f32 %v3180, 0.2
    %v3197 = vsel %vm3181, %v3173, %v3189
    %v3198 = vsel %vm3182, %v3174, %v3190
    %v3199 = vsel %vm3183, %v3175, %v3191
    %v3200 = vsel %vm3184, %v3176, %v3192
    %v3201 = vsel %vm3185, %v3177, %v3193
    %v3202 = vsel %vm3186, %v3178, %v3194
    %v3203 = vsel %vm3187, %v3179, %v3195
    %v3204 = vsel %vm3188, %v3180, %v3196
    %v3205 = vadd.f32 %v3197, %v87
    %v3206 = vadd.f32 %v3198, %v88
    %v3207 = vadd.f32 %v3199, %v89
    %v3208 = vadd.f32 %v3200, %v90
    %v3209 = vadd.f32 %v3201, %v91
    %v3210 = vadd.f32 %v3202, %v92
    %v3211 = vadd.f32 %v3203, %v93
    %v3212 = vadd.f32 %v3204, %v94
    %v3213 = vsel %vm453, %v3205, -inf
    %3214 = vmax.xlane.f32.xlu0 %v3213
    %v3215 = vpop.xlane.xlu0 %3214
    %v3216 = vsel %vm453, %v3206, -inf
    %3217 = vmax.xlane.f32.xlu0 %v3216
    %v3218 = vpop.xlane.xlu0 %3217
    %v3219 = vsel %vm453, %v3207, -inf
    %3220 = vmax.xlane.f32.xlu0 %v3219
    %v3221 = vpop.xlane.xlu0 %3220
    %v3222 = vsel %vm453, %v3208, -inf
    %3223 = vmax.xlane.f32.xlu0 %v3222
    %v3224 = vpop.xlane.xlu0 %3223
    %v3225 = vsel %vm453, %v3209, -inf
    %3226 = vmax.xlane.f32.xlu0 %v3225
    %v3227 = vpop.xlane.xlu0 %3226
    %v3228 = vsel %vm453, %v3210, -inf
    %3229 = vmax.xlane.f32.xlu0 %v3228
    %v3230 = vpop.xlane.xlu0 %3229
    %v3231 = vsel %vm453, %v3211, -inf
    %3232 = vmax.xlane.f32.xlu0 %v3231
    %v3233 = vpop.xlane.xlu0 %3232
    %v3234 = vsel %vm453, %v3212, -inf
    %3235 = vmax.xlane.f32.xlu0 %v3234
    %v3236 = vpop.xlane.xlu0 %3235
    %v3237 = vsub.f32 %v3205, %v3215
    %v3238 = vsub.f32 %v3206, %v3218
    %v3239 = vsub.f32 %v3207, %v3221
    %v3240 = vsub.f32 %v3208, %v3224
    %v3241 = vsub.f32 %v3209, %v3227
    %v3242 = vsub.f32 %v3210, %v3230
    %v3243 = vsub.f32 %v3211, %v3233
    %v3244 = vsub.f32 %v3212, %v3236
    %v3245 = vmul.f32 %v3237, 1.442695
    %v3246 = vpow.pop %v3245
    %v3247 = vmul.f32 %v3238, 1.442695
    %v3248 = vpow.pop %v3247
    %v3249 = vmul.f32 %v3239, 1.442695
    %v3250 = vpow.pop %v3249
    %v3251 = vmul.f32 %v3240, 1.442695
    %v3252 = vpow.pop %v3251
    %v3253 = vmul.f32 %v3241, 1.442695
    %v3254 = vpow.pop %v3253
    %v3255 = vmul.f32 %v3242, 1.442695
    %v3256 = vpow.pop %v3255
    %v3257 = vmul.f32 %v3243, 1.442695
    %v3258 = vpow.pop %v3257
    %v3259 = vmul.f32 %v3244, 1.442695
    %v3260 = vpow.pop %v3259
    %v3261 = vsel %vm453, %v3246, 0.0
    %3262 = vadd.xlane.f32.xlu0 %v3261
    %v3263 = vpop.xlane.xlu0 %3262
    %v3264 = vsel %vm453, %v3248, 0.0
    %3265 = vadd.xlane.f32.xlu0 %v3264
    %v3266 = vpop.xlane.xlu0 %3265
    %v3267 = vsel %vm453, %v3250, 0.0
    %3268 = vadd.xlane.f32.xlu0 %v3267
    %v3269 = vpop.xlane.xlu0 %3268
    %v3270 = vsel %vm453, %v3252, 0.0
    %3271 = vadd.xlane.f32.xlu0 %v3270
    %v3272 = vpop.xlane.xlu0 %3271
    %v3273 = vsel %vm453, %v3254, 0.0
    %3274 = vadd.xlane.f32.xlu0 %v3273
    %v3275 = vpop.xlane.xlu0 %3274
    %v3276 = vsel %vm453, %v3256, 0.0
    %3277 = vadd.xlane.f32.xlu0 %v3276
    %v3278 = vpop.xlane.xlu0 %3277
    %v3279 = vsel %vm453, %v3258, 0.0
    %3280 = vadd.xlane.f32.xlu0 %v3279
    %v3281 = vpop.xlane.xlu0 %3280
    %v3282 = vsel %vm453, %v3260, 0.0
    %3283 = vadd.xlane.f32.xlu0 %v3282
    %v3284 = vpop.xlane.xlu0 %3283
    %v3285 = vrcp.pop %v3263
    %v3286 = vrcp.pop %v3266
    %v3287 = vrcp.pop %v3269
    %v3288 = vrcp.pop %v3272
    %v3289 = vrcp.pop %v3275
    %v3290 = vrcp.pop %v3278
    %v3291 = vrcp.pop %v3281
    %v3292 = vrcp.pop %v3284
    %v3293 = vmul.f32 %v3246, %v3285
    %v3294 = vmul.f32 %v3248, %v3286
    %v3295 = vmul.f32 %v3250, %v3287
    %v3296 = vmul.f32 %v3252, %v3288
    %v3297 = vmul.f32 %v3254, %v3289
    %v3298 = vmul.f32 %v3256, %v3290
    %v3299 = vmul.f32 %v3258, %v3291
    %v3300 = vmul.f32 %v3260, %v3292
    %v3301 = vmul.f32 %v3293, %v3137
    %v3302 = vmul.f32 %v3294, %v3138
    %v3303 = vmul.f32 %v3295, %v3139
    %v3304 = vmul.f32 %v3296, %v3140
    %v3305 = vmul.f32 %v3297, %v3141
    %v3306 = vmul.f32 %v3298, %v3142
    %v3307 = vmul.f32 %v3299, %v3143
    %v3308 = vmul.f32 %v3300, %v3144
    %v3309 = vsel %vm453, %v3301, 0.0
    %3310 = vadd.xlane.f32.xlu0 %v3309
    %v3311 = vpop.xlane.xlu0 %3310
    %v3312 = vsel %vm453, %v3302, 0.0
    %3313 = vadd.xlane.f32.xlu0 %v3312
    %v3314 = vpop.xlane.xlu0 %3313
    %v3315 = vsel %vm453, %v3303, 0.0
    %3316 = vadd.xlane.f32.xlu0 %v3315
    %v3317 = vpop.xlane.xlu0 %3316
    %v3318 = vsel %vm453, %v3304, 0.0
    %3319 = vadd.xlane.f32.xlu0 %v3318
    %v3320 = vpop.xlane.xlu0 %3319
    %v3321 = vsel %vm453, %v3305, 0.0
    %3322 = vadd.xlane.f32.xlu0 %v3321
    %v3323 = vpop.xlane.xlu0 %3322
    %v3324 = vsel %vm453, %v3306, 0.0
    %3325 = vadd.xlane.f32.xlu0 %v3324
    %v3326 = vpop.xlane.xlu0 %3325
    %v3327 = vsel %vm453, %v3307, 0.0
    %3328 = vadd.xlane.f32.xlu0 %v3327
    %v3329 = vpop.xlane.xlu0 %3328
    %v3330 = vsel %vm453, %v3308, 0.0
    %3331 = vadd.xlane.f32.xlu0 %v3330
    %v3332 = vpop.xlane.xlu0 %3331
    %v3333 = vadd.f32 %v3084, %v3311
    %v3334 = vadd.f32 %v3085, %v3314
    %v3335 = vadd.f32 %v3086, %v3317
    %v3336 = vadd.f32 %v3087, %v3320
    %v3337 = vadd.f32 %v3088, %v3323
    %v3338 = vadd.f32 %v3089, %v3326
    %v3339 = vadd.f32 %v3090, %v3329
    %v3340 = vadd.f32 %v3091, %v3332
    %v3341 = vld [vmem:[%s10 + $0x2] sm:$0x1]
    %v3342 = vlaneseq
    %v3343 = vshrl.u32 %v3342, 7
    %v3344 = vsub.s32 0, %v3343
    %v3345 = vrot.slane %v3341, %v3344
    %v3346 = vmul.f32 %v2835, %v3345
    %v3347 = vmul.f32 %v2836, %v3345
    %v3348 = vmul.f32 %v2837, %v3345
    %v3349 = vmul.f32 %v2838, %v3345
    %v3350 = vmul.f32 %v2839, %v3345
    %v3351 = vmul.f32 %v2840, %v3345
    %v3352 = vmul.f32 %v2841, %v3345
    %v3353 = vmul.f32 %v2842, %v3345
    %3354 = vadd.xlane.f32.xlu0 %v3346
    %v3355 = vpop.xlane.xlu0 %3354
    %3356 = vadd.xlane.f32.xlu0 %v3347
    %v3357 = vpop.xlane.xlu0 %3356
    %3358 = vadd.xlane.f32.xlu0 %v3348
    %v3359 = vpop.xlane.xlu0 %3358
    %3360 = vadd.xlane.f32.xlu0 %v3349
    %v3361 = vpop.xlane.xlu0 %3360
    %3362 = vadd.xlane.f32.xlu0 %v3350
    %v3363 = vpop.xlane.xlu0 %3362
    %3364 = vadd.xlane.f32.xlu0 %v3351
    %v3365 = vpop.xlane.xlu0 %3364
    %3366 = vadd.xlane.f32.xlu0 %v3352
    %v3367 = vpop.xlane.xlu0 %3366
    %3368 = vadd.xlane.f32.xlu0 %v3353
    %v3369 = vpop.xlane.xlu0 %3368
    %3370 = vxpose.xlu0.b32.start [1/16] %v3355, 128
    %3371 = vxpose.xlu0.b32.cont [2/16] %v3357, 128
    %3372 = vxpose.xlu0.b32.cont [3/16] %v3359, 128
    %3373 = vxpose.xlu0.b32.cont [4/16] %v3361, 128
    %3374 = vxpose.xlu0.b32.cont [5/16] %v3363, 128
    %3375 = vxpose.xlu0.b32.cont [6/16] %v3365, 128
    %3376 = vxpose.xlu0.b32.cont [7/16] %v3367, 128
    %3377 = vxpose.xlu0.b32.cont [8/16] %v3369, 128
    %3378 = vxpose.xlu0.b32.cont [9/16] 0.0, 128
    %3379 = vxpose.xlu0.b32.cont [10/16] 0.0, 128
    %3380 = vxpose.xlu0.b32.cont [11/16] 0.0, 128
    %3381 = vxpose.xlu0.b32.cont [12/16] 0.0, 128
    %3382 = vxpose.xlu0.b32.cont [13/16] 0.0, 128
    %3383 = vxpose.xlu0.b32.cont [14/16] 0.0, 128
    %3384 = vxpose.xlu0.b32.cont [15/16] 0.0, 128
    %3385 = vxpose.xlu0.b32.end [16/16] 0.0, 128
    %v3386 = vpop.trf.xlu0
    %v3387 = vpop.trf.xlu0
    %v3388 = vpop.trf.xlu0
    %v3389 = vpop.trf.xlu0
    %v3390 = vpop.trf.xlu0
    %v3391 = vpop.trf.xlu0
    %v3392 = vpop.trf.xlu0
    %v3393 = vpop.trf.xlu0
    %v3394 = vpop.trf.xlu0
    %v3395 = vpop.trf.xlu0
    %v3396 = vpop.trf.xlu0
    %v3397 = vpop.trf.xlu0
    %v3398 = vpop.trf.xlu0
    %v3399 = vpop.trf.xlu0
    %v3400 = vpop.trf.xlu0
    %v3401 = vpop.trf.xlu0
    %s3402 = sld [smem:[#allocation10 + $0x82]]
    %v3403 = vstv %s3402
    %v3404 = vmul.f32 %v3403, %v3355
    %v3405 = vmul.f32 %v3403, %v3357
    %v3406 = vmul.f32 %v3403, %v3359
    %v3407 = vmul.f32 %v3403, %v3361
    %v3408 = vmul.f32 %v3403, %v3363
    %v3409 = vmul.f32 %v3403, %v3365
    %v3410 = vmul.f32 %v3403, %v3367
    %v3411 = vmul.f32 %v3403, %v3369
    %s3412 = sld [smem:[#allocation10 + $0x2]]
    %v3413 = vstv %s3412
    %v3414 = vmul.f32 %v3413, %v3386
    %v3415 = vmul.f32 %v3413, %v3387
    %v3416 = vmul.f32 %v3413, %v3388
    %v3417 = vmul.f32 %v3413, %v3389
    %v3418 = vmul.f32 %v3413, %v3390
    %v3419 = vmul.f32 %v3413, %v3391
    %v3420 = vmul.f32 %v3413, %v3392
    %v3421 = vmul.f32 %v3413, %v3393
    %v3422 = vadd.f32 %v3404, %v3414
    %v3423 = vadd.f32 %v3405, %v3415
    %v3424 = vadd.f32 %v3406, %v3416
    %v3425 = vadd.f32 %v3407, %v3417
    %v3426 = vadd.f32 %v3408, %v3418
    %v3427 = vadd.f32 %v3409, %v3419
    %v3428 = vadd.f32 %v3410, %v3420
    %v3429 = vadd.f32 %v3411, %v3421
    %vm3430 = vcmp.ge.f32.partialorder %v3422, 0.0
    %vm3431 = vcmp.ge.f32.partialorder %v3423, 0.0
    %vm3432 = vcmp.ge.f32.partialorder %v3424, 0.0
    %vm3433 = vcmp.ge.f32.partialorder %v3425, 0.0
    %vm3434 = vcmp.ge.f32.partialorder %v3426, 0.0
    %vm3435 = vcmp.ge.f32.partialorder %v3427, 0.0
    %vm3436 = vcmp.ge.f32.partialorder %v3428, 0.0
    %vm3437 = vcmp.ge.f32.partialorder %v3429, 0.0
    %v3438 = vmul.f32 %v3422, 0.2
    %v3439 = vmul.f32 %v3423, 0.2
    %v3440 = vmul.f32 %v3424, 0.2
    %v3441 = vmul.f32 %v3425, 0.2
    %v3442 = vmul.f32 %v3426, 0.2
    %v3443 = vmul.f32 %v3427, 0.2
    %v3444 = vmul.f32 %v3428, 0.2
    %v3445 = vmul.f32 %v3429, 0.2
    %v3446 = vsel %vm3430, %v3422, %v3438
    %v3447 = vsel %vm3431, %v3423, %v3439
    %v3448 = vsel %vm3432, %v3424, %v3440
    %v3449 = vsel %vm3433, %v3425, %v3441
    %v3450 = vsel %vm3434, %v3426, %v3442
    %v3451 = vsel %vm3435, %v3427, %v3443
    %v3452 = vsel %vm3436, %v3428, %v3444
    %v3453 = vsel %vm3437, %v3429, %v3445
    %v3454 = vadd.f32 %v3446, %v87
    %v3455 = vadd.f32 %v3447, %v88
    %v3456 = vadd.f32 %v3448, %v89
    %v3457 = vadd.f32 %v3449, %v90
    %v3458 = vadd.f32 %v3450, %v91
    %v3459 = vadd.f32 %v3451, %v92
    %v3460 = vadd.f32 %v3452, %v93
    %v3461 = vadd.f32 %v3453, %v94
    %v3462 = vsel %vm453, %v3454, -inf
    %3463 = vmax.xlane.f32.xlu0 %v3462
    %v3464 = vpop.xlane.xlu0 %3463
    %v3465 = vsel %vm453, %v3455, -inf
    %3466 = vmax.xlane.f32.xlu0 %v3465
    %v3467 = vpop.xlane.xlu0 %3466
    %v3468 = vsel %vm453, %v3456, -inf
    %3469 = vmax.xlane.f32.xlu0 %v3468
    %v3470 = vpop.xlane.xlu0 %3469
    %v3471 = vsel %vm453, %v3457, -inf
    %3472 = vmax.xlane.f32.xlu0 %v3471
    %v3473 = vpop.xlane.xlu0 %3472
    %v3474 = vsel %vm453, %v3458, -inf
    %3475 = vmax.xlane.f32.xlu0 %v3474
    %v3476 = vpop.xlane.xlu0 %3475
    %v3477 = vsel %vm453, %v3459, -inf
    %3478 = vmax.xlane.f32.xlu0 %v3477
    %v3479 = vpop.xlane.xlu0 %3478
    %v3480 = vsel %vm453, %v3460, -inf
    %3481 = vmax.xlane.f32.xlu0 %v3480
    %v3482 = vpop.xlane.xlu0 %3481
    %v3483 = vsel %vm453, %v3461, -inf
    %3484 = vmax.xlane.f32.xlu0 %v3483
    %v3485 = vpop.xlane.xlu0 %3484
    %v3486 = vsub.f32 %v3454, %v3464
    %v3487 = vsub.f32 %v3455, %v3467
    %v3488 = vsub.f32 %v3456, %v3470
    %v3489 = vsub.f32 %v3457, %v3473
    %v3490 = vsub.f32 %v3458, %v3476
    %v3491 = vsub.f32 %v3459, %v3479
    %v3492 = vsub.f32 %v3460, %v3482
    %v3493 = vsub.f32 %v3461, %v3485
    %v3494 = vmul.f32 %v3486, 1.442695
    %v3495 = vpow.pop %v3494
    %v3496 = vmul.f32 %v3487, 1.442695
    %v3497 = vpow.pop %v3496
    %v3498 = vmul.f32 %v3488, 1.442695
    %v3499 = vpow.pop %v3498
    %v3500 = vmul.f32 %v3489, 1.442695
    %v3501 = vpow.pop %v3500
    %v3502 = vmul.f32 %v3490, 1.442695
    %v3503 = vpow.pop %v3502
    %v3504 = vmul.f32 %v3491, 1.442695
    %v3505 = vpow.pop %v3504
    %v3506 = vmul.f32 %v3492, 1.442695
    %v3507 = vpow.pop %v3506
    %v3508 = vmul.f32 %v3493, 1.442695
    %v3509 = vpow.pop %v3508
    %v3510 = vsel %vm453, %v3495, 0.0
    %3511 = vadd.xlane.f32.xlu0 %v3510
    %v3512 = vpop.xlane.xlu0 %3511
    %v3513 = vsel %vm453, %v3497, 0.0
    %3514 = vadd.xlane.f32.xlu0 %v3513
    %v3515 = vpop.xlane.xlu0 %3514
    %v3516 = vsel %vm453, %v3499, 0.0
    %3517 = vadd.xlane.f32.xlu0 %v3516
    %v3518 = vpop.xlane.xlu0 %3517
    %v3519 = vsel %vm453, %v3501, 0.0
    %3520 = vadd.xlane.f32.xlu0 %v3519
    %v3521 = vpop.xlane.xlu0 %3520
    %v3522 = vsel %vm453, %v3503, 0.0
    %3523 = vadd.xlane.f32.xlu0 %v3522
    %v3524 = vpop.xlane.xlu0 %3523
    %v3525 = vsel %vm453, %v3505, 0.0
    %3526 = vadd.xlane.f32.xlu0 %v3525
    %v3527 = vpop.xlane.xlu0 %3526
    %v3528 = vsel %vm453, %v3507, 0.0
    %3529 = vadd.xlane.f32.xlu0 %v3528
    %v3530 = vpop.xlane.xlu0 %3529
    %v3531 = vsel %vm453, %v3509, 0.0
    %3532 = vadd.xlane.f32.xlu0 %v3531
    %v3533 = vpop.xlane.xlu0 %3532
    %v3534 = vrcp.pop %v3512
    %v3535 = vrcp.pop %v3515
    %v3536 = vrcp.pop %v3518
    %v3537 = vrcp.pop %v3521
    %v3538 = vrcp.pop %v3524
    %v3539 = vrcp.pop %v3527
    %v3540 = vrcp.pop %v3530
    %v3541 = vrcp.pop %v3533
    %v3542 = vmul.f32 %v3495, %v3534
    %v3543 = vmul.f32 %v3497, %v3535
    %v3544 = vmul.f32 %v3499, %v3536
    %v3545 = vmul.f32 %v3501, %v3537
    %v3546 = vmul.f32 %v3503, %v3538
    %v3547 = vmul.f32 %v3505, %v3539
    %v3548 = vmul.f32 %v3507, %v3540
    %v3549 = vmul.f32 %v3509, %v3541
    %v3550 = vmul.f32 %v3542, %v3386
    %v3551 = vmul.f32 %v3543, %v3387
    %v3552 = vmul.f32 %v3544, %v3388
    %v3553 = vmul.f32 %v3545, %v3389
    %v3554 = vmul.f32 %v3546, %v3390
    %v3555 = vmul.f32 %v3547, %v3391
    %v3556 = vmul.f32 %v3548, %v3392
    %v3557 = vmul.f32 %v3549, %v3393
    %v3558 = vsel %vm453, %v3550, 0.0
    %3559 = vadd.xlane.f32.xlu0 %v3558
    %v3560 = vpop.xlane.xlu0 %3559
    %v3561 = vsel %vm453, %v3551, 0.0
    %3562 = vadd.xlane.f32.xlu0 %v3561
    %v3563 = vpop.xlane.xlu0 %3562
    %v3564 = vsel %vm453, %v3552, 0.0
    %3565 = vadd.xlane.f32.xlu0 %v3564
    %v3566 = vpop.xlane.xlu0 %3565
    %v3567 = vsel %vm453, %v3553, 0.0
    %3568 = vadd.xlane.f32.xlu0 %v3567
    %v3569 = vpop.xlane.xlu0 %3568
    %v3570 = vsel %vm453, %v3554, 0.0
    %3571 = vadd.xlane.f32.xlu0 %v3570
    %v3572 = vpop.xlane.xlu0 %3571
    %v3573 = vsel %vm453, %v3555, 0.0
    %3574 = vadd.xlane.f32.xlu0 %v3573
    %v3575 = vpop.xlane.xlu0 %3574
    %v3576 = vsel %vm453, %v3556, 0.0
    %3577 = vadd.xlane.f32.xlu0 %v3576
    %v3578 = vpop.xlane.xlu0 %3577
    %v3579 = vsel %vm453, %v3557, 0.0
    %3580 = vadd.xlane.f32.xlu0 %v3579
    %v3581 = vpop.xlane.xlu0 %3580
    %v3582 = vadd.f32 %v3333, %v3560
    %v3583 = vadd.f32 %v3334, %v3563
    %v3584 = vadd.f32 %v3335, %v3566
    %v3585 = vadd.f32 %v3336, %v3569
    %v3586 = vadd.f32 %v3337, %v3572
    %v3587 = vadd.f32 %v3338, %v3575
    %v3588 = vadd.f32 %v3339, %v3578
    %v3589 = vadd.f32 %v3340, %v3581
    %v3590 = vld [vmem:[%s10 + $0x3] sm:$0x1]
    %v3591 = vlaneseq
    %v3592 = vshrl.u32 %v3591, 7
    %v3593 = vsub.s32 0, %v3592
    %v3594 = vrot.slane %v3590, %v3593
    %v3595 = vmul.f32 %v2835, %v3594
    %v3596 = vmul.f32 %v2836, %v3594
    %v3597 = vmul.f32 %v2837, %v3594
    %v3598 = vmul.f32 %v2838, %v3594
    %v3599 = vmul.f32 %v2839, %v3594
    %v3600 = vmul.f32 %v2840, %v3594
    %v3601 = vmul.f32 %v2841, %v3594
    %v3602 = vmul.f32 %v2842, %v3594
    %3603 = vadd.xlane.f32.xlu0 %v3595
    %v3604 = vpop.xlane.xlu0 %3603
    %3605 = vadd.xlane.f32.xlu0 %v3596
    %v3606 = vpop.xlane.xlu0 %3605
    %3607 = vadd.xlane.f32.xlu0 %v3597
    %v3608 = vpop.xlane.xlu0 %3607
    %3609 = vadd.xlane.f32.xlu0 %v3598
    %v3610 = vpop.xlane.xlu0 %3609
    %3611 = vadd.xlane.f32.xlu0 %v3599
    %v3612 = vpop.xlane.xlu0 %3611
    %3613 = vadd.xlane.f32.xlu0 %v3600
    %v3614 = vpop.xlane.xlu0 %3613
    %3615 = vadd.xlane.f32.xlu0 %v3601
    %v3616 = vpop.xlane.xlu0 %3615
    %3617 = vadd.xlane.f32.xlu0 %v3602
    %v3618 = vpop.xlane.xlu0 %3617
    %3619 = vxpose.xlu0.b32.start [1/16] %v3604, 128
    %3620 = vxpose.xlu0.b32.cont [2/16] %v3606, 128
    %3621 = vxpose.xlu0.b32.cont [3/16] %v3608, 128
    %3622 = vxpose.xlu0.b32.cont [4/16] %v3610, 128
    %3623 = vxpose.xlu0.b32.cont [5/16] %v3612, 128
    %3624 = vxpose.xlu0.b32.cont [6/16] %v3614, 128
    %3625 = vxpose.xlu0.b32.cont [7/16] %v3616, 128
    %3626 = vxpose.xlu0.b32.cont [8/16] %v3618, 128
    %3627 = vxpose.xlu0.b32.cont [9/16] 0.0, 128
    %3628 = vxpose.xlu0.b32.cont [10/16] 0.0, 128
    %3629 = vxpose.xlu0.b32.cont [11/16] 0.0, 128
    %3630 = vxpose.xlu0.b32.cont [12/16] 0.0, 128
    %3631 = vxpose.xlu0.b32.cont [13/16] 0.0, 128
    %3632 = vxpose.xlu0.b32.cont [14/16] 0.0, 128
    %3633 = vxpose.xlu0.b32.cont [15/16] 0.0, 128
    %3634 = vxpose.xlu0.b32.end [16/16] 0.0, 128
    %v3635 = vpop.trf.xlu0
    %v3636 = vpop.trf.xlu0
    %v3637 = vpop.trf.xlu0
    %v3638 = vpop.trf.xlu0
    %v3639 = vpop.trf.xlu0
    %v3640 = vpop.trf.xlu0
    %v3641 = vpop.trf.xlu0
    %v3642 = vpop.trf.xlu0
    %v3643 = vpop.trf.xlu0
    %v3644 = vpop.trf.xlu0
    %v3645 = vpop.trf.xlu0
    %v3646 = vpop.trf.xlu0
    %v3647 = vpop.trf.xlu0
    %v3648 = vpop.trf.xlu0
    %v3649 = vpop.trf.xlu0
    %v3650 = vpop.trf.xlu0
    %s3651 = sld [smem:[#allocation10 + $0x83]]
    %v3652 = vstv %s3651
    %v3653 = vmul.f32 %v3652, %v3604
    %v3654 = vmul.f32 %v3652, %v3606
    %v3655 = vmul.f32 %v3652, %v3608
    %v3656 = vmul.f32 %v3652, %v3610
    %v3657 = vmul.f32 %v3652, %v3612
    %v3658 = vmul.f32 %v3652, %v3614
    %v3659 = vmul.f32 %v3652, %v3616
    %v3660 = vmul.f32 %v3652, %v3618
    %s3661 = sld [smem:[#allocation10 + $0x3]]
    %v3662 = vstv %s3661
    %v3663 = vmul.f32 %v3662, %v3635
    %v3664 = vmul.f32 %v3662, %v3636
    %v3665 = vmul.f32 %v3662, %v3637
    %v3666 = vmul.f32 %v3662, %v3638
    %v3667 = vmul.f32 %v3662, %v3639
    %v3668 = vmul.f32 %v3662, %v3640
    %v3669 = vmul.f32 %v3662, %v3641
    %v3670 = vmul.f32 %v3662, %v3642
    %v3671 = vadd.f32 %v3653, %v3663
    %v3672 = vadd.f32 %v3654, %v3664
    %v3673 = vadd.f32 %v3655, %v3665
    %v3674 = vadd.f32 %v3656, %v3666
    %v3675 = vadd.f32 %v3657, %v3667
    %v3676 = vadd.f32 %v3658, %v3668
    %v3677 = vadd.f32 %v3659, %v3669
    %v3678 = vadd.f32 %v3660, %v3670
    %vm3679 = vcmp.ge.f32.partialorder %v3671, 0.0
    %vm3680 = vcmp.ge.f32.partialorder %v3672, 0.0
    %vm3681 = vcmp.ge.f32.partialorder %v3673, 0.0
    %vm3682 = vcmp.ge.f32.partialorder %v3674, 0.0
    %vm3683 = vcmp.ge.f32.partialorder %v3675, 0.0
    %vm3684 = vcmp.ge.f32.partialorder %v3676, 0.0
    %vm3685 = vcmp.ge.f32.partialorder %v3677, 0.0
    %vm3686 = vcmp.ge.f32.partialorder %v3678, 0.0
    %v3687 = vmul.f32 %v3671, 0.2
    %v3688 = vmul.f32 %v3672, 0.2
    %v3689 = vmul.f32 %v3673, 0.2
    %v3690 = vmul.f32 %v3674, 0.2
    %v3691 = vmul.f32 %v3675, 0.2
    %v3692 = vmul.f32 %v3676, 0.2
    %v3693 = vmul.f32 %v3677, 0.2
    %v3694 = vmul.f32 %v3678, 0.2
    %v3695 = vsel %vm3679, %v3671, %v3687
    %v3696 = vsel %vm3680, %v3672, %v3688
    %v3697 = vsel %vm3681, %v3673, %v3689
    %v3698 = vsel %vm3682, %v3674, %v3690
    %v3699 = vsel %vm3683, %v3675, %v3691
    %v3700 = vsel %vm3684, %v3676, %v3692
    %v3701 = vsel %vm3685, %v3677, %v3693
    %v3702 = vsel %vm3686, %v3678, %v3694
    %v3703 = vadd.f32 %v3695, %v87
    %v3704 = vadd.f32 %v3696, %v88
    %v3705 = vadd.f32 %v3697, %v89
    %v3706 = vadd.f32 %v3698, %v90
    %v3707 = vadd.f32 %v3699, %v91
    %v3708 = vadd.f32 %v3700, %v92
    %v3709 = vadd.f32 %v3701, %v93
    %v3710 = vadd.f32 %v3702, %v94
    %v3711 = vsel %vm453, %v3703, -inf
    %3712 = vmax.xlane.f32.xlu0 %v3711
    %v3713 = vpop.xlane.xlu0 %3712
    %v3714 = vsel %vm453, %v3704, -inf
    %3715 = vmax.xlane.f32.xlu0 %v3714
    %v3716 = vpop.xlane.xlu0 %3715
    %v3717 = vsel %vm453, %v3705, -inf
    %3718 = vmax.xlane.f32.xlu0 %v3717
    %v3719 = vpop.xlane.xlu0 %3718
    %v3720 = vsel %vm453, %v3706, -inf
    %3721 = vmax.xlane.f32.xlu0 %v3720
    %v3722 = vpop.xlane.xlu0 %3721
    %v3723 = vsel %vm453, %v3707, -inf
    %3724 = vmax.xlane.f32.xlu0 %v3723
    %v3725 = vpop.xlane.xlu0 %3724
    %v3726 = vsel %vm453, %v3708, -inf
    %3727 = vmax.xlane.f32.xlu0 %v3726
    %v3728 = vpop.xlane.xlu0 %3727
    %v3729 = vsel %vm453, %v3709, -inf
    %3730 = vmax.xlane.f32.xlu0 %v3729
    %v3731 = vpop.xlane.xlu0 %3730
    %v3732 = vsel %vm453, %v3710, -inf
    %3733 = vmax.xlane.f32.xlu0 %v3732
    %v3734 = vpop.xlane.xlu0 %3733
    %v3735 = vsub.f32 %v3703, %v3713
    %v3736 = vsub.f32 %v3704, %v3716
    %v3737 = vsub.f32 %v3705, %v3719
    %v3738 = vsub.f32 %v3706, %v3722
    %v3739 = vsub.f32 %v3707, %v3725
    %v3740 = vsub.f32 %v3708, %v3728
    %v3741 = vsub.f32 %v3709, %v3731
    %v3742 = vsub.f32 %v3710, %v3734
    %v3743 = vmul.f32 %v3735, 1.442695
    %v3744 = vpow.pop %v3743
    %v3745 = vmul.f32 %v3736, 1.442695
    %v3746 = vpow.pop %v3745
    %v3747 = vmul.f32 %v3737, 1.442695
    %v3748 = vpow.pop %v3747
    %v3749 = vmul.f32 %v3738, 1.442695
    %v3750 = vpow.pop %v3749
    %v3751 = vmul.f32 %v3739, 1.442695
    %v3752 = vpow.pop %v3751
    %v3753 = vmul.f32 %v3740, 1.442695
    %v3754 = vpow.pop %v3753
    %v3755 = vmul.f32 %v3741, 1.442695
    %v3756 = vpow.pop %v3755
    %v3757 = vmul.f32 %v3742, 1.442695
    %v3758 = vpow.pop %v3757
    %v3759 = vsel %vm453, %v3744, 0.0
    %3760 = vadd.xlane.f32.xlu0 %v3759
    %v3761 = vpop.xlane.xlu0 %3760
    %v3762 = vsel %vm453, %v3746, 0.0
    %3763 = vadd.xlane.f32.xlu0 %v3762
    %v3764 = vpop.xlane.xlu0 %3763
    %v3765 = vsel %vm453, %v3748, 0.0
    %3766 = vadd.xlane.f32.xlu0 %v3765
    %v3767 = vpop.xlane.xlu0 %3766
    %v3768 = vsel %vm453, %v3750, 0.0
    %3769 = vadd.xlane.f32.xlu0 %v3768
    %v3770 = vpop.xlane.xlu0 %3769
    %v3771 = vsel %vm453, %v3752, 0.0
    %3772 = vadd.xlane.f32.xlu0 %v3771
    %v3773 = vpop.xlane.xlu0 %3772
    %v3774 = vsel %vm453, %v3754, 0.0
    %3775 = vadd.xlane.f32.xlu0 %v3774
    %v3776 = vpop.xlane.xlu0 %3775
    %v3777 = vsel %vm453, %v3756, 0.0
    %3778 = vadd.xlane.f32.xlu0 %v3777
    %v3779 = vpop.xlane.xlu0 %3778
    %v3780 = vsel %vm453, %v3758, 0.0
    %3781 = vadd.xlane.f32.xlu0 %v3780
    %v3782 = vpop.xlane.xlu0 %3781
    %v3783 = vrcp.pop %v3761
    %v3784 = vrcp.pop %v3764
    %v3785 = vrcp.pop %v3767
    %v3786 = vrcp.pop %v3770
    %v3787 = vrcp.pop %v3773
    %v3788 = vrcp.pop %v3776
    %v3789 = vrcp.pop %v3779
    %v3790 = vrcp.pop %v3782
    %v3791 = vmul.f32 %v3744, %v3783
    %v3792 = vmul.f32 %v3746, %v3784
    %v3793 = vmul.f32 %v3748, %v3785
    %v3794 = vmul.f32 %v3750, %v3786
    %v3795 = vmul.f32 %v3752, %v3787
    %v3796 = vmul.f32 %v3754, %v3788
    %v3797 = vmul.f32 %v3756, %v3789
    %v3798 = vmul.f32 %v3758, %v3790
    %v3799 = vmul.f32 %v3791, %v3635
    %v3800 = vmul.f32 %v3792, %v3636
    %v3801 = vmul.f32 %v3793, %v3637
    %v3802 = vmul.f32 %v3794, %v3638
    %v3803 = vmul.f32 %v3795, %v3639
    %v3804 = vmul.f32 %v3796, %v3640
    %v3805 = vmul.f32 %v3797, %v3641
    %v3806 = vmul.f32 %v3798, %v3642
    %v3807 = vsel %vm453, %v3799, 0.0
    %3808 = vadd.xlane.f32.xlu0 %v3807
    %v3809 = vpop.xlane.xlu0 %3808
    %v3810 = vsel %vm453, %v3800, 0.0
    %3811 = vadd.xlane.f32.xlu0 %v3810
    %v3812 = vpop.xlane.xlu0 %3811
    %v3813 = vsel %vm453, %v3801, 0.0
    %3814 = vadd.xlane.f32.xlu0 %v3813
    %v3815 = vpop.xlane.xlu0 %3814
    %v3816 = vsel %vm453, %v3802, 0.0
    %3817 = vadd.xlane.f32.xlu0 %v3816
    %v3818 = vpop.xlane.xlu0 %3817
    %v3819 = vsel %vm453, %v3803, 0.0
    %3820 = vadd.xlane.f32.xlu0 %v3819
    %v3821 = vpop.xlane.xlu0 %3820
    %v3822 = vsel %vm453, %v3804, 0.0
    %3823 = vadd.xlane.f32.xlu0 %v3822
    %v3824 = vpop.xlane.xlu0 %3823
    %v3825 = vsel %vm453, %v3805, 0.0
    %3826 = vadd.xlane.f32.xlu0 %v3825
    %v3827 = vpop.xlane.xlu0 %3826
    %v3828 = vsel %vm453, %v3806, 0.0
    %3829 = vadd.xlane.f32.xlu0 %v3828
    %v3830 = vpop.xlane.xlu0 %3829
    %v3831 = vadd.f32 %v3582, %v3809
    %v3832 = vadd.f32 %v3583, %v3812
    %v3833 = vadd.f32 %v3584, %v3815
    %v3834 = vadd.f32 %v3585, %v3818
    %v3835 = vadd.f32 %v3586, %v3821
    %v3836 = vadd.f32 %v3587, %v3824
    %v3837 = vadd.f32 %v3588, %v3827
    %v3838 = vadd.f32 %v3589, %v3830
    %v3839 = vmul.f32 %v3831, 0.25
    %v3840 = vmul.f32 %v3832, 0.25
    %v3841 = vmul.f32 %v3833, 0.25
    %v3842 = vmul.f32 %v3834, 0.25
    %v3843 = vmul.f32 %v3835, 0.25
    %v3844 = vmul.f32 %v3836, 0.25
    %v3845 = vmul.f32 %v3837, 0.25
    %v3846 = vmul.f32 %v3838, 0.25
    %s3847 = sld [smem:[#allocation4]]
    %v3848 = vstv %s3847
    %v3849 = vadd.f32 %v3839, %v3848
    %v3850 = vadd.f32 %v3840, %v3848
    %v3851 = vadd.f32 %v3841, %v3848
    %v3852 = vadd.f32 %v3842, %v3848
    %v3853 = vadd.f32 %v3843, %v3848
    %v3854 = vadd.f32 %v3844, %v3848
    %v3855 = vadd.f32 %v3845, %v3848
    %v3856 = vadd.f32 %v3846, %v3848
    %vm3857 = vcmask 7168
    %3858 = vst.msk [vmem:[%s13] sm:$0xff] %vm3857, %v3849
    %3859 = vst.msk [vmem:[%s13 + $0x8] sm:$0xff] %vm3857, %v3850
    %3860 = vst.msk [vmem:[%s13 + $0x10] sm:$0xff] %vm3857, %v3851
    %3861 = vst.msk [vmem:[%s13 + $0x18] sm:$0xff] %vm3857, %v3852
    %3862 = vst.msk [vmem:[%s13 + $0x20] sm:$0xff] %vm3857, %v3853
    %3863 = vst.msk [vmem:[%s13 + $0x28] sm:$0xff] %vm3857, %v3854
    %3864 = vst.msk [vmem:[%s13 + $0x30] sm:$0xff] %vm3857, %v3855
    %3865 = vst.msk [vmem:[%s13 + $0x38] sm:$0xff] %vm3857, %v3856
    // Predicated region
    $region66: #{tpu_custom_call.1} parent=1 // pred_check
      _
    $region67: #{tpu_custom_call.1} parent=1 // pred_check_branch
      %3867 = sbr.rel (0) target = $region69
    $region68: #{tpu_custom_call.1} parent=1 // pred_region
      _
    $region69: #{tpu_custom_call.1} parent=1 // pred_fallthru
      _
    // Predicated region
    $region70: #{tpu_custom_call.1} parent=1 // pred_check
      _
    $region71: #{tpu_custom_call.1} parent=1 // pred_check_branch
      %3869 = sbr.rel (0) target = $region73
    $region72: #{tpu_custom_call.1} parent=1 // pred_region
      _
    $region73: #{tpu_custom_call.1} parent=1 // pred_fallthru
      _
    %3870 = vsyncpa [#allocation6], 1
    %3871 = vsyncpa [#allocation9], 1
    %3872 = vsyncpa [#allocation7], 1

</llo_original>
